<compile_context>
chip_gen: v5e
topology: v5e:2x2
jax: 0.10.0
libtpu: 0.0.40
codegen_flags: <defaults>
</compile_context>

<pallas_src>
import jax
import jax.numpy as jnp
from jax.experimental import pallas as pl
from jax.experimental.pallas import tpu as pltpu

POOL = 28          # AvgPool2d kernel_size (= stride, PyTorch default)
C_IN = 128
C_OUT = 128

# VMEM budget (bytes) for the two pipeline buffers of the streamed input slab.
# 32 MiB of double-buffered input already puts the DMA in the >=85%-of-roofline
# regime and is safe on every generation (v7x: 64 MiB/TC, v5e/v6e: 128 MiB).
_INPUT_PIPELINE_BUDGET = 32 << 20
_VMEM_LIMIT_BYTES = 48 << 20       # well above what we use; still < v7x physical


def _pyramid_kernel(x_ref, wt_ref, s_ref, b_ref, o_ref):
    # x_ref : (C_IN, HO_TILE, POOL, W)   native-NCHW slab of HO_TILE pooling rows
    # wt_ref: (C_IN, C_OUT)              1x1-conv weight, transposed, pre-scaled 1/784
    # s_ref : (W, Wo)                    0/1 column-window selection matrix
    # b_ref : (1, C_OUT)                 bias row
    # o_ref : (HO_TILE, Wo, C_OUT)       lane-dense output block (last dim = 128)
    ho_tile = x_ref.shape[1]

    # Per pooling row: f32-accumulated sum over the 28 window rows (sublane
    # reduce, no separate whole-slab f32 materialization), then a tiny MXU
    # matmul summing each 28-wide column group.
    pooled_cols = []
    for h in range(ho_tile):                       # static unroll, HO_TILE <= ~8
        hs = jnp.sum(x_ref[:, h], axis=1, dtype=jnp.float32)            # (C_IN, W)
        pooled_cols.append(
            jnp.dot(hs, s_ref[...], preferred_element_type=jnp.float32))  # (C_IN, Wo)
    pooled = (pooled_cols[0] if ho_tile == 1
              else jnp.concatenate(pooled_cols, axis=-1))     # (C_IN, HO_TILE*Wo)

    # Single fused 1x1-conv matmul for all rows, oriented so C_OUT = 128 lands
    # on the lane axis (lane-dense store).  The (128, HO_TILE*Wo) transpose is
    # a tiny XLU op with idle slots.
    out2d = jnp.dot(pooled.T, wt_ref[...],
                    preferred_element_type=jnp.float32)       # (HO_TILE*Wo, C_OUT)
    out2d = out2d + b_ref[...]

    o_ref[...] = out2d.reshape(o_ref.shape).astype(o_ref.dtype)


def _choose_ho_tile(n, ho, w, itemsize):
    """Largest divisor of Ho whose double-buffered slab fits the VMEM budget,
    capped so the grid keeps >= 2 parallel blocks when possible (megacore)."""
    lane_w = -(-w // 128) * 128                    # W pads to a 128-lane multiple
    per_row = C_IN * 32 * lane_w * itemsize        # POOL=28 pads to 32 sublanes
    max_tile = max(1, _INPUT_PIPELINE_BUDGET // (2 * per_row))
    cap = ho if n >= 2 else max(1, ho // 2)        # keep >=2 grid blocks if N==1
    tile = int(min(max_tile, cap))
    while ho % tile != 0:                          # largest divisor of Ho <= tile
        tile -= 1
    return tile


@jax.jit
def feature_pyramid_low(low_nchw, weight, bias):
    """low_nchw: (N, 128, H, W) NCHW (as PyTorch), H and W multiples of 28.
    weight: (C_out, C_in) = squeezed 1x1-conv weight.  bias: (C_out,)."""
    N, C, H, W = low_nchw.shape
    assert C == C_IN and H % POOL == 0 and W % POOL == 0
    Ho, Wo = H // POOL, W // POOL
    ho_tile = _choose_ho_tile(N, Ho, W, low_nchw.dtype.itemsize)

    # Free dim-split reshape (no data movement): (N, C, Ho, POOL, W).
    x5 = low_nchw.reshape(N, C, Ho, POOL, W)

    # Fold the 1/784 averaging factor into the transposed f32 weight.
    wt = (weight.astype(jnp.float32) * (1.0 / (POOL * POOL))).T       # (C_in, C_out)
    b_row = bias.astype(jnp.float32).reshape(1, C_OUT)

    # 0/1 selection matrix that sums each group of 28 columns: (W, Wo).
    s_mat = (jnp.arange(W)[:, None] // POOL ==
             jnp.arange(Wo)[None, :]).astype(jnp.float32)

    out = pl.pallas_call(
        _pyramid_kernel,
        out_shape=jax.ShapeDtypeStruct((N, Ho, Wo, C_OUT), low_nchw.dtype),
        grid=(N, Ho // ho_tile),
        in_specs=[
            # HO_TILE pooling rows per step; double-buffered by Pallas.
            pl.BlockSpec((pl.Squeezed(), C_IN, ho_tile, POOL, W),
                         lambda n, ho: (n, 0, ho, 0, 0)),
            # Constant block indices -> weight / S / bias stay resident in VMEM.
            pl.BlockSpec((C_IN, C_OUT), lambda n, ho: (0, 0)),
            pl.BlockSpec((W, Wo), lambda n, ho: (0, 0)),
            pl.BlockSpec((1, C_OUT), lambda n, ho: (0, 0)),
        ],
        # Lane-dense output block: last dim = C_OUT = 128.
        out_specs=pl.BlockSpec((pl.Squeezed(), ho_tile, Wo, C_OUT),
                               lambda n, ho: (n, ho, 0, 0)),
        compiler_params=pltpu.CompilerParams(
            dimension_semantics=("parallel", "parallel"),
            vmem_limit_bytes=_VMEM_LIMIT_BYTES,
        ),
    )(x5, wt, s_mat, b_row)

    # Only the tiny pooled output (784x smaller than the input) gets permuted.
    return jnp.transpose(out, (0, 3, 1, 2))        # (N, C_out, Ho, Wo)


def _reference(low_nchw, weight, bias):
    # Pure-JAX reference matching PyTorch semantics.
    N, C, H, W = low_nchw.shape
    Ho, Wo = H // POOL, W // POOL
    x = low_nchw.reshape(N, C, Ho, POOL, Wo, POOL)
    pooled = x.mean(axis=(3, 5))                                   # (N, C, Ho, Wo)
    return jnp.einsum('nchw,oc->nohw', pooled, weight) + bias[None, :, None, None]


if __name__ == "__main__":
    key = jax.random.PRNGKey(0)
    k_x, k_w, k_b = jax.random.split(key, 3)

    # C=128 is fixed by the conv; spatial 56 = 2x2 pooling windows so the
    # (N, Ho-blocks) grid and multi-row tiling are actually exercised.
    N, H, W = 2, 56, 56
    low = jax.random.normal(k_x, (N, C_IN, H, W), dtype=jnp.float32)

    # PyTorch-style uniform init with bound 1/sqrt(fan_in).
    bound = 1.0 / (C_IN ** 0.5)
    weight = jax.random.uniform(k_w, (C_OUT, C_IN), minval=-bound, maxval=bound,
                                dtype=jnp.float32)
    bias = jax.random.uniform(k_b, (C_OUT,), minval=-bound, maxval=bound,
                              dtype=jnp.float32)

    out = jax.block_until_ready(feature_pyramid_low(low, weight, bias))
    ref = _reference(low, weight, bias)

    assert out.shape == (N, C_OUT, H // POOL, W // POOL), out.shape
    assert jnp.allclose(out, ref, atol=1e-4, rtol=1e-4), "mismatch vs reference"

    print("KERNEL_OK")
</pallas_src>

<mosaic_0001>
module attributes {stable_mosaic.version = 11 : i64} {
  func.func @_pyramid_kernel(%arg0: i32, %arg1: i32, %arg2: memref<1x128x2x28x56xf32, #tpu.memory_space<vmem>>, %arg3: memref<128x128xf32, #tpu.memory_space<vmem>>, %arg4: memref<56x2xf32, #tpu.memory_space<vmem>>, %arg5: memref<1x128xf32, #tpu.memory_space<vmem>>, %arg6: memref<1x2x2x128xf32, #tpu.memory_space<vmem>>) attributes {dimension_semantics = [#tpu.dimension_semantics<parallel>, #tpu.dimension_semantics<parallel>], iteration_bounds = array<i64: 2, 1>, scalar_prefetch = 0 : i64, scratch_operands = 0 : i64, tpu.core_type = #tpu.core_type<tc>, window_params = [{transform_indices = @transform_0, window_bounds = array<i64: 1, 128, 2, 28, 56>}, {pipeline_mode = #tpu.pipeline_mode<synchronous>, transform_indices = @transform_1, window_bounds = array<i64: 128, 128>}, {pipeline_mode = #tpu.pipeline_mode<synchronous>, transform_indices = @transform_2, window_bounds = array<i64: 56, 2>}, {pipeline_mode = #tpu.pipeline_mode<synchronous>, transform_indices = @transform_3, window_bounds = array<i64: 1, 128>}, {transform_indices = @transform_4, window_bounds = array<i64: 1, 2, 2, 128>}]} {
    %c0 = arith.constant 0 : index
    %c0_0 = arith.constant 0 : index
    %c0_1 = arith.constant 0 : index
    %c0_2 = arith.constant 0 : index
    %c0_3 = arith.constant 0 : index
    %0 = vector.load %arg2[%c0, %c0_0, %c0_1, %c0_2, %c0_3] : memref<1x128x2x28x56xf32, #tpu.memory_space<vmem>>, vector<1x128x1x28x56xf32>
    %1 = vector.shape_cast %0 : vector<1x128x1x28x56xf32> to vector<128x28x56xf32>
    %cst = arith.constant dense<0.000000e+00> : vector<128x56xf32>
    %2 = vector.multi_reduction <add>, %1, %cst [1] : vector<128x28x56xf32> to vector<128x56xf32>
    %c0_4 = arith.constant 0 : index
    %c0_5 = arith.constant 0 : index
    %3 = vector.load %arg4[%c0_4, %c0_5] : memref<56x2xf32, #tpu.memory_space<vmem>>, vector<56x2xf32>
    %cst_6 = arith.constant dense<0.000000e+00> : vector<128x2xf32>
    %4 = tpu.matmul %2, %3, %cst_6 {dimension_numbers = #tpu.dot_dimension_numbers<[1], [0], [0], [1], [0, 0, 1, 1], [], []>} : vector<128x56xf32>, vector<56x2xf32>, vector<128x2xf32> -> vector<128x2xf32>
    %c0_7 = arith.constant 0 : index
    %c0_8 = arith.constant 0 : index
    %c1 = arith.constant 1 : index
    %c0_9 = arith.constant 0 : index
    %c0_10 = arith.constant 0 : index
    %5 = vector.load %arg2[%c0_7, %c0_8, %c1, %c0_9, %c0_10] : memref<1x128x2x28x56xf32, #tpu.memory_space<vmem>>, vector<1x128x1x28x56xf32>
    %6 = vector.shape_cast %5 : vector<1x128x1x28x56xf32> to vector<128x28x56xf32>
    %cst_11 = arith.constant dense<0.000000e+00> : vector<128x56xf32>
    %7 = vector.multi_reduction <add>, %6, %cst_11 [1] : vector<128x28x56xf32> to vector<128x56xf32>
    %c0_12 = arith.constant 0 : index
    %c0_13 = arith.constant 0 : index
    %8 = vector.load %arg4[%c0_12, %c0_13] : memref<56x2xf32, #tpu.memory_space<vmem>>, vector<56x2xf32>
    %cst_14 = arith.constant dense<0.000000e+00> : vector<128x2xf32>
    %9 = tpu.matmul %7, %8, %cst_14 {dimension_numbers = #tpu.dot_dimension_numbers<[1], [0], [0], [1], [0, 0, 1, 1], [], []>} : vector<128x56xf32>, vector<56x2xf32>, vector<128x2xf32> -> vector<128x2xf32>
    %10 = tpu.concatenate %4, %9 in 1 : vector<128x2xf32>, vector<128x2xf32> -> vector<128x4xf32>
    %11 = tpu.transpose %10, [1, 0] : vector<128x4xf32> -> vector<4x128xf32>
    %c0_15 = arith.constant 0 : index
    %c0_16 = arith.constant 0 : index
    %12 = vector.load %arg3[%c0_15, %c0_16] : memref<128x128xf32, #tpu.memory_space<vmem>>, vector<128x128xf32>
    %cst_17 = arith.constant dense<0.000000e+00> : vector<4x128xf32>
    %13 = tpu.matmul %11, %12, %cst_17 {dimension_numbers = #tpu.dot_dimension_numbers<[1], [0], [0], [1], [0, 0, 1, 1], [], []>} : vector<4x128xf32>, vector<128x128xf32>, vector<4x128xf32> -> vector<4x128xf32>
    %c0_18 = arith.constant 0 : index
    %c0_19 = arith.constant 0 : index
    %14 = vector.load %arg5[%c0_18, %c0_19] : memref<1x128xf32, #tpu.memory_space<vmem>>, vector<1x128xf32>
    %15 = vector.broadcast %14 : vector<1x128xf32> to vector<4x128xf32>
    %16 = arith.addf %13, %15 : vector<4x128xf32>
    %17 = vector.shape_cast %16 : vector<4x128xf32> to vector<2x2x128xf32>
    %c0_20 = arith.constant 0 : index
    %c0_21 = arith.constant 0 : index
    %c0_22 = arith.constant 0 : index
    %c0_23 = arith.constant 0 : index
    %18 = vector.load %arg6[%c0_20, %c0_21, %c0_22, %c0_23] : memref<1x2x2x128xf32, #tpu.memory_space<vmem>>, vector<1x2x2x128xf32>
    %19 = vector.shape_cast %18 : vector<1x2x2x128xf32> to vector<2x2x128xf32>
    %20 = vector.shape_cast %17 : vector<2x2x128xf32> to vector<1x2x2x128xf32>
    tpu.vector_store %arg6[%c0_20, %c0_21, %c0_22, %c0_23], %20 {strides = array<i32>} : memref<1x2x2x128xf32, #tpu.memory_space<vmem>>, vector<1x2x2x128xf32>,
    return
  }
  func.func @transform_0(%arg0: i32, %arg1: i32) -> (i32, i32, i32, i32, i32) {
    %c0_i32 = arith.constant 0 : i32
    %c0_i32_0 = arith.constant 0 : i32
    %c0_i32_1 = arith.constant 0 : i32
    %c0_i32_2 = arith.constant 0 : i32
    return %arg0, %c0_i32, %arg1, %c0_i32_0, %c0_i32_1 : i32, i32, i32, i32, i32
  }
  func.func @transform_1(%arg0: i32, %arg1: i32) -> (i32, i32) {
    %c0_i32 = arith.constant 0 : i32
    %c0_i32_0 = arith.constant 0 : i32
    %c0_i32_1 = arith.constant 0 : i32
    return %c0_i32, %c0_i32_0 : i32, i32
  }
  func.func @transform_2(%arg0: i32, %arg1: i32) -> (i32, i32) {
    %c0_i32 = arith.constant 0 : i32
    %c0_i32_0 = arith.constant 0 : i32
    %c0_i32_1 = arith.constant 0 : i32
    return %c0_i32, %c0_i32_0 : i32, i32
  }
  func.func @transform_3(%arg0: i32, %arg1: i32) -> (i32, i32) {
    %c0_i32 = arith.constant 0 : i32
    %c0_i32_0 = arith.constant 0 : i32
    %c0_i32_1 = arith.constant 0 : i32
    return %c0_i32, %c0_i32_0 : i32, i32
  }
  func.func @transform_4(%arg0: i32, %arg1: i32) -> (i32, i32, i32, i32) {
    %c0_i32 = arith.constant 0 : i32
    %c0_i32_0 = arith.constant 0 : i32
    %c0_i32_1 = arith.constant 0 : i32
    return %arg0, %arg1, %c0_i32, %c0_i32_0 : i32, i32, i32, i32
  }
}

</mosaic_0001>

<llo_original>
// kernel: feature_pyramid_low.1
$region0: #{feature_pyramid_low.1}
  #allocation0 [shape = 'u32[]', space=smem, size = 0x4, offset = 0x4, fixed_abs, tag = 'smem constant byte address 0x4 - core index']
  #allocation1 [shape = 'u32[72,128]{1,0:T(1,128)}', space=vmem, size = 0x9000, scoped, tag = 'internal scratch']
  %s0 = inlined_call_operand.vmem [shape: f32[2,128,2,28,56], index: 0, kind: input, shape index: {}]
  %s1 = inlined_call_operand.vmem [shape: f32[128,128], index: 1, kind: input, shape index: {}]
  %s2 = inlined_call_operand.vmem [shape: f32[56,2], index: 2, kind: input, shape index: {}]
  %s3 = inlined_call_operand.vmem [shape: f32[1,128], index: 3, kind: input, shape index: {}]
  %s4 = inlined_call_operand.hbm [shape: f32[2,2,2,128], index: 4, kind: output, shape index: {}]
  %s5 = sld [smem:[#allocation0]]
  $region49: #{feature_pyramid_low.1} parent=0
    _
  %s7 = ssub.s32 1, %s5
  %s8 = scalar_select 0, %s7, %s5
  $region1: #{feature_pyramid_low.1} parent=0
    #allocation2 [shape = 'u8[4096]{0}', space=vmem, size = 0x1000, scoped, tag = 'output window, operand 0']
    #allocation3 [shape = 's32[2]{0}', space=sflag, size = 0x8, scoped, tag = 'scoped memory for feature_pyramid_low.1']
    %9 = vsyncpa [#allocation3], 0
    %s10 = scalar_lea.sflag [#allocation3], 1
    %11 = vsyncpa %s10, 0
    loop: start=0, step=1, limit=4
    $region2: #{feature_pyramid_low.1} parent=1 // loop_pre_header
      _
    $region3: #{feature_pyramid_low.1} parent=1 // loop_header
      %s13 = sphi 0, %s17
      %p14 = scmp.ge.s32.totalorder %s13, 4
      %s20 = sphi 0, %s32
      %s21 = sphi 0, %s28
      %s22 = sphi 0, %s20
      %s23 = sphi 0, %s21
      %s24 = sphi 0, %s22
      %s25 = sphi 0, %s23
      %s37 = sphi 0, %s39
      %s40 = sphi 0, %s37
      %s41 = sphi 0, %s40
      %s57 = sphi 0, %s41
      %s61 = sphi 0, %s61
      %s63 = sphi 0, %s61
      %s64 = sphi 0, %s63
      %s78 = sphi 0, %s64
      %s82 = sphi 0, %s82
      %s84 = sphi 0, %s82
      %s85 = sphi 0, %s84
      %s99 = sphi 0, %s85
      %s103 = sphi 0, %s103
      %s105 = sphi 0, %s103
      %s106 = sphi 0, %s105
      %s120 = sphi 0, %s106
      %s128 = sphi 0, %s130
      %s131 = sphi 0, %s128
      %s132 = sphi 0, %s131
      %s148 = sphi 0, %s132
    $region4: #{feature_pyramid_low.1} parent=1 // loop_header_branch
      %16 = sbr.rel (%p14) target = $region8
    $region5: #{feature_pyramid_low.1} parent=1 // loop_body
      %s18 = ssub.s32 %s13, 1
      %s19 = ssub.s32 %s13, 2
      %s26 = sadd.s32 1, %s21
      %p27 = scmp.ge.s32.totalorder %s26, 1
      %s28 = scalar_select %p27, 0, %s26
      %s29 = sadd.s32 1, %s20
      %s30 = scalar_select %p27, %s29, %s20
      %p31 = scmp.ge.s32.totalorder %s30, 2
      %s32 = scalar_select %p31, 0, %s30
      %s33 = ssub.s32 %s20, %s32
      %s34 = ssub.s32 %s21, %s28
      %s35 = sor.u32 %s33, %s34
      %p36 = scmp.eq.s32.totalorder %s35, 0
      %s38 = sadd.s32 %s37, 1
      %s39 = scalar_select %p36, %s37, %s38
      %p42 = pneg %p36
      %p43 = scmp.eq.s32.totalorder %s13, 1
      %p44 = por %p42, %p43
      %p45 = scmp.ne.s32.totalorder %s37, %s40
      %p46 = scmp.eq.s32.totalorder %s13, 0
      %p47 = por %p45, %p46
      %p48 = scmp.ne.s32.totalorder %s37, %s40
      %p49 = scmp.eq.s32.totalorder %s18, 1
      %p50 = por %p48, %p49
      %p51 = scmp.ne.s32.totalorder %s40, %s41
      %p52 = scmp.eq.s32.totalorder %s18, 0
      %p53 = por %p51, %p52
      %p54 = scmp.ne.s32.totalorder %s40, %s41
      %p55 = scmp.eq.s32.totalorder %s19, 1
      %p56 = por %p54, %p55
      %p58 = scmp.ne.s32.totalorder %s41, %s57
      %p59 = scmp.eq.s32.totalorder %s19, 0
      %p60 = por %p58, %p59
      %s62 = sadd.s32 %s61, 1
      %p65 = scmp.eq.s32.totalorder %s13, 1
      %p66 = scmp.ne.s32.totalorder %s61, %s63
      %p67 = scmp.eq.s32.totalorder %s13, 0
      %p68 = por %p66, %p67
      %p69 = scmp.ne.s32.totalorder %s61, %s63
      %p70 = scmp.eq.s32.totalorder %s18, 1
      %p71 = por %p69, %p70
      %p72 = scmp.ne.s32.totalorder %s63, %s64
      %p73 = scmp.eq.s32.totalorder %s18, 0
      %p74 = por %p72, %p73
      %p75 = scmp.ne.s32.totalorder %s63, %s64
      %p76 = scmp.eq.s32.totalorder %s19, 1
      %p77 = por %p75, %p76
      %p79 = scmp.ne.s32.totalorder %s64, %s78
      %p80 = scmp.eq.s32.totalorder %s19, 0
      %p81 = por %p79, %p80
      %s83 = sadd.s32 %s82, 1
      %p86 = scmp.eq.s32.totalorder %s13, 1
      %p87 = scmp.ne.s32.totalorder %s82, %s84
      %p88 = scmp.eq.s32.totalorder %s13, 0
      %p89 = por %p87, %p88
      %p90 = scmp.ne.s32.totalorder %s82, %s84
      %p91 = scmp.eq.s32.totalorder %s18, 1
      %p92 = por %p90, %p91
      %p93 = scmp.ne.s32.totalorder %s84, %s85
      %p94 = scmp.eq.s32.totalorder %s18, 0
      %p95 = por %p93, %p94
      %p96 = scmp.ne.s32.totalorder %s84, %s85
      %p97 = scmp.eq.s32.totalorder %s19, 1
      %p98 = por %p96, %p97
      %p100 = scmp.ne.s32.totalorder %s85, %s99
      %p101 = scmp.eq.s32.totalorder %s19, 0
      %p102 = por %p100, %p101
      %s104 = sadd.s32 %s103, 1
      %p107 = scmp.eq.s32.totalorder %s13, 1
      %p108 = scmp.ne.s32.totalorder %s103, %s105
      %p109 = scmp.eq.s32.totalorder %s13, 0
      %p110 = por %p108, %p109
      %p111 = scmp.ne.s32.totalorder %s103, %s105
      %p112 = scmp.eq.s32.totalorder %s18, 1
      %p113 = por %p111, %p112
      %p114 = scmp.ne.s32.totalorder %s105, %s106
      %p115 = scmp.eq.s32.totalorder %s18, 0
      %p116 = por %p114, %p115
      %p117 = scmp.ne.s32.totalorder %s105, %s106
      %p118 = scmp.eq.s32.totalorder %s19, 1
      %p119 = por %p117, %p118
      %p121 = scmp.ne.s32.totalorder %s106, %s120
      %p122 = scmp.eq.s32.totalorder %s19, 0
      %p123 = por %p121, %p122
      %s124 = ssub.s32 %s20, %s32
      %s125 = ssub.s32 %s21, %s28
      %s126 = sor.u32 %s124, %s125
      %p127 = scmp.eq.s32.totalorder %s126, 0
      %s129 = sadd.s32 %s128, 1
      %s130 = scalar_select %p127, %s128, %s129
      %p133 = pneg %p127
      %p134 = scmp.eq.s32.totalorder %s13, 1
      %p135 = por %p133, %p134
      %p136 = scmp.ne.s32.totalorder %s128, %s131
      %p137 = scmp.eq.s32.totalorder %s13, 0
      %p138 = por %p136, %p137
      %p139 = scmp.ne.s32.totalorder %s128, %s131
      %p140 = scmp.eq.s32.totalorder %s18, 1
      %p141 = por %p139, %p140
      %p142 = scmp.ne.s32.totalorder %s131, %s132
      %p143 = scmp.eq.s32.totalorder %s18, 0
      %p144 = por %p142, %p143
      %p145 = scmp.ne.s32.totalorder %s131, %s132
      %p146 = scmp.eq.s32.totalorder %s19, 1
      %p147 = por %p145, %p146
      %p149 = scmp.ne.s32.totalorder %s132, %s148
      %p150 = scmp.eq.s32.totalorder %s19, 0
      %p151 = por %p149, %p150
      %p152 = scmp.le.s32.totalorder 1, %s13
      %p153 = scmp.lt.s32.totalorder %s13, 3
      %p154 = pnand %p152, %p153
      %p155 = pneg %p154
      // Predicated region
      $region9: #{feature_pyramid_low.1} parent=5 // pred_check
        _
      $region10: #{feature_pyramid_low.1} parent=5 // pred_check_branch
        %157 = sbr.rel (%p154) target = $region12
      $region11: #{feature_pyramid_low.1} parent=5 // pred_region
        %s158 = ssub.s32 %s13, 1
        // Predicated region
        $region13: #{feature_pyramid_low.1} parent=11 // pred_check
          %p159 = pneg %p74
        $region14: #{feature_pyramid_low.1} parent=11 // pred_check_branch
          %161 = sbr.rel (%p159) target = $region16
        $region15: #{feature_pyramid_low.1} parent=11 // pred_region
          _
        $region16: #{feature_pyramid_low.1} parent=11 // pred_fallthru
          _
        // Predicated region
        $region17: #{feature_pyramid_low.1} parent=11 // pred_check
          %p162 = pneg %p95
        $region18: #{feature_pyramid_low.1} parent=11 // pred_check_branch
          %164 = sbr.rel (%p162) target = $region20
        $region19: #{feature_pyramid_low.1} parent=11 // pred_region
          _
        $region20: #{feature_pyramid_low.1} parent=11 // pred_fallthru
          _
        // Predicated region
        $region21: #{feature_pyramid_low.1} parent=11 // pred_check
          %p165 = pneg %p116
        $region22: #{feature_pyramid_low.1} parent=11 // pred_check_branch
          %167 = sbr.rel (%p165) target = $region24
        $region23: #{feature_pyramid_low.1} parent=11 // pred_region
          _
        $region24: #{feature_pyramid_low.1} parent=11 // pred_fallthru
          _
      $region12: #{feature_pyramid_low.1} parent=5 // pred_fallthru
        _
      %p168 = scmp.lt.s32.totalorder %s13, 2
      // Predicated region
      $region25: #{feature_pyramid_low.1} parent=5 // pred_check
        %p169 = pneg %p168
      $region26: #{feature_pyramid_low.1} parent=5 // pred_check_branch
        %171 = sbr.rel (%p169) target = $region28
      $region27: #{feature_pyramid_low.1} parent=5 // pred_region
        // Predicated region
        $region29: #{feature_pyramid_low.1} parent=27 // pred_check
          %p172 = pneg %p47
        $region30: #{feature_pyramid_low.1} parent=27 // pred_check_branch
          %174 = sbr.rel (%p172) target = $region32
        $region31: #{feature_pyramid_low.1} parent=27 // pred_region
          %s175 = smul.u32 2, %s21
          %p176 = scmp.lt.s32.totalorder %s20, 1
          %s177 = scalar_select %p176, %s20, 1
          %p178 = scmp.lt.s32.totalorder %s175, 1
          %s179 = scalar_select %p178, %s175, 1
          %s180 = smul.addr %s179, 4
          %s181 = smul.addr %s177, 1024
          %s182 = sadd.s32 %s180, %s181
          %s183 = smul.addr %s182, 8
          %s184 = scalar_lea.vmem %s0, %s183
          %s185 = smul.u32 2, %s21
        $region32: #{feature_pyramid_low.1} parent=27 // pred_fallthru
          _
      $region28: #{feature_pyramid_low.1} parent=5 // pred_fallthru
        _
      %p186 = scmp.le.s32.totalorder 1, %s13
      %p187 = scmp.lt.s32.totalorder %s13, 3
      %p188 = pnand %p186, %p187
      %p189 = pneg %p188
      // Predicated region
      $region33: #{feature_pyramid_low.1} parent=5 // pred_check
        _
      $region34: #{feature_pyramid_low.1} parent=5 // pred_check_branch
        %191 = sbr.rel (%p188) target = $region36
      $region35: #{feature_pyramid_low.1} parent=5 // pred_region
        %s192 = ssub.s32 %s13, 1
        %s193 = smul.u32 2, %s23
        %p194 = scmp.lt.s32.totalorder %s22, 1
        %s195 = scalar_select %p194, %s22, 1
        %p196 = scmp.lt.s32.totalorder %s193, 1
        %s197 = scalar_select %p196, %s193, 1
        %s198 = smul.addr %s197, 4
        %s199 = smul.addr %s195, 1024
        %s200 = sadd.s32 %s198, %s199
        %s201 = smul.addr %s200, 8
        %s202 = scalar_lea.vmem %s0, %s201
        %p203 = pneg %p53
        %p204 = pneg %p50
        %p205 = pneg %p74
        %p206 = pneg %p71
        %p207 = pneg %p95
        %p208 = pneg %p92
        %p209 = pneg %p116
        %p210 = pneg %p113
        %p211 = pneg %p144
        %p212 = pneg %p141
        %s213 = sand.u32 %s131, 1
        %s214 = scalar_lea.sflag [#allocation3], %s213
        %s215 = sand.u32 %s131, 1
        %s216 = smul.addr %s215, 4
        %s217 = scalar_lea.vmem [#allocation2], %s216
        %s218 = smul.u32 2, %s23
        %p219 = scmp.lt.s32.totalorder %s22, 1
        %s220 = scalar_select %p219, %s22, 1
        %p221 = scmp.lt.s32.totalorder %s218, 1
        %s222 = scalar_select %p221, %s218, 1
        %s223 = smul.addr %s222, 4
        %s224 = smul.addr %s220, 1024
        %s225 = sadd.s32 %s223, %s224
        %s226 = smul.addr %s225, 8
        %s227 = scalar_lea.vmem %s0, %s226
        %s228 = smul.u32 2, %s23
        %s229 = smul.u32 2, %s23
        %v230 = vld [vmem:[%s227] sm:$0xff]
        %v231 = vld [vmem:[%s227 + $0x8] sm:$0xff]
        %v232 = vld [vmem:[%s227 + $0x10] sm:$0xff]
        %v233 = vld [vmem:[%s227 + $0x18] sm:$0xf]
        %v234 = vld [vmem:[%s227 + $0x40] sm:$0xff]
        %v235 = vld [vmem:[%s227 + $0x48] sm:$0xff]
        %v236 = vld [vmem:[%s227 + $0x50] sm:$0xff]
        %v237 = vld [vmem:[%s227 + $0x58] sm:$0xf]
        %v238 = vld [vmem:[%s227 + $0x80] sm:$0xff]
        %v239 = vld [vmem:[%s227 + $0x88] sm:$0xff]
        %v240 = vld [vmem:[%s227 + $0x90] sm:$0xff]
        %v241 = vld [vmem:[%s227 + $0x98] sm:$0xf]
        %v242 = vld [vmem:[%s227 + $0xc0] sm:$0xff]
        %v243 = vld [vmem:[%s227 + $0xc8] sm:$0xff]
        %v244 = vld [vmem:[%s227 + $0xd0] sm:$0xff]
        %v245 = vld [vmem:[%s227 + $0xd8] sm:$0xf]
        %v246 = vld [vmem:[%s227 + $0x100] sm:$0xff]
        %v247 = vld [vmem:[%s227 + $0x108] sm:$0xff]
        %v248 = vld [vmem:[%s227 + $0x110] sm:$0xff]
        %v249 = vld [vmem:[%s227 + $0x118] sm:$0xf]
        %v250 = vld [vmem:[%s227 + $0x140] sm:$0xff]
        %v251 = vld [vmem:[%s227 + $0x148] sm:$0xff]
        %v252 = vld [vmem:[%s227 + $0x150] sm:$0xff]
        %v253 = vld [vmem:[%s227 + $0x158] sm:$0xf]
        %v254 = vld [vmem:[%s227 + $0x180] sm:$0xff]
        %v255 = vld [vmem:[%s227 + $0x188] sm:$0xff]
        %v256 = vld [vmem:[%s227 + $0x190] sm:$0xff]
        %v257 = vld [vmem:[%s227 + $0x198] sm:$0xf]
        %v258 = vld [vmem:[%s227 + $0x1c0] sm:$0xff]
        %v259 = vld [vmem:[%s227 + $0x1c8] sm:$0xff]
        %v260 = vld [vmem:[%s227 + $0x1d0] sm:$0xff]
        %v261 = vld [vmem:[%s227 + $0x1d8] sm:$0xf]
        %v262 = vld [vmem:[%s227 + $0x200] sm:$0xff]
        %v263 = vld [vmem:[%s227 + $0x208] sm:$0xff]
        %v264 = vld [vmem:[%s227 + $0x210] sm:$0xff]
        %v265 = vld [vmem:[%s227 + $0x218] sm:$0xf]
        %v266 = vld [vmem:[%s227 + $0x240] sm:$0xff]
        %v267 = vld [vmem:[%s227 + $0x248] sm:$0xff]
        %v268 = vld [vmem:[%s227 + $0x250] sm:$0xff]
        %v269 = vld [vmem:[%s227 + $0x258] sm:$0xf]
        %v270 = vld [vmem:[%s227 + $0x280] sm:$0xff]
        %v271 = vld [vmem:[%s227 + $0x288] sm:$0xff]
        %v272 = vld [vmem:[%s227 + $0x290] sm:$0xff]
        %v273 = vld [vmem:[%s227 + $0x298] sm:$0xf]
        %v274 = vld [vmem:[%s227 + $0x2c0] sm:$0xff]
        %v275 = vld [vmem:[%s227 + $0x2c8] sm:$0xff]
        %v276 = vld [vmem:[%s227 + $0x2d0] sm:$0xff]
        %v277 = vld [vmem:[%s227 + $0x2d8] sm:$0xf]
        %v278 = vld [vmem:[%s227 + $0x300] sm:$0xff]
        %v279 = vld [vmem:[%s227 + $0x308] sm:$0xff]
        %v280 = vld [vmem:[%s227 + $0x310] sm:$0xff]
        %v281 = vld [vmem:[%s227 + $0x318] sm:$0xf]
        %v282 = vld [vmem:[%s227 + $0x340] sm:$0xff]
        %v283 = vld [vmem:[%s227 + $0x348] sm:$0xff]
        %v284 = vld [vmem:[%s227 + $0x350] sm:$0xff]
        %v285 = vld [vmem:[%s227 + $0x358] sm:$0xf]
        %v286 = vld [vmem:[%s227 + $0x380] sm:$0xff]
        %v287 = vld [vmem:[%s227 + $0x388] sm:$0xff]
        %v288 = vld [vmem:[%s227 + $0x390] sm:$0xff]
        %v289 = vld [vmem:[%s227 + $0x398] sm:$0xf]
        %v290 = vld [vmem:[%s227 + $0x3c0] sm:$0xff]
        %v291 = vld [vmem:[%s227 + $0x3c8] sm:$0xff]
        %v292 = vld [vmem:[%s227 + $0x3d0] sm:$0xff]
        %v293 = vld [vmem:[%s227 + $0x3d8] sm:$0xf]
        %v294 = vld [vmem:[%s227 + $0x400] sm:$0xff]
        %v295 = vld [vmem:[%s227 + $0x408] sm:$0xff]
        %v296 = vld [vmem:[%s227 + $0x410] sm:$0xff]
        %v297 = vld [vmem:[%s227 + $0x418] sm:$0xf]
        %v298 = vld [vmem:[%s227 + $0x440] sm:$0xff]
        %v299 = vld [vmem:[%s227 + $0x448] sm:$0xff]
        %v300 = vld [vmem:[%s227 + $0x450] sm:$0xff]
        %v301 = vld [vmem:[%s227 + $0x458] sm:$0xf]
        %v302 = vld [vmem:[%s227 + $0x480] sm:$0xff]
        %v303 = vld [vmem:[%s227 + $0x488] sm:$0xff]
        %v304 = vld [vmem:[%s227 + $0x490] sm:$0xff]
        %v305 = vld [vmem:[%s227 + $0x498] sm:$0xf]
        %v306 = vld [vmem:[%s227 + $0x4c0] sm:$0xff]
        %v307 = vld [vmem:[%s227 + $0x4c8] sm:$0xff]
        %v308 = vld [vmem:[%s227 + $0x4d0] sm:$0xff]
        %v309 = vld [vmem:[%s227 + $0x4d8] sm:$0xf]
        %v310 = vld [vmem:[%s227 + $0x500] sm:$0xff]
        %v311 = vld [vmem:[%s227 + $0x508] sm:$0xff]
        %v312 = vld [vmem:[%s227 + $0x510] sm:$0xff]
        %v313 = vld [vmem:[%s227 + $0x518] sm:$0xf]
        %v314 = vld [vmem:[%s227 + $0x540] sm:$0xff]
        %v315 = vld [vmem:[%s227 + $0x548] sm:$0xff]
        %v316 = vld [vmem:[%s227 + $0x550] sm:$0xff]
        %v317 = vld [vmem:[%s227 + $0x558] sm:$0xf]
        %v318 = vld [vmem:[%s227 + $0x580] sm:$0xff]
        %v319 = vld [vmem:[%s227 + $0x588] sm:$0xff]
        %v320 = vld [vmem:[%s227 + $0x590] sm:$0xff]
        %v321 = vld [vmem:[%s227 + $0x598] sm:$0xf]
        %v322 = vld [vmem:[%s227 + $0x5c0] sm:$0xff]
        %v323 = vld [vmem:[%s227 + $0x5c8] sm:$0xff]
        %v324 = vld [vmem:[%s227 + $0x5d0] sm:$0xff]
        %v325 = vld [vmem:[%s227 + $0x5d8] sm:$0xf]
        %v326 = vld [vmem:[%s227 + $0x600] sm:$0xff]
        %v327 = vld [vmem:[%s227 + $0x608] sm:$0xff]
        %v328 = vld [vmem:[%s227 + $0x610] sm:$0xff]
        %v329 = vld [vmem:[%s227 + $0x618] sm:$0xf]
        %v330 = vld [vmem:[%s227 + $0x640] sm:$0xff]
        %v331 = vld [vmem:[%s227 + $0x648] sm:$0xff]
        %v332 = vld [vmem:[%s227 + $0x650] sm:$0xff]
        %v333 = vld [vmem:[%s227 + $0x658] sm:$0xf]
        %v334 = vld [vmem:[%s227 + $0x680] sm:$0xff]
        %v335 = vld [vmem:[%s227 + $0x688] sm:$0xff]
        %v336 = vld [vmem:[%s227 + $0x690] sm:$0xff]
        %v337 = vld [vmem:[%s227 + $0x698] sm:$0xf]
        %v338 = vld [vmem:[%s227 + $0x6c0] sm:$0xff]
        %v339 = vld [vmem:[%s227 + $0x6c8] sm:$0xff]
        %v340 = vld [vmem:[%s227 + $0x6d0] sm:$0xff]
        %v341 = vld [vmem:[%s227 + $0x6d8] sm:$0xf]
        %v342 = vld [vmem:[%s227 + $0x700] sm:$0xff]
        %v343 = vld [vmem:[%s227 + $0x708] sm:$0xff]
        %v344 = vld [vmem:[%s227 + $0x710] sm:$0xff]
        %v345 = vld [vmem:[%s227 + $0x718] sm:$0xf]
        %v346 = vld [vmem:[%s227 + $0x740] sm:$0xff]
        %v347 = vld [vmem:[%s227 + $0x748] sm:$0xff]
        %v348 = vld [vmem:[%s227 + $0x750] sm:$0xff]
        %v349 = vld [vmem:[%s227 + $0x758] sm:$0xf]
        %v350 = vld [vmem:[%s227 + $0x780] sm:$0xff]
        %v351 = vld [vmem:[%s227 + $0x788] sm:$0xff]
        %v352 = vld [vmem:[%s227 + $0x790] sm:$0xff]
        %v353 = vld [vmem:[%s227 + $0x798] sm:$0xf]
        %v354 = vld [vmem:[%s227 + $0x7c0] sm:$0xff]
        %v355 = vld [vmem:[%s227 + $0x7c8] sm:$0xff]
        %v356 = vld [vmem:[%s227 + $0x7d0] sm:$0xff]
        %v357 = vld [vmem:[%s227 + $0x7d8] sm:$0xf]
        %v358 = vld [vmem:[%s227 + $0x800] sm:$0xff]
        %v359 = vld [vmem:[%s227 + $0x808] sm:$0xff]
        %v360 = vld [vmem:[%s227 + $0x810] sm:$0xff]
        %v361 = vld [vmem:[%s227 + $0x818] sm:$0xf]
        %v362 = vld [vmem:[%s227 + $0x840] sm:$0xff]
        %v363 = vld [vmem:[%s227 + $0x848] sm:$0xff]
        %v364 = vld [vmem:[%s227 + $0x850] sm:$0xff]
        %v365 = vld [vmem:[%s227 + $0x858] sm:$0xf]
        %v366 = vld [vmem:[%s227 + $0x880] sm:$0xff]
        %v367 = vld [vmem:[%s227 + $0x888] sm:$0xff]
        %v368 = vld [vmem:[%s227 + $0x890] sm:$0xff]
        %v369 = vld [vmem:[%s227 + $0x898] sm:$0xf]
        %v370 = vld [vmem:[%s227 + $0x8c0] sm:$0xff]
        %v371 = vld [vmem:[%s227 + $0x8c8] sm:$0xff]
        %v372 = vld [vmem:[%s227 + $0x8d0] sm:$0xff]
        %v373 = vld [vmem:[%s227 + $0x8d8] sm:$0xf]
        %v374 = vld [vmem:[%s227 + $0x900] sm:$0xff]
        %v375 = vld [vmem:[%s227 + $0x908] sm:$0xff]
        %v376 = vld [vmem:[%s227 + $0x910] sm:$0xff]
        %v377 = vld [vmem:[%s227 + $0x918] sm:$0xf]
        %v378 = vld [vmem:[%s227 + $0x940] sm:$0xff]
        %v379 = vld [vmem:[%s227 + $0x948] sm:$0xff]
        %v380 = vld [vmem:[%s227 + $0x950] sm:$0xff]
        %v381 = vld [vmem:[%s227 + $0x958] sm:$0xf]
        %v382 = vld [vmem:[%s227 + $0x980] sm:$0xff]
        %v383 = vld [vmem:[%s227 + $0x988] sm:$0xff]
        %v384 = vld [vmem:[%s227 + $0x990] sm:$0xff]
        %v385 = vld [vmem:[%s227 + $0x998] sm:$0xf]
        %v386 = vld [vmem:[%s227 + $0x9c0] sm:$0xff]
        %v387 = vld [vmem:[%s227 + $0x9c8] sm:$0xff]
        %v388 = vld [vmem:[%s227 + $0x9d0] sm:$0xff]
        %v389 = vld [vmem:[%s227 + $0x9d8] sm:$0xf]
        %v390 = vld [vmem:[%s227 + $0xa00] sm:$0xff]
        %v391 = vld [vmem:[%s227 + $0xa08] sm:$0xff]
        %v392 = vld [vmem:[%s227 + $0xa10] sm:$0xff]
        %v393 = vld [vmem:[%s227 + $0xa18] sm:$0xf]
        %v394 = vld [vmem:[%s227 + $0xa40] sm:$0xff]
        %v395 = vld [vmem:[%s227 + $0xa48] sm:$0xff]
        %v396 = vld [vmem:[%s227 + $0xa50] sm:$0xff]
        %v397 = vld [vmem:[%s227 + $0xa58] sm:$0xf]
        %v398 = vld [vmem:[%s227 + $0xa80] sm:$0xff]
        %v399 = vld [vmem:[%s227 + $0xa88] sm:$0xff]
        %v400 = vld [vmem:[%s227 + $0xa90] sm:$0xff]
        %v401 = vld [vmem:[%s227 + $0xa98] sm:$0xf]
        %v402 = vld [vmem:[%s227 + $0xac0] sm:$0xff]
        %v403 = vld [vmem:[%s227 + $0xac8] sm:$0xff]
        %v404 = vld [vmem:[%s227 + $0xad0] sm:$0xff]
        %v405 = vld [vmem:[%s227 + $0xad8] sm:$0xf]
        %v406 = vld [vmem:[%s227 + $0xb00] sm:$0xff]
        %v407 = vld [vmem:[%s227 + $0xb08] sm:$0xff]
        %v408 = vld [vmem:[%s227 + $0xb10] sm:$0xff]
        %v409 = vld [vmem:[%s227 + $0xb18] sm:$0xf]
        %v410 = vld [vmem:[%s227 + $0xb40] sm:$0xff]
        %v411 = vld [vmem:[%s227 + $0xb48] sm:$0xff]
        %v412 = vld [vmem:[%s227 + $0xb50] sm:$0xff]
        %v413 = vld [vmem:[%s227 + $0xb58] sm:$0xf]
        %v414 = vld [vmem:[%s227 + $0xb80] sm:$0xff]
        %v415 = vld [vmem:[%s227 + $0xb88] sm:$0xff]
        %v416 = vld [vmem:[%s227 + $0xb90] sm:$0xff]
        %v417 = vld [vmem:[%s227 + $0xb98] sm:$0xf]
        %v418 = vld [vmem:[%s227 + $0xbc0] sm:$0xff]
        %v419 = vld [vmem:[%s227 + $0xbc8] sm:$0xff]
        %v420 = vld [vmem:[%s227 + $0xbd0] sm:$0xff]
        %v421 = vld [vmem:[%s227 + $0xbd8] sm:$0xf]
        %v422 = vld [vmem:[%s227 + $0xc00] sm:$0xff]
        %v423 = vld [vmem:[%s227 + $0xc08] sm:$0xff]
        %v424 = vld [vmem:[%s227 + $0xc10] sm:$0xff]
        %v425 = vld [vmem:[%s227 + $0xc18] sm:$0xf]
        %v426 = vld [vmem:[%s227 + $0xc40] sm:$0xff]
        %v427 = vld [vmem:[%s227 + $0xc48] sm:$0xff]
        %v428 = vld [vmem:[%s227 + $0xc50] sm:$0xff]
        %v429 = vld [vmem:[%s227 + $0xc58] sm:$0xf]
        %v430 = vld [vmem:[%s227 + $0xc80] sm:$0xff]
        %v431 = vld [vmem:[%s227 + $0xc88] sm:$0xff]
        %v432 = vld [vmem:[%s227 + $0xc90] sm:$0xff]
        %v433 = vld [vmem:[%s227 + $0xc98] sm:$0xf]
        %v434 = vld [vmem:[%s227 + $0xcc0] sm:$0xff]
        %v435 = vld [vmem:[%s227 + $0xcc8] sm:$0xff]
        %v436 = vld [vmem:[%s227 + $0xcd0] sm:$0xff]
        %v437 = vld [vmem:[%s227 + $0xcd8] sm:$0xf]
        %v438 = vld [vmem:[%s227 + $0xd00] sm:$0xff]
        %v439 = vld [vmem:[%s227 + $0xd08] sm:$0xff]
        %v440 = vld [vmem:[%s227 + $0xd10] sm:$0xff]
        %v441 = vld [vmem:[%s227 + $0xd18] sm:$0xf]
        %v442 = vld [vmem:[%s227 + $0xd40] sm:$0xff]
        %v443 = vld [vmem:[%s227 + $0xd48] sm:$0xff]
        %v444 = vld [vmem:[%s227 + $0xd50] sm:$0xff]
        %v445 = vld [vmem:[%s227 + $0xd58] sm:$0xf]
        %v446 = vld [vmem:[%s227 + $0xd80] sm:$0xff]
        %v447 = vld [vmem:[%s227 + $0xd88] sm:$0xff]
        %v448 = vld [vmem:[%s227 + $0xd90] sm:$0xff]
        %v449 = vld [vmem:[%s227 + $0xd98] sm:$0xf]
        %v450 = vld [vmem:[%s227 + $0xdc0] sm:$0xff]
        %v451 = vld [vmem:[%s227 + $0xdc8] sm:$0xff]
        %v452 = vld [vmem:[%s227 + $0xdd0] sm:$0xff]
        %v453 = vld [vmem:[%s227 + $0xdd8] sm:$0xf]
        %v454 = vld [vmem:[%s227 + $0xe00] sm:$0xff]
        %v455 = vld [vmem:[%s227 + $0xe08] sm:$0xff]
        %v456 = vld [vmem:[%s227 + $0xe10] sm:$0xff]
        %v457 = vld [vmem:[%s227 + $0xe18] sm:$0xf]
        %v458 = vld [vmem:[%s227 + $0xe40] sm:$0xff]
        %v459 = vld [vmem:[%s227 + $0xe48] sm:$0xff]
        %v460 = vld [vmem:[%s227 + $0xe50] sm:$0xff]
        %v461 = vld [vmem:[%s227 + $0xe58] sm:$0xf]
        %v462 = vld [vmem:[%s227 + $0xe80] sm:$0xff]
        %v463 = vld [vmem:[%s227 + $0xe88] sm:$0xff]
        %v464 = vld [vmem:[%s227 + $0xe90] sm:$0xff]
        %v465 = vld [vmem:[%s227 + $0xe98] sm:$0xf]
        %v466 = vld [vmem:[%s227 + $0xec0] sm:$0xff]
        %v467 = vld [vmem:[%s227 + $0xec8] sm:$0xff]
        %v468 = vld [vmem:[%s227 + $0xed0] sm:$0xff]
        %v469 = vld [vmem:[%s227 + $0xed8] sm:$0xf]
        %v470 = vld [vmem:[%s227 + $0xf00] sm:$0xff]
        %v471 = vld [vmem:[%s227 + $0xf08] sm:$0xff]
        %v472 = vld [vmem:[%s227 + $0xf10] sm:$0xff]
        %v473 = vld [vmem:[%s227 + $0xf18] sm:$0xf]
        %v474 = vld [vmem:[%s227 + $0xf40] sm:$0xff]
        %v475 = vld [vmem:[%s227 + $0xf48] sm:$0xff]
        %v476 = vld [vmem:[%s227 + $0xf50] sm:$0xff]
        %v477 = vld [vmem:[%s227 + $0xf58] sm:$0xf]
        %v478 = vld [vmem:[%s227 + $0xf80] sm:$0xff]
        %v479 = vld [vmem:[%s227 + $0xf88] sm:$0xff]
        %v480 = vld [vmem:[%s227 + $0xf90] sm:$0xff]
        %v481 = vld [vmem:[%s227 + $0xf98] sm:$0xf]
        %v482 = vld [vmem:[%s227 + $0xfc0] sm:$0xff]
        %v483 = vld [vmem:[%s227 + $0xfc8] sm:$0xff]
        %v484 = vld [vmem:[%s227 + $0xfd0] sm:$0xff]
        %v485 = vld [vmem:[%s227 + $0xfd8] sm:$0xf]
        %v486 = vld [vmem:[%s227 + $0x1000] sm:$0xff]
        %v487 = vld [vmem:[%s227 + $0x1008] sm:$0xff]
        %v488 = vld [vmem:[%s227 + $0x1010] sm:$0xff]
        %v489 = vld [vmem:[%s227 + $0x1018] sm:$0xf]
        %v490 = vld [vmem:[%s227 + $0x1040] sm:$0xff]
        %v491 = vld [vmem:[%s227 + $0x1048] sm:$0xff]
        %v492 = vld [vmem:[%s227 + $0x1050] sm:$0xff]
        %v493 = vld [vmem:[%s227 + $0x1058] sm:$0xf]
        %v494 = vld [vmem:[%s227 + $0x1080] sm:$0xff]
        %v495 = vld [vmem:[%s227 + $0x1088] sm:$0xff]
        %v496 = vld [vmem:[%s227 + $0x1090] sm:$0xff]
        %v497 = vld [vmem:[%s227 + $0x1098] sm:$0xf]
        %v498 = vld [vmem:[%s227 + $0x10c0] sm:$0xff]
        %v499 = vld [vmem:[%s227 + $0x10c8] sm:$0xff]
        %v500 = vld [vmem:[%s227 + $0x10d0] sm:$0xff]
        %v501 = vld [vmem:[%s227 + $0x10d8] sm:$0xf]
        %v502 = vld [vmem:[%s227 + $0x1100] sm:$0xff]
        %v503 = vld [vmem:[%s227 + $0x1108] sm:$0xff]
        %v504 = vld [vmem:[%s227 + $0x1110] sm:$0xff]
        %v505 = vld [vmem:[%s227 + $0x1118] sm:$0xf]
        %v506 = vld [vmem:[%s227 + $0x1140] sm:$0xff]
        %v507 = vld [vmem:[%s227 + $0x1148] sm:$0xff]
        %v508 = vld [vmem:[%s227 + $0x1150] sm:$0xff]
        %v509 = vld [vmem:[%s227 + $0x1158] sm:$0xf]
        %v510 = vld [vmem:[%s227 + $0x1180] sm:$0xff]
        %v511 = vld [vmem:[%s227 + $0x1188] sm:$0xff]
        %v512 = vld [vmem:[%s227 + $0x1190] sm:$0xff]
        %v513 = vld [vmem:[%s227 + $0x1198] sm:$0xf]
        %v514 = vld [vmem:[%s227 + $0x11c0] sm:$0xff]
        %v515 = vld [vmem:[%s227 + $0x11c8] sm:$0xff]
        %v516 = vld [vmem:[%s227 + $0x11d0] sm:$0xff]
        %v517 = vld [vmem:[%s227 + $0x11d8] sm:$0xf]
        %v518 = vld [vmem:[%s227 + $0x1200] sm:$0xff]
        %v519 = vld [vmem:[%s227 + $0x1208] sm:$0xff]
        %v520 = vld [vmem:[%s227 + $0x1210] sm:$0xff]
        %v521 = vld [vmem:[%s227 + $0x1218] sm:$0xf]
        %v522 = vld [vmem:[%s227 + $0x1240] sm:$0xff]
        %v523 = vld [vmem:[%s227 + $0x1248] sm:$0xff]
        %v524 = vld [vmem:[%s227 + $0x1250] sm:$0xff]
        %v525 = vld [vmem:[%s227 + $0x1258] sm:$0xf]
        %v526 = vld [vmem:[%s227 + $0x1280] sm:$0xff]
        %v527 = vld [vmem:[%s227 + $0x1288] sm:$0xff]
        %v528 = vld [vmem:[%s227 + $0x1290] sm:$0xff]
        %v529 = vld [vmem:[%s227 + $0x1298] sm:$0xf]
        %v530 = vld [vmem:[%s227 + $0x12c0] sm:$0xff]
        %v531 = vld [vmem:[%s227 + $0x12c8] sm:$0xff]
        %v532 = vld [vmem:[%s227 + $0x12d0] sm:$0xff]
        %v533 = vld [vmem:[%s227 + $0x12d8] sm:$0xf]
        %v534 = vld [vmem:[%s227 + $0x1300] sm:$0xff]
        %v535 = vld [vmem:[%s227 + $0x1308] sm:$0xff]
        %v536 = vld [vmem:[%s227 + $0x1310] sm:$0xff]
        %v537 = vld [vmem:[%s227 + $0x1318] sm:$0xf]
        %v538 = vld [vmem:[%s227 + $0x1340] sm:$0xff]
        %v539 = vld [vmem:[%s227 + $0x1348] sm:$0xff]
        %v540 = vld [vmem:[%s227 + $0x1350] sm:$0xff]
        %v541 = vld [vmem:[%s227 + $0x1358] sm:$0xf]
        %v542 = vld [vmem:[%s227 + $0x1380] sm:$0xff]
        %v543 = vld [vmem:[%s227 + $0x1388] sm:$0xff]
        %v544 = vld [vmem:[%s227 + $0x1390] sm:$0xff]
        %v545 = vld [vmem:[%s227 + $0x1398] sm:$0xf]
        %v546 = vld [vmem:[%s227 + $0x13c0] sm:$0xff]
        %v547 = vld [vmem:[%s227 + $0x13c8] sm:$0xff]
        %v548 = vld [vmem:[%s227 + $0x13d0] sm:$0xff]
        %v549 = vld [vmem:[%s227 + $0x13d8] sm:$0xf]
        %v550 = vld [vmem:[%s227 + $0x1400] sm:$0xff]
        %v551 = vld [vmem:[%s227 + $0x1408] sm:$0xff]
        %v552 = vld [vmem:[%s227 + $0x1410] sm:$0xff]
        %v553 = vld [vmem:[%s227 + $0x1418] sm:$0xf]
        %v554 = vld [vmem:[%s227 + $0x1440] sm:$0xff]
        %v555 = vld [vmem:[%s227 + $0x1448] sm:$0xff]
        %v556 = vld [vmem:[%s227 + $0x1450] sm:$0xff]
        %v557 = vld [vmem:[%s227 + $0x1458] sm:$0xf]
        %v558 = vld [vmem:[%s227 + $0x1480] sm:$0xff]
        %v559 = vld [vmem:[%s227 + $0x1488] sm:$0xff]
        %v560 = vld [vmem:[%s227 + $0x1490] sm:$0xff]
        %v561 = vld [vmem:[%s227 + $0x1498] sm:$0xf]
        %v562 = vld [vmem:[%s227 + $0x14c0] sm:$0xff]
        %v563 = vld [vmem:[%s227 + $0x14c8] sm:$0xff]
        %v564 = vld [vmem:[%s227 + $0x14d0] sm:$0xff]
        %v565 = vld [vmem:[%s227 + $0x14d8] sm:$0xf]
        %v566 = vld [vmem:[%s227 + $0x1500] sm:$0xff]
        %v567 = vld [vmem:[%s227 + $0x1508] sm:$0xff]
        %v568 = vld [vmem:[%s227 + $0x1510] sm:$0xff]
        %v569 = vld [vmem:[%s227 + $0x1518] sm:$0xf]
        %v570 = vld [vmem:[%s227 + $0x1540] sm:$0xff]
        %v571 = vld [vmem:[%s227 + $0x1548] sm:$0xff]
        %v572 = vld [vmem:[%s227 + $0x1550] sm:$0xff]
        %v573 = vld [vmem:[%s227 + $0x1558] sm:$0xf]
        %v574 = vld [vmem:[%s227 + $0x1580] sm:$0xff]
        %v575 = vld [vmem:[%s227 + $0x1588] sm:$0xff]
        %v576 = vld [vmem:[%s227 + $0x1590] sm:$0xff]
        %v577 = vld [vmem:[%s227 + $0x1598] sm:$0xf]
        %v578 = vld [vmem:[%s227 + $0x15c0] sm:$0xff]
        %v579 = vld [vmem:[%s227 + $0x15c8] sm:$0xff]
        %v580 = vld [vmem:[%s227 + $0x15d0] sm:$0xff]
        %v581 = vld [vmem:[%s227 + $0x15d8] sm:$0xf]
        %v582 = vld [vmem:[%s227 + $0x1600] sm:$0xff]
        %v583 = vld [vmem:[%s227 + $0x1608] sm:$0xff]
        %v584 = vld [vmem:[%s227 + $0x1610] sm:$0xff]
        %v585 = vld [vmem:[%s227 + $0x1618] sm:$0xf]
        %v586 = vld [vmem:[%s227 + $0x1640] sm:$0xff]
        %v587 = vld [vmem:[%s227 + $0x1648] sm:$0xff]
        %v588 = vld [vmem:[%s227 + $0x1650] sm:$0xff]
        %v589 = vld [vmem:[%s227 + $0x1658] sm:$0xf]
        %v590 = vld [vmem:[%s227 + $0x1680] sm:$0xff]
        %v591 = vld [vmem:[%s227 + $0x1688] sm:$0xff]
        %v592 = vld [vmem:[%s227 + $0x1690] sm:$0xff]
        %v593 = vld [vmem:[%s227 + $0x1698] sm:$0xf]
        %v594 = vld [vmem:[%s227 + $0x16c0] sm:$0xff]
        %v595 = vld [vmem:[%s227 + $0x16c8] sm:$0xff]
        %v596 = vld [vmem:[%s227 + $0x16d0] sm:$0xff]
        %v597 = vld [vmem:[%s227 + $0x16d8] sm:$0xf]
        %v598 = vld [vmem:[%s227 + $0x1700] sm:$0xff]
        %v599 = vld [vmem:[%s227 + $0x1708] sm:$0xff]
        %v600 = vld [vmem:[%s227 + $0x1710] sm:$0xff]
        %v601 = vld [vmem:[%s227 + $0x1718] sm:$0xf]
        %v602 = vld [vmem:[%s227 + $0x1740] sm:$0xff]
        %v603 = vld [vmem:[%s227 + $0x1748] sm:$0xff]
        %v604 = vld [vmem:[%s227 + $0x1750] sm:$0xff]
        %v605 = vld [vmem:[%s227 + $0x1758] sm:$0xf]
        %v606 = vld [vmem:[%s227 + $0x1780] sm:$0xff]
        %v607 = vld [vmem:[%s227 + $0x1788] sm:$0xff]
        %v608 = vld [vmem:[%s227 + $0x1790] sm:$0xff]
        %v609 = vld [vmem:[%s227 + $0x1798] sm:$0xf]
        %v610 = vld [vmem:[%s227 + $0x17c0] sm:$0xff]
        %v611 = vld [vmem:[%s227 + $0x17c8] sm:$0xff]
        %v612 = vld [vmem:[%s227 + $0x17d0] sm:$0xff]
        %v613 = vld [vmem:[%s227 + $0x17d8] sm:$0xf]
        %v614 = vld [vmem:[%s227 + $0x1800] sm:$0xff]
        %v615 = vld [vmem:[%s227 + $0x1808] sm:$0xff]
        %v616 = vld [vmem:[%s227 + $0x1810] sm:$0xff]
        %v617 = vld [vmem:[%s227 + $0x1818] sm:$0xf]
        %v618 = vld [vmem:[%s227 + $0x1840] sm:$0xff]
        %v619 = vld [vmem:[%s227 + $0x1848] sm:$0xff]
        %v620 = vld [vmem:[%s227 + $0x1850] sm:$0xff]
        %v621 = vld [vmem:[%s227 + $0x1858] sm:$0xf]
        %v622 = vld [vmem:[%s227 + $0x1880] sm:$0xff]
        %v623 = vld [vmem:[%s227 + $0x1888] sm:$0xff]
        %v624 = vld [vmem:[%s227 + $0x1890] sm:$0xff]
        %v625 = vld [vmem:[%s227 + $0x1898] sm:$0xf]
        %v626 = vld [vmem:[%s227 + $0x18c0] sm:$0xff]
        %v627 = vld [vmem:[%s227 + $0x18c8] sm:$0xff]
        %v628 = vld [vmem:[%s227 + $0x18d0] sm:$0xff]
        %v629 = vld [vmem:[%s227 + $0x18d8] sm:$0xf]
        %v630 = vld [vmem:[%s227 + $0x1900] sm:$0xff]
        %v631 = vld [vmem:[%s227 + $0x1908] sm:$0xff]
        %v632 = vld [vmem:[%s227 + $0x1910] sm:$0xff]
        %v633 = vld [vmem:[%s227 + $0x1918] sm:$0xf]
        %v634 = vld [vmem:[%s227 + $0x1940] sm:$0xff]
        %v635 = vld [vmem:[%s227 + $0x1948] sm:$0xff]
        %v636 = vld [vmem:[%s227 + $0x1950] sm:$0xff]
        %v637 = vld [vmem:[%s227 + $0x1958] sm:$0xf]
        %v638 = vld [vmem:[%s227 + $0x1980] sm:$0xff]
        %v639 = vld [vmem:[%s227 + $0x1988] sm:$0xff]
        %v640 = vld [vmem:[%s227 + $0x1990] sm:$0xff]
        %v641 = vld [vmem:[%s227 + $0x1998] sm:$0xf]
        %v642 = vld [vmem:[%s227 + $0x19c0] sm:$0xff]
        %v643 = vld [vmem:[%s227 + $0x19c8] sm:$0xff]
        %v644 = vld [vmem:[%s227 + $0x19d0] sm:$0xff]
        %v645 = vld [vmem:[%s227 + $0x19d8] sm:$0xf]
        %v646 = vld [vmem:[%s227 + $0x1a00] sm:$0xff]
        %v647 = vld [vmem:[%s227 + $0x1a08] sm:$0xff]
        %v648 = vld [vmem:[%s227 + $0x1a10] sm:$0xff]
        %v649 = vld [vmem:[%s227 + $0x1a18] sm:$0xf]
        %v650 = vld [vmem:[%s227 + $0x1a40] sm:$0xff]
        %v651 = vld [vmem:[%s227 + $0x1a48] sm:$0xff]
        %v652 = vld [vmem:[%s227 + $0x1a50] sm:$0xff]
        %v653 = vld [vmem:[%s227 + $0x1a58] sm:$0xf]
        %v654 = vld [vmem:[%s227 + $0x1a80] sm:$0xff]
        %v655 = vld [vmem:[%s227 + $0x1a88] sm:$0xff]
        %v656 = vld [vmem:[%s227 + $0x1a90] sm:$0xff]
        %v657 = vld [vmem:[%s227 + $0x1a98] sm:$0xf]
        %v658 = vld [vmem:[%s227 + $0x1ac0] sm:$0xff]
        %v659 = vld [vmem:[%s227 + $0x1ac8] sm:$0xff]
        %v660 = vld [vmem:[%s227 + $0x1ad0] sm:$0xff]
        %v661 = vld [vmem:[%s227 + $0x1ad8] sm:$0xf]
        %v662 = vld [vmem:[%s227 + $0x1b00] sm:$0xff]
        %v663 = vld [vmem:[%s227 + $0x1b08] sm:$0xff]
        %v664 = vld [vmem:[%s227 + $0x1b10] sm:$0xff]
        %v665 = vld [vmem:[%s227 + $0x1b18] sm:$0xf]
        %v666 = vld [vmem:[%s227 + $0x1b40] sm:$0xff]
        %v667 = vld [vmem:[%s227 + $0x1b48] sm:$0xff]
        %v668 = vld [vmem:[%s227 + $0x1b50] sm:$0xff]
        %v669 = vld [vmem:[%s227 + $0x1b58] sm:$0xf]
        %v670 = vld [vmem:[%s227 + $0x1b80] sm:$0xff]
        %v671 = vld [vmem:[%s227 + $0x1b88] sm:$0xff]
        %v672 = vld [vmem:[%s227 + $0x1b90] sm:$0xff]
        %v673 = vld [vmem:[%s227 + $0x1b98] sm:$0xf]
        %v674 = vld [vmem:[%s227 + $0x1bc0] sm:$0xff]
        %v675 = vld [vmem:[%s227 + $0x1bc8] sm:$0xff]
        %v676 = vld [vmem:[%s227 + $0x1bd0] sm:$0xff]
        %v677 = vld [vmem:[%s227 + $0x1bd8] sm:$0xf]
        %v678 = vld [vmem:[%s227 + $0x1c00] sm:$0xff]
        %v679 = vld [vmem:[%s227 + $0x1c08] sm:$0xff]
        %v680 = vld [vmem:[%s227 + $0x1c10] sm:$0xff]
        %v681 = vld [vmem:[%s227 + $0x1c18] sm:$0xf]
        %v682 = vld [vmem:[%s227 + $0x1c40] sm:$0xff]
        %v683 = vld [vmem:[%s227 + $0x1c48] sm:$0xff]
        %v684 = vld [vmem:[%s227 + $0x1c50] sm:$0xff]
        %v685 = vld [vmem:[%s227 + $0x1c58] sm:$0xf]
        %v686 = vld [vmem:[%s227 + $0x1c80] sm:$0xff]
        %v687 = vld [vmem:[%s227 + $0x1c88] sm:$0xff]
        %v688 = vld [vmem:[%s227 + $0x1c90] sm:$0xff]
        %v689 = vld [vmem:[%s227 + $0x1c98] sm:$0xf]
        %v690 = vld [vmem:[%s227 + $0x1cc0] sm:$0xff]
        %v691 = vld [vmem:[%s227 + $0x1cc8] sm:$0xff]
        %v692 = vld [vmem:[%s227 + $0x1cd0] sm:$0xff]
        %v693 = vld [vmem:[%s227 + $0x1cd8] sm:$0xf]
        %v694 = vld [vmem:[%s227 + $0x1d00] sm:$0xff]
        %v695 = vld [vmem:[%s227 + $0x1d08] sm:$0xff]
        %v696 = vld [vmem:[%s227 + $0x1d10] sm:$0xff]
        %v697 = vld [vmem:[%s227 + $0x1d18] sm:$0xf]
        %v698 = vld [vmem:[%s227 + $0x1d40] sm:$0xff]
        %v699 = vld [vmem:[%s227 + $0x1d48] sm:$0xff]
        %v700 = vld [vmem:[%s227 + $0x1d50] sm:$0xff]
        %v701 = vld [vmem:[%s227 + $0x1d58] sm:$0xf]
        %v702 = vld [vmem:[%s227 + $0x1d80] sm:$0xff]
        %v703 = vld [vmem:[%s227 + $0x1d88] sm:$0xff]
        %v704 = vld [vmem:[%s227 + $0x1d90] sm:$0xff]
        %v705 = vld [vmem:[%s227 + $0x1d98] sm:$0xf]
        %v706 = vld [vmem:[%s227 + $0x1dc0] sm:$0xff]
        %v707 = vld [vmem:[%s227 + $0x1dc8] sm:$0xff]
        %v708 = vld [vmem:[%s227 + $0x1dd0] sm:$0xff]
        %v709 = vld [vmem:[%s227 + $0x1dd8] sm:$0xf]
        %v710 = vld [vmem:[%s227 + $0x1e00] sm:$0xff]
        %v711 = vld [vmem:[%s227 + $0x1e08] sm:$0xff]
        %v712 = vld [vmem:[%s227 + $0x1e10] sm:$0xff]
        %v713 = vld [vmem:[%s227 + $0x1e18] sm:$0xf]
        %v714 = vld [vmem:[%s227 + $0x1e40] sm:$0xff]
        %v715 = vld [vmem:[%s227 + $0x1e48] sm:$0xff]
        %v716 = vld [vmem:[%s227 + $0x1e50] sm:$0xff]
        %v717 = vld [vmem:[%s227 + $0x1e58] sm:$0xf]
        %v718 = vld [vmem:[%s227 + $0x1e80] sm:$0xff]
        %v719 = vld [vmem:[%s227 + $0x1e88] sm:$0xff]
        %v720 = vld [vmem:[%s227 + $0x1e90] sm:$0xff]
        %v721 = vld [vmem:[%s227 + $0x1e98] sm:$0xf]
        %v722 = vld [vmem:[%s227 + $0x1ec0] sm:$0xff]
        %v723 = vld [vmem:[%s227 + $0x1ec8] sm:$0xff]
        %v724 = vld [vmem:[%s227 + $0x1ed0] sm:$0xff]
        %v725 = vld [vmem:[%s227 + $0x1ed8] sm:$0xf]
        %v726 = vld [vmem:[%s227 + $0x1f00] sm:$0xff]
        %v727 = vld [vmem:[%s227 + $0x1f08] sm:$0xff]
        %v728 = vld [vmem:[%s227 + $0x1f10] sm:$0xff]
        %v729 = vld [vmem:[%s227 + $0x1f18] sm:$0xf]
        %v730 = vld [vmem:[%s227 + $0x1f40] sm:$0xff]
        %v731 = vld [vmem:[%s227 + $0x1f48] sm:$0xff]
        %v732 = vld [vmem:[%s227 + $0x1f50] sm:$0xff]
        %v733 = vld [vmem:[%s227 + $0x1f58] sm:$0xf]
        %v734 = vld [vmem:[%s227 + $0x1f80] sm:$0xff]
        %v735 = vld [vmem:[%s227 + $0x1f88] sm:$0xff]
        %v736 = vld [vmem:[%s227 + $0x1f90] sm:$0xff]
        %v737 = vld [vmem:[%s227 + $0x1f98] sm:$0xf]
        %v738 = vld [vmem:[%s227 + $0x1fc0] sm:$0xff]
        %v739 = vld [vmem:[%s227 + $0x1fc8] sm:$0xff]
        %v740 = vld [vmem:[%s227 + $0x1fd0] sm:$0xff]
        %v741 = vld [vmem:[%s227 + $0x1fd8] sm:$0xf]
        %vm742 = vcmask 457728
        %v743 = vsel %vm742, %v230, 0.0
        %v744 = vsel %vm742, %v231, 0.0
        %v745 = vadd.f32 %v743, %v744
        %v746 = vsel %vm742, %v232, 0.0
        %v747 = vadd.f32 %v745, %v746
        %vm748 = vcmask 453632
        %v749 = vsel %vm748, %v233, 0.0
        %v750 = vadd.f32 %v747, %v749
        %v751 = vrot.slane %v750, 4
        %v752 = vadd.f32 %v750, %v751
        %v753 = vrot.slane %v752, 2
        %v754 = vadd.f32 %v752, %v753
        %v755 = vrot.slane %v754, 1
        %v756 = vadd.f32 %v754, %v755
        %v757 = vsel %vm742, %v234, 0.0
        %v758 = vsel %vm742, %v235, 0.0
        %v759 = vadd.f32 %v757, %v758
        %v760 = vsel %vm742, %v236, 0.0
        %v761 = vadd.f32 %v759, %v760
        %v762 = vsel %vm748, %v237, 0.0
        %v763 = vadd.f32 %v761, %v762
        %v764 = vrot.slane %v763, 4
        %v765 = vadd.f32 %v763, %v764
        %v766 = vrot.slane %v765, 2
        %v767 = vadd.f32 %v765, %v766
        %v768 = vrot.slane %v767, 1
        %v769 = vadd.f32 %v767, %v768
        %v770 = vsel %vm742, %v238, 0.0
        %v771 = vsel %vm742, %v239, 0.0
        %v772 = vadd.f32 %v770, %v771
        %v773 = vsel %vm742, %v240, 0.0
        %v774 = vadd.f32 %v772, %v773
        %v775 = vsel %vm748, %v241, 0.0
        %v776 = vadd.f32 %v774, %v775
        %v777 = vrot.slane %v776, 4
        %v778 = vadd.f32 %v776, %v777
        %v779 = vrot.slane %v778, 2
        %v780 = vadd.f32 %v778, %v779
        %v781 = vrot.slane %v780, 1
        %v782 = vadd.f32 %v780, %v781
        %v783 = vsel %vm742, %v242, 0.0
        %v784 = vsel %vm742, %v243, 0.0
        %v785 = vadd.f32 %v783, %v784
        %v786 = vsel %vm742, %v244, 0.0
        %v787 = vadd.f32 %v785, %v786
        %v788 = vsel %vm748, %v245, 0.0
        %v789 = vadd.f32 %v787, %v788
        %v790 = vrot.slane %v789, 4
        %v791 = vadd.f32 %v789, %v790
        %v792 = vrot.slane %v791, 2
        %v793 = vadd.f32 %v791, %v792
        %v794 = vrot.slane %v793, 1
        %v795 = vadd.f32 %v793, %v794
        %v796 = vsel %vm742, %v246, 0.0
        %v797 = vsel %vm742, %v247, 0.0
        %v798 = vadd.f32 %v796, %v797
        %v799 = vsel %vm742, %v248, 0.0
        %v800 = vadd.f32 %v798, %v799
        %v801 = vsel %vm748, %v249, 0.0
        %v802 = vadd.f32 %v800, %v801
        %v803 = vrot.slane %v802, 4
        %v804 = vadd.f32 %v802, %v803
        %v805 = vrot.slane %v804, 2
        %v806 = vadd.f32 %v804, %v805
        %v807 = vrot.slane %v806, 1
        %v808 = vadd.f32 %v806, %v807
        %v809 = vsel %vm742, %v250, 0.0
        %v810 = vsel %vm742, %v251, 0.0
        %v811 = vadd.f32 %v809, %v810
        %v812 = vsel %vm742, %v252, 0.0
        %v813 = vadd.f32 %v811, %v812
        %v814 = vsel %vm748, %v253, 0.0
        %v815 = vadd.f32 %v813, %v814
        %v816 = vrot.slane %v815, 4
        %v817 = vadd.f32 %v815, %v816
        %v818 = vrot.slane %v817, 2
        %v819 = vadd.f32 %v817, %v818
        %v820 = vrot.slane %v819, 1
        %v821 = vadd.f32 %v819, %v820
        %v822 = vsel %vm742, %v254, 0.0
        %v823 = vsel %vm742, %v255, 0.0
        %v824 = vadd.f32 %v822, %v823
        %v825 = vsel %vm742, %v256, 0.0
        %v826 = vadd.f32 %v824, %v825
        %v827 = vsel %vm748, %v257, 0.0
        %v828 = vadd.f32 %v826, %v827
        %v829 = vrot.slane %v828, 4
        %v830 = vadd.f32 %v828, %v829
        %v831 = vrot.slane %v830, 2
        %v832 = vadd.f32 %v830, %v831
        %v833 = vrot.slane %v832, 1
        %v834 = vadd.f32 %v832, %v833
        %v835 = vsel %vm742, %v258, 0.0
        %v836 = vsel %vm742, %v259, 0.0
        %v837 = vadd.f32 %v835, %v836
        %v838 = vsel %vm742, %v260, 0.0
        %v839 = vadd.f32 %v837, %v838
        %v840 = vsel %vm748, %v261, 0.0
        %v841 = vadd.f32 %v839, %v840
        %v842 = vrot.slane %v841, 4
        %v843 = vadd.f32 %v841, %v842
        %v844 = vrot.slane %v843, 2
        %v845 = vadd.f32 %v843, %v844
        %v846 = vrot.slane %v845, 1
        %v847 = vadd.f32 %v845, %v846
        %v848 = vsel %vm742, %v262, 0.0
        %v849 = vsel %vm742, %v263, 0.0
        %v850 = vadd.f32 %v848, %v849
        %v851 = vsel %vm742, %v264, 0.0
        %v852 = vadd.f32 %v850, %v851
        %v853 = vsel %vm748, %v265, 0.0
        %v854 = vadd.f32 %v852, %v853
        %v855 = vrot.slane %v854, 4
        %v856 = vadd.f32 %v854, %v855
        %v857 = vrot.slane %v856, 2
        %v858 = vadd.f32 %v856, %v857
        %v859 = vrot.slane %v858, 1
        %v860 = vadd.f32 %v858, %v859
        %v861 = vsel %vm742, %v266, 0.0
        %v862 = vsel %vm742, %v267, 0.0
        %v863 = vadd.f32 %v861, %v862
        %v864 = vsel %vm742, %v268, 0.0
        %v865 = vadd.f32 %v863, %v864
        %v866 = vsel %vm748, %v269, 0.0
        %v867 = vadd.f32 %v865, %v866
        %v868 = vrot.slane %v867, 4
        %v869 = vadd.f32 %v867, %v868
        %v870 = vrot.slane %v869, 2
        %v871 = vadd.f32 %v869, %v870
        %v872 = vrot.slane %v871, 1
        %v873 = vadd.f32 %v871, %v872
        %v874 = vsel %vm742, %v270, 0.0
        %v875 = vsel %vm742, %v271, 0.0
        %v876 = vadd.f32 %v874, %v875
        %v877 = vsel %vm742, %v272, 0.0
        %v878 = vadd.f32 %v876, %v877
        %v879 = vsel %vm748, %v273, 0.0
        %v880 = vadd.f32 %v878, %v879
        %v881 = vrot.slane %v880, 4
        %v882 = vadd.f32 %v880, %v881
        %v883 = vrot.slane %v882, 2
        %v884 = vadd.f32 %v882, %v883
        %v885 = vrot.slane %v884, 1
        %v886 = vadd.f32 %v884, %v885
        %v887 = vsel %vm742, %v274, 0.0
        %v888 = vsel %vm742, %v275, 0.0
        %v889 = vadd.f32 %v887, %v888
        %v890 = vsel %vm742, %v276, 0.0
        %v891 = vadd.f32 %v889, %v890
        %v892 = vsel %vm748, %v277, 0.0
        %v893 = vadd.f32 %v891, %v892
        %v894 = vrot.slane %v893, 4
        %v895 = vadd.f32 %v893, %v894
        %v896 = vrot.slane %v895, 2
        %v897 = vadd.f32 %v895, %v896
        %v898 = vrot.slane %v897, 1
        %v899 = vadd.f32 %v897, %v898
        %v900 = vsel %vm742, %v278, 0.0
        %v901 = vsel %vm742, %v279, 0.0
        %v902 = vadd.f32 %v900, %v901
        %v903 = vsel %vm742, %v280, 0.0
        %v904 = vadd.f32 %v902, %v903
        %v905 = vsel %vm748, %v281, 0.0
        %v906 = vadd.f32 %v904, %v905
        %v907 = vrot.slane %v906, 4
        %v908 = vadd.f32 %v906, %v907
        %v909 = vrot.slane %v908, 2
        %v910 = vadd.f32 %v908, %v909
        %v911 = vrot.slane %v910, 1
        %v912 = vadd.f32 %v910, %v911
        %v913 = vsel %vm742, %v282, 0.0
        %v914 = vsel %vm742, %v283, 0.0
        %v915 = vadd.f32 %v913, %v914
        %v916 = vsel %vm742, %v284, 0.0
        %v917 = vadd.f32 %v915, %v916
        %v918 = vsel %vm748, %v285, 0.0
        %v919 = vadd.f32 %v917, %v918
        %v920 = vrot.slane %v919, 4
        %v921 = vadd.f32 %v919, %v920
        %v922 = vrot.slane %v921, 2
        %v923 = vadd.f32 %v921, %v922
        %v924 = vrot.slane %v923, 1
        %v925 = vadd.f32 %v923, %v924
        %v926 = vsel %vm742, %v286, 0.0
        %v927 = vsel %vm742, %v287, 0.0
        %v928 = vadd.f32 %v926, %v927
        %v929 = vsel %vm742, %v288, 0.0
        %v930 = vadd.f32 %v928, %v929
        %v931 = vsel %vm748, %v289, 0.0
        %v932 = vadd.f32 %v930, %v931
        %v933 = vrot.slane %v932, 4
        %v934 = vadd.f32 %v932, %v933
        %v935 = vrot.slane %v934, 2
        %v936 = vadd.f32 %v934, %v935
        %v937 = vrot.slane %v936, 1
        %v938 = vadd.f32 %v936, %v937
        %v939 = vsel %vm742, %v290, 0.0
        %v940 = vsel %vm742, %v291, 0.0
        %v941 = vadd.f32 %v939, %v940
        %v942 = vsel %vm742, %v292, 0.0
        %v943 = vadd.f32 %v941, %v942
        %v944 = vsel %vm748, %v293, 0.0
        %v945 = vadd.f32 %v943, %v944
        %v946 = vrot.slane %v945, 4
        %v947 = vadd.f32 %v945, %v946
        %v948 = vrot.slane %v947, 2
        %v949 = vadd.f32 %v947, %v948
        %v950 = vrot.slane %v949, 1
        %v951 = vadd.f32 %v949, %v950
        %v952 = vsel %vm742, %v294, 0.0
        %v953 = vsel %vm742, %v295, 0.0
        %v954 = vadd.f32 %v952, %v953
        %v955 = vsel %vm742, %v296, 0.0
        %v956 = vadd.f32 %v954, %v955
        %v957 = vsel %vm748, %v297, 0.0
        %v958 = vadd.f32 %v956, %v957
        %v959 = vrot.slane %v958, 4
        %v960 = vadd.f32 %v958, %v959
        %v961 = vrot.slane %v960, 2
        %v962 = vadd.f32 %v960, %v961
        %v963 = vrot.slane %v962, 1
        %v964 = vadd.f32 %v962, %v963
        %v965 = vsel %vm742, %v298, 0.0
        %v966 = vsel %vm742, %v299, 0.0
        %v967 = vadd.f32 %v965, %v966
        %v968 = vsel %vm742, %v300, 0.0
        %v969 = vadd.f32 %v967, %v968
        %v970 = vsel %vm748, %v301, 0.0
        %v971 = vadd.f32 %v969, %v970
        %v972 = vrot.slane %v971, 4
        %v973 = vadd.f32 %v971, %v972
        %v974 = vrot.slane %v973, 2
        %v975 = vadd.f32 %v973, %v974
        %v976 = vrot.slane %v975, 1
        %v977 = vadd.f32 %v975, %v976
        %v978 = vsel %vm742, %v302, 0.0
        %v979 = vsel %vm742, %v303, 0.0
        %v980 = vadd.f32 %v978, %v979
        %v981 = vsel %vm742, %v304, 0.0
        %v982 = vadd.f32 %v980, %v981
        %v983 = vsel %vm748, %v305, 0.0
        %v984 = vadd.f32 %v982, %v983
        %v985 = vrot.slane %v984, 4
        %v986 = vadd.f32 %v984, %v985
        %v987 = vrot.slane %v986, 2
        %v988 = vadd.f32 %v986, %v987
        %v989 = vrot.slane %v988, 1
        %v990 = vadd.f32 %v988, %v989
        %v991 = vsel %vm742, %v306, 0.0
        %v992 = vsel %vm742, %v307, 0.0
        %v993 = vadd.f32 %v991, %v992
        %v994 = vsel %vm742, %v308, 0.0
        %v995 = vadd.f32 %v993, %v994
        %v996 = vsel %vm748, %v309, 0.0
        %v997 = vadd.f32 %v995, %v996
        %v998 = vrot.slane %v997, 4
        %v999 = vadd.f32 %v997, %v998
        %v1000 = vrot.slane %v999, 2
        %v1001 = vadd.f32 %v999, %v1000
        %v1002 = vrot.slane %v1001, 1
        %v1003 = vadd.f32 %v1001, %v1002
        %v1004 = vsel %vm742, %v310, 0.0
        %v1005 = vsel %vm742, %v311, 0.0
        %v1006 = vadd.f32 %v1004, %v1005
        %v1007 = vsel %vm742, %v312, 0.0
        %v1008 = vadd.f32 %v1006, %v1007
        %v1009 = vsel %vm748, %v313, 0.0
        %v1010 = vadd.f32 %v1008, %v1009
        %v1011 = vrot.slane %v1010, 4
        %v1012 = vadd.f32 %v1010, %v1011
        %v1013 = vrot.slane %v1012, 2
        %v1014 = vadd.f32 %v1012, %v1013
        %v1015 = vrot.slane %v1014, 1
        %v1016 = vadd.f32 %v1014, %v1015
        %v1017 = vsel %vm742, %v314, 0.0
        %v1018 = vsel %vm742, %v315, 0.0
        %v1019 = vadd.f32 %v1017, %v1018
        %v1020 = vsel %vm742, %v316, 0.0
        %v1021 = vadd.f32 %v1019, %v1020
        %v1022 = vsel %vm748, %v317, 0.0
        %v1023 = vadd.f32 %v1021, %v1022
        %v1024 = vrot.slane %v1023, 4
        %v1025 = vadd.f32 %v1023, %v1024
        %v1026 = vrot.slane %v1025, 2
        %v1027 = vadd.f32 %v1025, %v1026
        %v1028 = vrot.slane %v1027, 1
        %v1029 = vadd.f32 %v1027, %v1028
        %v1030 = vsel %vm742, %v318, 0.0
        %v1031 = vsel %vm742, %v319, 0.0
        %v1032 = vadd.f32 %v1030, %v1031
        %v1033 = vsel %vm742, %v320, 0.0
        %v1034 = vadd.f32 %v1032, %v1033
        %v1035 = vsel %vm748, %v321, 0.0
        %v1036 = vadd.f32 %v1034, %v1035
        %v1037 = vrot.slane %v1036, 4
        %v1038 = vadd.f32 %v1036, %v1037
        %v1039 = vrot.slane %v1038, 2
        %v1040 = vadd.f32 %v1038, %v1039
        %v1041 = vrot.slane %v1040, 1
        %v1042 = vadd.f32 %v1040, %v1041
        %v1043 = vsel %vm742, %v322, 0.0
        %v1044 = vsel %vm742, %v323, 0.0
        %v1045 = vadd.f32 %v1043, %v1044
        %v1046 = vsel %vm742, %v324, 0.0
        %v1047 = vadd.f32 %v1045, %v1046
        %v1048 = vsel %vm748, %v325, 0.0
        %v1049 = vadd.f32 %v1047, %v1048
        %v1050 = vrot.slane %v1049, 4
        %v1051 = vadd.f32 %v1049, %v1050
        %v1052 = vrot.slane %v1051, 2
        %v1053 = vadd.f32 %v1051, %v1052
        %v1054 = vrot.slane %v1053, 1
        %v1055 = vadd.f32 %v1053, %v1054
        %v1056 = vsel %vm742, %v326, 0.0
        %v1057 = vsel %vm742, %v327, 0.0
        %v1058 = vadd.f32 %v1056, %v1057
        %v1059 = vsel %vm742, %v328, 0.0
        %v1060 = vadd.f32 %v1058, %v1059
        %v1061 = vsel %vm748, %v329, 0.0
        %v1062 = vadd.f32 %v1060, %v1061
        %v1063 = vrot.slane %v1062, 4
        %v1064 = vadd.f32 %v1062, %v1063
        %v1065 = vrot.slane %v1064, 2
        %v1066 = vadd.f32 %v1064, %v1065
        %v1067 = vrot.slane %v1066, 1
        %v1068 = vadd.f32 %v1066, %v1067
        %v1069 = vsel %vm742, %v330, 0.0
        %v1070 = vsel %vm742, %v331, 0.0
        %v1071 = vadd.f32 %v1069, %v1070
        %v1072 = vsel %vm742, %v332, 0.0
        %v1073 = vadd.f32 %v1071, %v1072
        %v1074 = vsel %vm748, %v333, 0.0
        %v1075 = vadd.f32 %v1073, %v1074
        %v1076 = vrot.slane %v1075, 4
        %v1077 = vadd.f32 %v1075, %v1076
        %v1078 = vrot.slane %v1077, 2
        %v1079 = vadd.f32 %v1077, %v1078
        %v1080 = vrot.slane %v1079, 1
        %v1081 = vadd.f32 %v1079, %v1080
        %v1082 = vsel %vm742, %v334, 0.0
        %v1083 = vsel %vm742, %v335, 0.0
        %v1084 = vadd.f32 %v1082, %v1083
        %v1085 = vsel %vm742, %v336, 0.0
        %v1086 = vadd.f32 %v1084, %v1085
        %v1087 = vsel %vm748, %v337, 0.0
        %v1088 = vadd.f32 %v1086, %v1087
        %v1089 = vrot.slane %v1088, 4
        %v1090 = vadd.f32 %v1088, %v1089
        %v1091 = vrot.slane %v1090, 2
        %v1092 = vadd.f32 %v1090, %v1091
        %v1093 = vrot.slane %v1092, 1
        %v1094 = vadd.f32 %v1092, %v1093
        %v1095 = vsel %vm742, %v338, 0.0
        %v1096 = vsel %vm742, %v339, 0.0
        %v1097 = vadd.f32 %v1095, %v1096
        %v1098 = vsel %vm742, %v340, 0.0
        %v1099 = vadd.f32 %v1097, %v1098
        %v1100 = vsel %vm748, %v341, 0.0
        %v1101 = vadd.f32 %v1099, %v1100
        %v1102 = vrot.slane %v1101, 4
        %v1103 = vadd.f32 %v1101, %v1102
        %v1104 = vrot.slane %v1103, 2
        %v1105 = vadd.f32 %v1103, %v1104
        %v1106 = vrot.slane %v1105, 1
        %v1107 = vadd.f32 %v1105, %v1106
        %v1108 = vsel %vm742, %v342, 0.0
        %v1109 = vsel %vm742, %v343, 0.0
        %v1110 = vadd.f32 %v1108, %v1109
        %v1111 = vsel %vm742, %v344, 0.0
        %v1112 = vadd.f32 %v1110, %v1111
        %v1113 = vsel %vm748, %v345, 0.0
        %v1114 = vadd.f32 %v1112, %v1113
        %v1115 = vrot.slane %v1114, 4
        %v1116 = vadd.f32 %v1114, %v1115
        %v1117 = vrot.slane %v1116, 2
        %v1118 = vadd.f32 %v1116, %v1117
        %v1119 = vrot.slane %v1118, 1
        %v1120 = vadd.f32 %v1118, %v1119
        %v1121 = vsel %vm742, %v346, 0.0
        %v1122 = vsel %vm742, %v347, 0.0
        %v1123 = vadd.f32 %v1121, %v1122
        %v1124 = vsel %vm742, %v348, 0.0
        %v1125 = vadd.f32 %v1123, %v1124
        %v1126 = vsel %vm748, %v349, 0.0
        %v1127 = vadd.f32 %v1125, %v1126
        %v1128 = vrot.slane %v1127, 4
        %v1129 = vadd.f32 %v1127, %v1128
        %v1130 = vrot.slane %v1129, 2
        %v1131 = vadd.f32 %v1129, %v1130
        %v1132 = vrot.slane %v1131, 1
        %v1133 = vadd.f32 %v1131, %v1132
        %v1134 = vsel %vm742, %v350, 0.0
        %v1135 = vsel %vm742, %v351, 0.0
        %v1136 = vadd.f32 %v1134, %v1135
        %v1137 = vsel %vm742, %v352, 0.0
        %v1138 = vadd.f32 %v1136, %v1137
        %v1139 = vsel %vm748, %v353, 0.0
        %v1140 = vadd.f32 %v1138, %v1139
        %v1141 = vrot.slane %v1140, 4
        %v1142 = vadd.f32 %v1140, %v1141
        %v1143 = vrot.slane %v1142, 2
        %v1144 = vadd.f32 %v1142, %v1143
        %v1145 = vrot.slane %v1144, 1
        %v1146 = vadd.f32 %v1144, %v1145
        %v1147 = vsel %vm742, %v354, 0.0
        %v1148 = vsel %vm742, %v355, 0.0
        %v1149 = vadd.f32 %v1147, %v1148
        %v1150 = vsel %vm742, %v356, 0.0
        %v1151 = vadd.f32 %v1149, %v1150
        %v1152 = vsel %vm748, %v357, 0.0
        %v1153 = vadd.f32 %v1151, %v1152
        %v1154 = vrot.slane %v1153, 4
        %v1155 = vadd.f32 %v1153, %v1154
        %v1156 = vrot.slane %v1155, 2
        %v1157 = vadd.f32 %v1155, %v1156
        %v1158 = vrot.slane %v1157, 1
        %v1159 = vadd.f32 %v1157, %v1158
        %v1160 = vsel %vm742, %v358, 0.0
        %v1161 = vsel %vm742, %v359, 0.0
        %v1162 = vadd.f32 %v1160, %v1161
        %v1163 = vsel %vm742, %v360, 0.0
        %v1164 = vadd.f32 %v1162, %v1163
        %v1165 = vsel %vm748, %v361, 0.0
        %v1166 = vadd.f32 %v1164, %v1165
        %v1167 = vrot.slane %v1166, 4
        %v1168 = vadd.f32 %v1166, %v1167
        %v1169 = vrot.slane %v1168, 2
        %v1170 = vadd.f32 %v1168, %v1169
        %v1171 = vrot.slane %v1170, 1
        %v1172 = vadd.f32 %v1170, %v1171
        %v1173 = vsel %vm742, %v362, 0.0
        %v1174 = vsel %vm742, %v363, 0.0
        %v1175 = vadd.f32 %v1173, %v1174
        %v1176 = vsel %vm742, %v364, 0.0
        %v1177 = vadd.f32 %v1175, %v1176
        %v1178 = vsel %vm748, %v365, 0.0
        %v1179 = vadd.f32 %v1177, %v1178
        %v1180 = vrot.slane %v1179, 4
        %v1181 = vadd.f32 %v1179, %v1180
        %v1182 = vrot.slane %v1181, 2
        %v1183 = vadd.f32 %v1181, %v1182
        %v1184 = vrot.slane %v1183, 1
        %v1185 = vadd.f32 %v1183, %v1184
        %v1186 = vsel %vm742, %v366, 0.0
        %v1187 = vsel %vm742, %v367, 0.0
        %v1188 = vadd.f32 %v1186, %v1187
        %v1189 = vsel %vm742, %v368, 0.0
        %v1190 = vadd.f32 %v1188, %v1189
        %v1191 = vsel %vm748, %v369, 0.0
        %v1192 = vadd.f32 %v1190, %v1191
        %v1193 = vrot.slane %v1192, 4
        %v1194 = vadd.f32 %v1192, %v1193
        %v1195 = vrot.slane %v1194, 2
        %v1196 = vadd.f32 %v1194, %v1195
        %v1197 = vrot.slane %v1196, 1
        %v1198 = vadd.f32 %v1196, %v1197
        %v1199 = vsel %vm742, %v370, 0.0
        %v1200 = vsel %vm742, %v371, 0.0
        %v1201 = vadd.f32 %v1199, %v1200
        %v1202 = vsel %vm742, %v372, 0.0
        %v1203 = vadd.f32 %v1201, %v1202
        %v1204 = vsel %vm748, %v373, 0.0
        %v1205 = vadd.f32 %v1203, %v1204
        %v1206 = vrot.slane %v1205, 4
        %v1207 = vadd.f32 %v1205, %v1206
        %v1208 = vrot.slane %v1207, 2
        %v1209 = vadd.f32 %v1207, %v1208
        %v1210 = vrot.slane %v1209, 1
        %v1211 = vadd.f32 %v1209, %v1210
        %v1212 = vsel %vm742, %v374, 0.0
        %v1213 = vsel %vm742, %v375, 0.0
        %v1214 = vadd.f32 %v1212, %v1213
        %v1215 = vsel %vm742, %v376, 0.0
        %v1216 = vadd.f32 %v1214, %v1215
        %v1217 = vsel %vm748, %v377, 0.0
        %v1218 = vadd.f32 %v1216, %v1217
        %v1219 = vrot.slane %v1218, 4
        %v1220 = vadd.f32 %v1218, %v1219
        %v1221 = vrot.slane %v1220, 2
        %v1222 = vadd.f32 %v1220, %v1221
        %v1223 = vrot.slane %v1222, 1
        %v1224 = vadd.f32 %v1222, %v1223
        %v1225 = vsel %vm742, %v378, 0.0
        %v1226 = vsel %vm742, %v379, 0.0
        %v1227 = vadd.f32 %v1225, %v1226
        %v1228 = vsel %vm742, %v380, 0.0
        %v1229 = vadd.f32 %v1227, %v1228
        %v1230 = vsel %vm748, %v381, 0.0
        %v1231 = vadd.f32 %v1229, %v1230
        %v1232 = vrot.slane %v1231, 4
        %v1233 = vadd.f32 %v1231, %v1232
        %v1234 = vrot.slane %v1233, 2
        %v1235 = vadd.f32 %v1233, %v1234
        %v1236 = vrot.slane %v1235, 1
        %v1237 = vadd.f32 %v1235, %v1236
        %v1238 = vsel %vm742, %v382, 0.0
        %v1239 = vsel %vm742, %v383, 0.0
        %v1240 = vadd.f32 %v1238, %v1239
        %v1241 = vsel %vm742, %v384, 0.0
        %v1242 = vadd.f32 %v1240, %v1241
        %v1243 = vsel %vm748, %v385, 0.0
        %v1244 = vadd.f32 %v1242, %v1243
        %v1245 = vrot.slane %v1244, 4
        %v1246 = vadd.f32 %v1244, %v1245
        %v1247 = vrot.slane %v1246, 2
        %v1248 = vadd.f32 %v1246, %v1247
        %v1249 = vrot.slane %v1248, 1
        %v1250 = vadd.f32 %v1248, %v1249
        %v1251 = vsel %vm742, %v386, 0.0
        %v1252 = vsel %vm742, %v387, 0.0
        %v1253 = vadd.f32 %v1251, %v1252
        %v1254 = vsel %vm742, %v388, 0.0
        %v1255 = vadd.f32 %v1253, %v1254
        %v1256 = vsel %vm748, %v389, 0.0
        %v1257 = vadd.f32 %v1255, %v1256
        %v1258 = vrot.slane %v1257, 4
        %v1259 = vadd.f32 %v1257, %v1258
        %v1260 = vrot.slane %v1259, 2
        %v1261 = vadd.f32 %v1259, %v1260
        %v1262 = vrot.slane %v1261, 1
        %v1263 = vadd.f32 %v1261, %v1262
        %v1264 = vsel %vm742, %v390, 0.0
        %v1265 = vsel %vm742, %v391, 0.0
        %v1266 = vadd.f32 %v1264, %v1265
        %v1267 = vsel %vm742, %v392, 0.0
        %v1268 = vadd.f32 %v1266, %v1267
        %v1269 = vsel %vm748, %v393, 0.0
        %v1270 = vadd.f32 %v1268, %v1269
        %v1271 = vrot.slane %v1270, 4
        %v1272 = vadd.f32 %v1270, %v1271
        %v1273 = vrot.slane %v1272, 2
        %v1274 = vadd.f32 %v1272, %v1273
        %v1275 = vrot.slane %v1274, 1
        %v1276 = vadd.f32 %v1274, %v1275
        %v1277 = vsel %vm742, %v394, 0.0
        %v1278 = vsel %vm742, %v395, 0.0
        %v1279 = vadd.f32 %v1277, %v1278
        %v1280 = vsel %vm742, %v396, 0.0
        %v1281 = vadd.f32 %v1279, %v1280
        %v1282 = vsel %vm748, %v397, 0.0
        %v1283 = vadd.f32 %v1281, %v1282
        %v1284 = vrot.slane %v1283, 4
        %v1285 = vadd.f32 %v1283, %v1284
        %v1286 = vrot.slane %v1285, 2
        %v1287 = vadd.f32 %v1285, %v1286
        %v1288 = vrot.slane %v1287, 1
        %v1289 = vadd.f32 %v1287, %v1288
        %v1290 = vsel %vm742, %v398, 0.0
        %v1291 = vsel %vm742, %v399, 0.0
        %v1292 = vadd.f32 %v1290, %v1291
        %v1293 = vsel %vm742, %v400, 0.0
        %v1294 = vadd.f32 %v1292, %v1293
        %v1295 = vsel %vm748, %v401, 0.0
        %v1296 = vadd.f32 %v1294, %v1295
        %v1297 = vrot.slane %v1296, 4
        %v1298 = vadd.f32 %v1296, %v1297
        %v1299 = vrot.slane %v1298, 2
        %v1300 = vadd.f32 %v1298, %v1299
        %v1301 = vrot.slane %v1300, 1
        %v1302 = vadd.f32 %v1300, %v1301
        %v1303 = vsel %vm742, %v402, 0.0
        %v1304 = vsel %vm742, %v403, 0.0
        %v1305 = vadd.f32 %v1303, %v1304
        %v1306 = vsel %vm742, %v404, 0.0
        %v1307 = vadd.f32 %v1305, %v1306
        %v1308 = vsel %vm748, %v405, 0.0
        %v1309 = vadd.f32 %v1307, %v1308
        %v1310 = vrot.slane %v1309, 4
        %v1311 = vadd.f32 %v1309, %v1310
        %v1312 = vrot.slane %v1311, 2
        %v1313 = vadd.f32 %v1311, %v1312
        %v1314 = vrot.slane %v1313, 1
        %v1315 = vadd.f32 %v1313, %v1314
        %v1316 = vsel %vm742, %v406, 0.0
        %v1317 = vsel %vm742, %v407, 0.0
        %v1318 = vadd.f32 %v1316, %v1317
        %v1319 = vsel %vm742, %v408, 0.0
        %v1320 = vadd.f32 %v1318, %v1319
        %v1321 = vsel %vm748, %v409, 0.0
        %v1322 = vadd.f32 %v1320, %v1321
        %v1323 = vrot.slane %v1322, 4
        %v1324 = vadd.f32 %v1322, %v1323
        %v1325 = vrot.slane %v1324, 2
        %v1326 = vadd.f32 %v1324, %v1325
        %v1327 = vrot.slane %v1326, 1
        %v1328 = vadd.f32 %v1326, %v1327
        %v1329 = vsel %vm742, %v410, 0.0
        %v1330 = vsel %vm742, %v411, 0.0
        %v1331 = vadd.f32 %v1329, %v1330
        %v1332 = vsel %vm742, %v412, 0.0
        %v1333 = vadd.f32 %v1331, %v1332
        %v1334 = vsel %vm748, %v413, 0.0
        %v1335 = vadd.f32 %v1333, %v1334
        %v1336 = vrot.slane %v1335, 4
        %v1337 = vadd.f32 %v1335, %v1336
        %v1338 = vrot.slane %v1337, 2
        %v1339 = vadd.f32 %v1337, %v1338
        %v1340 = vrot.slane %v1339, 1
        %v1341 = vadd.f32 %v1339, %v1340
        %v1342 = vsel %vm742, %v414, 0.0
        %v1343 = vsel %vm742, %v415, 0.0
        %v1344 = vadd.f32 %v1342, %v1343
        %v1345 = vsel %vm742, %v416, 0.0
        %v1346 = vadd.f32 %v1344, %v1345
        %v1347 = vsel %vm748, %v417, 0.0
        %v1348 = vadd.f32 %v1346, %v1347
        %v1349 = vrot.slane %v1348, 4
        %v1350 = vadd.f32 %v1348, %v1349
        %v1351 = vrot.slane %v1350, 2
        %v1352 = vadd.f32 %v1350, %v1351
        %v1353 = vrot.slane %v1352, 1
        %v1354 = vadd.f32 %v1352, %v1353
        %v1355 = vsel %vm742, %v418, 0.0
        %v1356 = vsel %vm742, %v419, 0.0
        %v1357 = vadd.f32 %v1355, %v1356
        %v1358 = vsel %vm742, %v420, 0.0
        %v1359 = vadd.f32 %v1357, %v1358
        %v1360 = vsel %vm748, %v421, 0.0
        %v1361 = vadd.f32 %v1359, %v1360
        %v1362 = vrot.slane %v1361, 4
        %v1363 = vadd.f32 %v1361, %v1362
        %v1364 = vrot.slane %v1363, 2
        %v1365 = vadd.f32 %v1363, %v1364
        %v1366 = vrot.slane %v1365, 1
        %v1367 = vadd.f32 %v1365, %v1366
        %v1368 = vsel %vm742, %v422, 0.0
        %v1369 = vsel %vm742, %v423, 0.0
        %v1370 = vadd.f32 %v1368, %v1369
        %v1371 = vsel %vm742, %v424, 0.0
        %v1372 = vadd.f32 %v1370, %v1371
        %v1373 = vsel %vm748, %v425, 0.0
        %v1374 = vadd.f32 %v1372, %v1373
        %v1375 = vrot.slane %v1374, 4
        %v1376 = vadd.f32 %v1374, %v1375
        %v1377 = vrot.slane %v1376, 2
        %v1378 = vadd.f32 %v1376, %v1377
        %v1379 = vrot.slane %v1378, 1
        %v1380 = vadd.f32 %v1378, %v1379
        %v1381 = vsel %vm742, %v426, 0.0
        %v1382 = vsel %vm742, %v427, 0.0
        %v1383 = vadd.f32 %v1381, %v1382
        %v1384 = vsel %vm742, %v428, 0.0
        %v1385 = vadd.f32 %v1383, %v1384
        %v1386 = vsel %vm748, %v429, 0.0
        %v1387 = vadd.f32 %v1385, %v1386
        %v1388 = vrot.slane %v1387, 4
        %v1389 = vadd.f32 %v1387, %v1388
        %v1390 = vrot.slane %v1389, 2
        %v1391 = vadd.f32 %v1389, %v1390
        %v1392 = vrot.slane %v1391, 1
        %v1393 = vadd.f32 %v1391, %v1392
        %v1394 = vsel %vm742, %v430, 0.0
        %v1395 = vsel %vm742, %v431, 0.0
        %v1396 = vadd.f32 %v1394, %v1395
        %v1397 = vsel %vm742, %v432, 0.0
        %v1398 = vadd.f32 %v1396, %v1397
        %v1399 = vsel %vm748, %v433, 0.0
        %v1400 = vadd.f32 %v1398, %v1399
        %v1401 = vrot.slane %v1400, 4
        %v1402 = vadd.f32 %v1400, %v1401
        %v1403 = vrot.slane %v1402, 2
        %v1404 = vadd.f32 %v1402, %v1403
        %v1405 = vrot.slane %v1404, 1
        %v1406 = vadd.f32 %v1404, %v1405
        %v1407 = vsel %vm742, %v434, 0.0
        %v1408 = vsel %vm742, %v435, 0.0
        %v1409 = vadd.f32 %v1407, %v1408
        %v1410 = vsel %vm742, %v436, 0.0
        %v1411 = vadd.f32 %v1409, %v1410
        %v1412 = vsel %vm748, %v437, 0.0
        %v1413 = vadd.f32 %v1411, %v1412
        %v1414 = vrot.slane %v1413, 4
        %v1415 = vadd.f32 %v1413, %v1414
        %v1416 = vrot.slane %v1415, 2
        %v1417 = vadd.f32 %v1415, %v1416
        %v1418 = vrot.slane %v1417, 1
        %v1419 = vadd.f32 %v1417, %v1418
        %v1420 = vsel %vm742, %v438, 0.0
        %v1421 = vsel %vm742, %v439, 0.0
        %v1422 = vadd.f32 %v1420, %v1421
        %v1423 = vsel %vm742, %v440, 0.0
        %v1424 = vadd.f32 %v1422, %v1423
        %v1425 = vsel %vm748, %v441, 0.0
        %v1426 = vadd.f32 %v1424, %v1425
        %v1427 = vrot.slane %v1426, 4
        %v1428 = vadd.f32 %v1426, %v1427
        %v1429 = vrot.slane %v1428, 2
        %v1430 = vadd.f32 %v1428, %v1429
        %v1431 = vrot.slane %v1430, 1
        %v1432 = vadd.f32 %v1430, %v1431
        %v1433 = vsel %vm742, %v442, 0.0
        %v1434 = vsel %vm742, %v443, 0.0
        %v1435 = vadd.f32 %v1433, %v1434
        %v1436 = vsel %vm742, %v444, 0.0
        %v1437 = vadd.f32 %v1435, %v1436
        %v1438 = vsel %vm748, %v445, 0.0
        %v1439 = vadd.f32 %v1437, %v1438
        %v1440 = vrot.slane %v1439, 4
        %v1441 = vadd.f32 %v1439, %v1440
        %v1442 = vrot.slane %v1441, 2
        %v1443 = vadd.f32 %v1441, %v1442
        %v1444 = vrot.slane %v1443, 1
        %v1445 = vadd.f32 %v1443, %v1444
        %v1446 = vsel %vm742, %v446, 0.0
        %v1447 = vsel %vm742, %v447, 0.0
        %v1448 = vadd.f32 %v1446, %v1447
        %v1449 = vsel %vm742, %v448, 0.0
        %v1450 = vadd.f32 %v1448, %v1449
        %v1451 = vsel %vm748, %v449, 0.0
        %v1452 = vadd.f32 %v1450, %v1451
        %v1453 = vrot.slane %v1452, 4
        %v1454 = vadd.f32 %v1452, %v1453
        %v1455 = vrot.slane %v1454, 2
        %v1456 = vadd.f32 %v1454, %v1455
        %v1457 = vrot.slane %v1456, 1
        %v1458 = vadd.f32 %v1456, %v1457
        %v1459 = vsel %vm742, %v450, 0.0
        %v1460 = vsel %vm742, %v451, 0.0
        %v1461 = vadd.f32 %v1459, %v1460
        %v1462 = vsel %vm742, %v452, 0.0
        %v1463 = vadd.f32 %v1461, %v1462
        %v1464 = vsel %vm748, %v453, 0.0
        %v1465 = vadd.f32 %v1463, %v1464
        %v1466 = vrot.slane %v1465, 4
        %v1467 = vadd.f32 %v1465, %v1466
        %v1468 = vrot.slane %v1467, 2
        %v1469 = vadd.f32 %v1467, %v1468
        %v1470 = vrot.slane %v1469, 1
        %v1471 = vadd.f32 %v1469, %v1470
        %v1472 = vsel %vm742, %v454, 0.0
        %v1473 = vsel %vm742, %v455, 0.0
        %v1474 = vadd.f32 %v1472, %v1473
        %v1475 = vsel %vm742, %v456, 0.0
        %v1476 = vadd.f32 %v1474, %v1475
        %v1477 = vsel %vm748, %v457, 0.0
        %v1478 = vadd.f32 %v1476, %v1477
        %v1479 = vrot.slane %v1478, 4
        %v1480 = vadd.f32 %v1478, %v1479
        %v1481 = vrot.slane %v1480, 2
        %v1482 = vadd.f32 %v1480, %v1481
        %v1483 = vrot.slane %v1482, 1
        %v1484 = vadd.f32 %v1482, %v1483
        %v1485 = vsel %vm742, %v458, 0.0
        %v1486 = vsel %vm742, %v459, 0.0
        %v1487 = vadd.f32 %v1485, %v1486
        %v1488 = vsel %vm742, %v460, 0.0
        %v1489 = vadd.f32 %v1487, %v1488
        %v1490 = vsel %vm748, %v461, 0.0
        %v1491 = vadd.f32 %v1489, %v1490
        %v1492 = vrot.slane %v1491, 4
        %v1493 = vadd.f32 %v1491, %v1492
        %v1494 = vrot.slane %v1493, 2
        %v1495 = vadd.f32 %v1493, %v1494
        %v1496 = vrot.slane %v1495, 1
        %v1497 = vadd.f32 %v1495, %v1496
        %v1498 = vsel %vm742, %v462, 0.0
        %v1499 = vsel %vm742, %v463, 0.0
        %v1500 = vadd.f32 %v1498, %v1499
        %v1501 = vsel %vm742, %v464, 0.0
        %v1502 = vadd.f32 %v1500, %v1501
        %v1503 = vsel %vm748, %v465, 0.0
        %v1504 = vadd.f32 %v1502, %v1503
        %v1505 = vrot.slane %v1504, 4
        %v1506 = vadd.f32 %v1504, %v1505
        %v1507 = vrot.slane %v1506, 2
        %v1508 = vadd.f32 %v1506, %v1507
        %v1509 = vrot.slane %v1508, 1
        %v1510 = vadd.f32 %v1508, %v1509
        %v1511 = vsel %vm742, %v466, 0.0
        %v1512 = vsel %vm742, %v467, 0.0
        %v1513 = vadd.f32 %v1511, %v1512
        %v1514 = vsel %vm742, %v468, 0.0
        %v1515 = vadd.f32 %v1513, %v1514
        %v1516 = vsel %vm748, %v469, 0.0
        %v1517 = vadd.f32 %v1515, %v1516
        %v1518 = vrot.slane %v1517, 4
        %v1519 = vadd.f32 %v1517, %v1518
        %v1520 = vrot.slane %v1519, 2
        %v1521 = vadd.f32 %v1519, %v1520
        %v1522 = vrot.slane %v1521, 1
        %v1523 = vadd.f32 %v1521, %v1522
        %v1524 = vsel %vm742, %v470, 0.0
        %v1525 = vsel %vm742, %v471, 0.0
        %v1526 = vadd.f32 %v1524, %v1525
        %v1527 = vsel %vm742, %v472, 0.0
        %v1528 = vadd.f32 %v1526, %v1527
        %v1529 = vsel %vm748, %v473, 0.0
        %v1530 = vadd.f32 %v1528, %v1529
        %v1531 = vrot.slane %v1530, 4
        %v1532 = vadd.f32 %v1530, %v1531
        %v1533 = vrot.slane %v1532, 2
        %v1534 = vadd.f32 %v1532, %v1533
        %v1535 = vrot.slane %v1534, 1
        %v1536 = vadd.f32 %v1534, %v1535
        %v1537 = vsel %vm742, %v474, 0.0
        %v1538 = vsel %vm742, %v475, 0.0
        %v1539 = vadd.f32 %v1537, %v1538
        %v1540 = vsel %vm742, %v476, 0.0
        %v1541 = vadd.f32 %v1539, %v1540
        %v1542 = vsel %vm748, %v477, 0.0
        %v1543 = vadd.f32 %v1541, %v1542
        %v1544 = vrot.slane %v1543, 4
        %v1545 = vadd.f32 %v1543, %v1544
        %v1546 = vrot.slane %v1545, 2
        %v1547 = vadd.f32 %v1545, %v1546
        %v1548 = vrot.slane %v1547, 1
        %v1549 = vadd.f32 %v1547, %v1548
        %v1550 = vsel %vm742, %v478, 0.0
        %v1551 = vsel %vm742, %v479, 0.0
        %v1552 = vadd.f32 %v1550, %v1551
        %v1553 = vsel %vm742, %v480, 0.0
        %v1554 = vadd.f32 %v1552, %v1553
        %v1555 = vsel %vm748, %v481, 0.0
        %v1556 = vadd.f32 %v1554, %v1555
        %v1557 = vrot.slane %v1556, 4
        %v1558 = vadd.f32 %v1556, %v1557
        %v1559 = vrot.slane %v1558, 2
        %v1560 = vadd.f32 %v1558, %v1559
        %v1561 = vrot.slane %v1560, 1
        %v1562 = vadd.f32 %v1560, %v1561
        %v1563 = vsel %vm742, %v482, 0.0
        %v1564 = vsel %vm742, %v483, 0.0
        %v1565 = vadd.f32 %v1563, %v1564
        %v1566 = vsel %vm742, %v484, 0.0
        %v1567 = vadd.f32 %v1565, %v1566
        %v1568 = vsel %vm748, %v485, 0.0
        %v1569 = vadd.f32 %v1567, %v1568
        %v1570 = vrot.slane %v1569, 4
        %v1571 = vadd.f32 %v1569, %v1570
        %v1572 = vrot.slane %v1571, 2
        %v1573 = vadd.f32 %v1571, %v1572
        %v1574 = vrot.slane %v1573, 1
        %v1575 = vadd.f32 %v1573, %v1574
        %v1576 = vsel %vm742, %v486, 0.0
        %v1577 = vsel %vm742, %v487, 0.0
        %v1578 = vadd.f32 %v1576, %v1577
        %v1579 = vsel %vm742, %v488, 0.0
        %v1580 = vadd.f32 %v1578, %v1579
        %v1581 = vsel %vm748, %v489, 0.0
        %v1582 = vadd.f32 %v1580, %v1581
        %v1583 = vrot.slane %v1582, 4
        %v1584 = vadd.f32 %v1582, %v1583
        %v1585 = vrot.slane %v1584, 2
        %v1586 = vadd.f32 %v1584, %v1585
        %v1587 = vrot.slane %v1586, 1
        %v1588 = vadd.f32 %v1586, %v1587
        %v1589 = vsel %vm742, %v490, 0.0
        %v1590 = vsel %vm742, %v491, 0.0
        %v1591 = vadd.f32 %v1589, %v1590
        %v1592 = vsel %vm742, %v492, 0.0
        %v1593 = vadd.f32 %v1591, %v1592
        %v1594 = vsel %vm748, %v493, 0.0
        %v1595 = vadd.f32 %v1593, %v1594
        %v1596 = vrot.slane %v1595, 4
        %v1597 = vadd.f32 %v1595, %v1596
        %v1598 = vrot.slane %v1597, 2
        %v1599 = vadd.f32 %v1597, %v1598
        %v1600 = vrot.slane %v1599, 1
        %v1601 = vadd.f32 %v1599, %v1600
        %v1602 = vsel %vm742, %v494, 0.0
        %v1603 = vsel %vm742, %v495, 0.0
        %v1604 = vadd.f32 %v1602, %v1603
        %v1605 = vsel %vm742, %v496, 0.0
        %v1606 = vadd.f32 %v1604, %v1605
        %v1607 = vsel %vm748, %v497, 0.0
        %v1608 = vadd.f32 %v1606, %v1607
        %v1609 = vrot.slane %v1608, 4
        %v1610 = vadd.f32 %v1608, %v1609
        %v1611 = vrot.slane %v1610, 2
        %v1612 = vadd.f32 %v1610, %v1611
        %v1613 = vrot.slane %v1612, 1
        %v1614 = vadd.f32 %v1612, %v1613
        %v1615 = vsel %vm742, %v498, 0.0
        %v1616 = vsel %vm742, %v499, 0.0
        %v1617 = vadd.f32 %v1615, %v1616
        %v1618 = vsel %vm742, %v500, 0.0
        %v1619 = vadd.f32 %v1617, %v1618
        %v1620 = vsel %vm748, %v501, 0.0
        %v1621 = vadd.f32 %v1619, %v1620
        %v1622 = vrot.slane %v1621, 4
        %v1623 = vadd.f32 %v1621, %v1622
        %v1624 = vrot.slane %v1623, 2
        %v1625 = vadd.f32 %v1623, %v1624
        %v1626 = vrot.slane %v1625, 1
        %v1627 = vadd.f32 %v1625, %v1626
        %v1628 = vsel %vm742, %v502, 0.0
        %v1629 = vsel %vm742, %v503, 0.0
        %v1630 = vadd.f32 %v1628, %v1629
        %v1631 = vsel %vm742, %v504, 0.0
        %v1632 = vadd.f32 %v1630, %v1631
        %v1633 = vsel %vm748, %v505, 0.0
        %v1634 = vadd.f32 %v1632, %v1633
        %v1635 = vrot.slane %v1634, 4
        %v1636 = vadd.f32 %v1634, %v1635
        %v1637 = vrot.slane %v1636, 2
        %v1638 = vadd.f32 %v1636, %v1637
        %v1639 = vrot.slane %v1638, 1
        %v1640 = vadd.f32 %v1638, %v1639
        %v1641 = vsel %vm742, %v506, 0.0
        %v1642 = vsel %vm742, %v507, 0.0
        %v1643 = vadd.f32 %v1641, %v1642
        %v1644 = vsel %vm742, %v508, 0.0
        %v1645 = vadd.f32 %v1643, %v1644
        %v1646 = vsel %vm748, %v509, 0.0
        %v1647 = vadd.f32 %v1645, %v1646
        %v1648 = vrot.slane %v1647, 4
        %v1649 = vadd.f32 %v1647, %v1648
        %v1650 = vrot.slane %v1649, 2
        %v1651 = vadd.f32 %v1649, %v1650
        %v1652 = vrot.slane %v1651, 1
        %v1653 = vadd.f32 %v1651, %v1652
        %v1654 = vsel %vm742, %v510, 0.0
        %v1655 = vsel %vm742, %v511, 0.0
        %v1656 = vadd.f32 %v1654, %v1655
        %v1657 = vsel %vm742, %v512, 0.0
        %v1658 = vadd.f32 %v1656, %v1657
        %v1659 = vsel %vm748, %v513, 0.0
        %v1660 = vadd.f32 %v1658, %v1659
        %v1661 = vrot.slane %v1660, 4
        %v1662 = vadd.f32 %v1660, %v1661
        %v1663 = vrot.slane %v1662, 2
        %v1664 = vadd.f32 %v1662, %v1663
        %v1665 = vrot.slane %v1664, 1
        %v1666 = vadd.f32 %v1664, %v1665
        %v1667 = vsel %vm742, %v514, 0.0
        %v1668 = vsel %vm742, %v515, 0.0
        %v1669 = vadd.f32 %v1667, %v1668
        %v1670 = vsel %vm742, %v516, 0.0
        %v1671 = vadd.f32 %v1669, %v1670
        %v1672 = vsel %vm748, %v517, 0.0
        %v1673 = vadd.f32 %v1671, %v1672
        %v1674 = vrot.slane %v1673, 4
        %v1675 = vadd.f32 %v1673, %v1674
        %v1676 = vrot.slane %v1675, 2
        %v1677 = vadd.f32 %v1675, %v1676
        %v1678 = vrot.slane %v1677, 1
        %v1679 = vadd.f32 %v1677, %v1678
        %v1680 = vsel %vm742, %v518, 0.0
        %v1681 = vsel %vm742, %v519, 0.0
        %v1682 = vadd.f32 %v1680, %v1681
        %v1683 = vsel %vm742, %v520, 0.0
        %v1684 = vadd.f32 %v1682, %v1683
        %v1685 = vsel %vm748, %v521, 0.0
        %v1686 = vadd.f32 %v1684, %v1685
        %v1687 = vrot.slane %v1686, 4
        %v1688 = vadd.f32 %v1686, %v1687
        %v1689 = vrot.slane %v1688, 2
        %v1690 = vadd.f32 %v1688, %v1689
        %v1691 = vrot.slane %v1690, 1
        %v1692 = vadd.f32 %v1690, %v1691
        %v1693 = vsel %vm742, %v522, 0.0
        %v1694 = vsel %vm742, %v523, 0.0
        %v1695 = vadd.f32 %v1693, %v1694
        %v1696 = vsel %vm742, %v524, 0.0
        %v1697 = vadd.f32 %v1695, %v1696
        %v1698 = vsel %vm748, %v525, 0.0
        %v1699 = vadd.f32 %v1697, %v1698
        %v1700 = vrot.slane %v1699, 4
        %v1701 = vadd.f32 %v1699, %v1700
        %v1702 = vrot.slane %v1701, 2
        %v1703 = vadd.f32 %v1701, %v1702
        %v1704 = vrot.slane %v1703, 1
        %v1705 = vadd.f32 %v1703, %v1704
        %v1706 = vsel %vm742, %v526, 0.0
        %v1707 = vsel %vm742, %v527, 0.0
        %v1708 = vadd.f32 %v1706, %v1707
        %v1709 = vsel %vm742, %v528, 0.0
        %v1710 = vadd.f32 %v1708, %v1709
        %v1711 = vsel %vm748, %v529, 0.0
        %v1712 = vadd.f32 %v1710, %v1711
        %v1713 = vrot.slane %v1712, 4
        %v1714 = vadd.f32 %v1712, %v1713
        %v1715 = vrot.slane %v1714, 2
        %v1716 = vadd.f32 %v1714, %v1715
        %v1717 = vrot.slane %v1716, 1
        %v1718 = vadd.f32 %v1716, %v1717
        %v1719 = vsel %vm742, %v530, 0.0
        %v1720 = vsel %vm742, %v531, 0.0
        %v1721 = vadd.f32 %v1719, %v1720
        %v1722 = vsel %vm742, %v532, 0.0
        %v1723 = vadd.f32 %v1721, %v1722
        %v1724 = vsel %vm748, %v533, 0.0
        %v1725 = vadd.f32 %v1723, %v1724
        %v1726 = vrot.slane %v1725, 4
        %v1727 = vadd.f32 %v1725, %v1726
        %v1728 = vrot.slane %v1727, 2
        %v1729 = vadd.f32 %v1727, %v1728
        %v1730 = vrot.slane %v1729, 1
        %v1731 = vadd.f32 %v1729, %v1730
        %v1732 = vsel %vm742, %v534, 0.0
        %v1733 = vsel %vm742, %v535, 0.0
        %v1734 = vadd.f32 %v1732, %v1733
        %v1735 = vsel %vm742, %v536, 0.0
        %v1736 = vadd.f32 %v1734, %v1735
        %v1737 = vsel %vm748, %v537, 0.0
        %v1738 = vadd.f32 %v1736, %v1737
        %v1739 = vrot.slane %v1738, 4
        %v1740 = vadd.f32 %v1738, %v1739
        %v1741 = vrot.slane %v1740, 2
        %v1742 = vadd.f32 %v1740, %v1741
        %v1743 = vrot.slane %v1742, 1
        %v1744 = vadd.f32 %v1742, %v1743
        %v1745 = vsel %vm742, %v538, 0.0
        %v1746 = vsel %vm742, %v539, 0.0
        %v1747 = vadd.f32 %v1745, %v1746
        %v1748 = vsel %vm742, %v540, 0.0
        %v1749 = vadd.f32 %v1747, %v1748
        %v1750 = vsel %vm748, %v541, 0.0
        %v1751 = vadd.f32 %v1749, %v1750
        %v1752 = vrot.slane %v1751, 4
        %v1753 = vadd.f32 %v1751, %v1752
        %v1754 = vrot.slane %v1753, 2
        %v1755 = vadd.f32 %v1753, %v1754
        %v1756 = vrot.slane %v1755, 1
        %v1757 = vadd.f32 %v1755, %v1756
        %v1758 = vsel %vm742, %v542, 0.0
        %v1759 = vsel %vm742, %v543, 0.0
        %v1760 = vadd.f32 %v1758, %v1759
        %v1761 = vsel %vm742, %v544, 0.0
        %v1762 = vadd.f32 %v1760, %v1761
        %v1763 = vsel %vm748, %v545, 0.0
        %v1764 = vadd.f32 %v1762, %v1763
        %v1765 = vrot.slane %v1764, 4
        %v1766 = vadd.f32 %v1764, %v1765
        %v1767 = vrot.slane %v1766, 2
        %v1768 = vadd.f32 %v1766, %v1767
        %v1769 = vrot.slane %v1768, 1
        %v1770 = vadd.f32 %v1768, %v1769
        %v1771 = vsel %vm742, %v546, 0.0
        %v1772 = vsel %vm742, %v547, 0.0
        %v1773 = vadd.f32 %v1771, %v1772
        %v1774 = vsel %vm742, %v548, 0.0
        %v1775 = vadd.f32 %v1773, %v1774
        %v1776 = vsel %vm748, %v549, 0.0
        %v1777 = vadd.f32 %v1775, %v1776
        %v1778 = vrot.slane %v1777, 4
        %v1779 = vadd.f32 %v1777, %v1778
        %v1780 = vrot.slane %v1779, 2
        %v1781 = vadd.f32 %v1779, %v1780
        %v1782 = vrot.slane %v1781, 1
        %v1783 = vadd.f32 %v1781, %v1782
        %v1784 = vsel %vm742, %v550, 0.0
        %v1785 = vsel %vm742, %v551, 0.0
        %v1786 = vadd.f32 %v1784, %v1785
        %v1787 = vsel %vm742, %v552, 0.0
        %v1788 = vadd.f32 %v1786, %v1787
        %v1789 = vsel %vm748, %v553, 0.0
        %v1790 = vadd.f32 %v1788, %v1789
        %v1791 = vrot.slane %v1790, 4
        %v1792 = vadd.f32 %v1790, %v1791
        %v1793 = vrot.slane %v1792, 2
        %v1794 = vadd.f32 %v1792, %v1793
        %v1795 = vrot.slane %v1794, 1
        %v1796 = vadd.f32 %v1794, %v1795
        %v1797 = vsel %vm742, %v554, 0.0
        %v1798 = vsel %vm742, %v555, 0.0
        %v1799 = vadd.f32 %v1797, %v1798
        %v1800 = vsel %vm742, %v556, 0.0
        %v1801 = vadd.f32 %v1799, %v1800
        %v1802 = vsel %vm748, %v557, 0.0
        %v1803 = vadd.f32 %v1801, %v1802
        %v1804 = vrot.slane %v1803, 4
        %v1805 = vadd.f32 %v1803, %v1804
        %v1806 = vrot.slane %v1805, 2
        %v1807 = vadd.f32 %v1805, %v1806
        %v1808 = vrot.slane %v1807, 1
        %v1809 = vadd.f32 %v1807, %v1808
        %v1810 = vsel %vm742, %v558, 0.0
        %v1811 = vsel %vm742, %v559, 0.0
        %v1812 = vadd.f32 %v1810, %v1811
        %v1813 = vsel %vm742, %v560, 0.0
        %v1814 = vadd.f32 %v1812, %v1813
        %v1815 = vsel %vm748, %v561, 0.0
        %v1816 = vadd.f32 %v1814, %v1815
        %v1817 = vrot.slane %v1816, 4
        %v1818 = vadd.f32 %v1816, %v1817
        %v1819 = vrot.slane %v1818, 2
        %v1820 = vadd.f32 %v1818, %v1819
        %v1821 = vrot.slane %v1820, 1
        %v1822 = vadd.f32 %v1820, %v1821
        %v1823 = vsel %vm742, %v562, 0.0
        %v1824 = vsel %vm742, %v563, 0.0
        %v1825 = vadd.f32 %v1823, %v1824
        %v1826 = vsel %vm742, %v564, 0.0
        %v1827 = vadd.f32 %v1825, %v1826
        %v1828 = vsel %vm748, %v565, 0.0
        %v1829 = vadd.f32 %v1827, %v1828
        %v1830 = vrot.slane %v1829, 4
        %v1831 = vadd.f32 %v1829, %v1830
        %v1832 = vrot.slane %v1831, 2
        %v1833 = vadd.f32 %v1831, %v1832
        %v1834 = vrot.slane %v1833, 1
        %v1835 = vadd.f32 %v1833, %v1834
        %v1836 = vsel %vm742, %v566, 0.0
        %v1837 = vsel %vm742, %v567, 0.0
        %v1838 = vadd.f32 %v1836, %v1837
        %v1839 = vsel %vm742, %v568, 0.0
        %v1840 = vadd.f32 %v1838, %v1839
        %v1841 = vsel %vm748, %v569, 0.0
        %v1842 = vadd.f32 %v1840, %v1841
        %v1843 = vrot.slane %v1842, 4
        %v1844 = vadd.f32 %v1842, %v1843
        %v1845 = vrot.slane %v1844, 2
        %v1846 = vadd.f32 %v1844, %v1845
        %v1847 = vrot.slane %v1846, 1
        %v1848 = vadd.f32 %v1846, %v1847
        %v1849 = vsel %vm742, %v570, 0.0
        %v1850 = vsel %vm742, %v571, 0.0
        %v1851 = vadd.f32 %v1849, %v1850
        %v1852 = vsel %vm742, %v572, 0.0
        %v1853 = vadd.f32 %v1851, %v1852
        %v1854 = vsel %vm748, %v573, 0.0
        %v1855 = vadd.f32 %v1853, %v1854
        %v1856 = vrot.slane %v1855, 4
        %v1857 = vadd.f32 %v1855, %v1856
        %v1858 = vrot.slane %v1857, 2
        %v1859 = vadd.f32 %v1857, %v1858
        %v1860 = vrot.slane %v1859, 1
        %v1861 = vadd.f32 %v1859, %v1860
        %v1862 = vsel %vm742, %v574, 0.0
        %v1863 = vsel %vm742, %v575, 0.0
        %v1864 = vadd.f32 %v1862, %v1863
        %v1865 = vsel %vm742, %v576, 0.0
        %v1866 = vadd.f32 %v1864, %v1865
        %v1867 = vsel %vm748, %v577, 0.0
        %v1868 = vadd.f32 %v1866, %v1867
        %v1869 = vrot.slane %v1868, 4
        %v1870 = vadd.f32 %v1868, %v1869
        %v1871 = vrot.slane %v1870, 2
        %v1872 = vadd.f32 %v1870, %v1871
        %v1873 = vrot.slane %v1872, 1
        %v1874 = vadd.f32 %v1872, %v1873
        %v1875 = vsel %vm742, %v578, 0.0
        %v1876 = vsel %vm742, %v579, 0.0
        %v1877 = vadd.f32 %v1875, %v1876
        %v1878 = vsel %vm742, %v580, 0.0
        %v1879 = vadd.f32 %v1877, %v1878
        %v1880 = vsel %vm748, %v581, 0.0
        %v1881 = vadd.f32 %v1879, %v1880
        %v1882 = vrot.slane %v1881, 4
        %v1883 = vadd.f32 %v1881, %v1882
        %v1884 = vrot.slane %v1883, 2
        %v1885 = vadd.f32 %v1883, %v1884
        %v1886 = vrot.slane %v1885, 1
        %v1887 = vadd.f32 %v1885, %v1886
        %v1888 = vsel %vm742, %v582, 0.0
        %v1889 = vsel %vm742, %v583, 0.0
        %v1890 = vadd.f32 %v1888, %v1889
        %v1891 = vsel %vm742, %v584, 0.0
        %v1892 = vadd.f32 %v1890, %v1891
        %v1893 = vsel %vm748, %v585, 0.0
        %v1894 = vadd.f32 %v1892, %v1893
        %v1895 = vrot.slane %v1894, 4
        %v1896 = vadd.f32 %v1894, %v1895
        %v1897 = vrot.slane %v1896, 2
        %v1898 = vadd.f32 %v1896, %v1897
        %v1899 = vrot.slane %v1898, 1
        %v1900 = vadd.f32 %v1898, %v1899
        %v1901 = vsel %vm742, %v586, 0.0
        %v1902 = vsel %vm742, %v587, 0.0
        %v1903 = vadd.f32 %v1901, %v1902
        %v1904 = vsel %vm742, %v588, 0.0
        %v1905 = vadd.f32 %v1903, %v1904
        %v1906 = vsel %vm748, %v589, 0.0
        %v1907 = vadd.f32 %v1905, %v1906
        %v1908 = vrot.slane %v1907, 4
        %v1909 = vadd.f32 %v1907, %v1908
        %v1910 = vrot.slane %v1909, 2
        %v1911 = vadd.f32 %v1909, %v1910
        %v1912 = vrot.slane %v1911, 1
        %v1913 = vadd.f32 %v1911, %v1912
        %v1914 = vsel %vm742, %v590, 0.0
        %v1915 = vsel %vm742, %v591, 0.0
        %v1916 = vadd.f32 %v1914, %v1915
        %v1917 = vsel %vm742, %v592, 0.0
        %v1918 = vadd.f32 %v1916, %v1917
        %v1919 = vsel %vm748, %v593, 0.0
        %v1920 = vadd.f32 %v1918, %v1919
        %v1921 = vrot.slane %v1920, 4
        %v1922 = vadd.f32 %v1920, %v1921
        %v1923 = vrot.slane %v1922, 2
        %v1924 = vadd.f32 %v1922, %v1923
        %v1925 = vrot.slane %v1924, 1
        %v1926 = vadd.f32 %v1924, %v1925
        %v1927 = vsel %vm742, %v594, 0.0
        %v1928 = vsel %vm742, %v595, 0.0
        %v1929 = vadd.f32 %v1927, %v1928
        %v1930 = vsel %vm742, %v596, 0.0
        %v1931 = vadd.f32 %v1929, %v1930
        %v1932 = vsel %vm748, %v597, 0.0
        %v1933 = vadd.f32 %v1931, %v1932
        %v1934 = vrot.slane %v1933, 4
        %v1935 = vadd.f32 %v1933, %v1934
        %v1936 = vrot.slane %v1935, 2
        %v1937 = vadd.f32 %v1935, %v1936
        %v1938 = vrot.slane %v1937, 1
        %v1939 = vadd.f32 %v1937, %v1938
        %v1940 = vsel %vm742, %v598, 0.0
        %v1941 = vsel %vm742, %v599, 0.0
        %v1942 = vadd.f32 %v1940, %v1941
        %v1943 = vsel %vm742, %v600, 0.0
        %v1944 = vadd.f32 %v1942, %v1943
        %v1945 = vsel %vm748, %v601, 0.0
        %v1946 = vadd.f32 %v1944, %v1945
        %v1947 = vrot.slane %v1946, 4
        %v1948 = vadd.f32 %v1946, %v1947
        %v1949 = vrot.slane %v1948, 2
        %v1950 = vadd.f32 %v1948, %v1949
        %v1951 = vrot.slane %v1950, 1
        %v1952 = vadd.f32 %v1950, %v1951
        %v1953 = vsel %vm742, %v602, 0.0
        %v1954 = vsel %vm742, %v603, 0.0
        %v1955 = vadd.f32 %v1953, %v1954
        %v1956 = vsel %vm742, %v604, 0.0
        %v1957 = vadd.f32 %v1955, %v1956
        %v1958 = vsel %vm748, %v605, 0.0
        %v1959 = vadd.f32 %v1957, %v1958
        %v1960 = vrot.slane %v1959, 4
        %v1961 = vadd.f32 %v1959, %v1960
        %v1962 = vrot.slane %v1961, 2
        %v1963 = vadd.f32 %v1961, %v1962
        %v1964 = vrot.slane %v1963, 1
        %v1965 = vadd.f32 %v1963, %v1964
        %v1966 = vsel %vm742, %v606, 0.0
        %v1967 = vsel %vm742, %v607, 0.0
        %v1968 = vadd.f32 %v1966, %v1967
        %v1969 = vsel %vm742, %v608, 0.0
        %v1970 = vadd.f32 %v1968, %v1969
        %v1971 = vsel %vm748, %v609, 0.0
        %v1972 = vadd.f32 %v1970, %v1971
        %v1973 = vrot.slane %v1972, 4
        %v1974 = vadd.f32 %v1972, %v1973
        %v1975 = vrot.slane %v1974, 2
        %v1976 = vadd.f32 %v1974, %v1975
        %v1977 = vrot.slane %v1976, 1
        %v1978 = vadd.f32 %v1976, %v1977
        %v1979 = vsel %vm742, %v610, 0.0
        %v1980 = vsel %vm742, %v611, 0.0
        %v1981 = vadd.f32 %v1979, %v1980
        %v1982 = vsel %vm742, %v612, 0.0
        %v1983 = vadd.f32 %v1981, %v1982
        %v1984 = vsel %vm748, %v613, 0.0
        %v1985 = vadd.f32 %v1983, %v1984
        %v1986 = vrot.slane %v1985, 4
        %v1987 = vadd.f32 %v1985, %v1986
        %v1988 = vrot.slane %v1987, 2
        %v1989 = vadd.f32 %v1987, %v1988
        %v1990 = vrot.slane %v1989, 1
        %v1991 = vadd.f32 %v1989, %v1990
        %v1992 = vsel %vm742, %v614, 0.0
        %v1993 = vsel %vm742, %v615, 0.0
        %v1994 = vadd.f32 %v1992, %v1993
        %v1995 = vsel %vm742, %v616, 0.0
        %v1996 = vadd.f32 %v1994, %v1995
        %v1997 = vsel %vm748, %v617, 0.0
        %v1998 = vadd.f32 %v1996, %v1997
        %v1999 = vrot.slane %v1998, 4
        %v2000 = vadd.f32 %v1998, %v1999
        %v2001 = vrot.slane %v2000, 2
        %v2002 = vadd.f32 %v2000, %v2001
        %v2003 = vrot.slane %v2002, 1
        %v2004 = vadd.f32 %v2002, %v2003
        %v2005 = vsel %vm742, %v618, 0.0
        %v2006 = vsel %vm742, %v619, 0.0
        %v2007 = vadd.f32 %v2005, %v2006
        %v2008 = vsel %vm742, %v620, 0.0
        %v2009 = vadd.f32 %v2007, %v2008
        %v2010 = vsel %vm748, %v621, 0.0
        %v2011 = vadd.f32 %v2009, %v2010
        %v2012 = vrot.slane %v2011, 4
        %v2013 = vadd.f32 %v2011, %v2012
        %v2014 = vrot.slane %v2013, 2
        %v2015 = vadd.f32 %v2013, %v2014
        %v2016 = vrot.slane %v2015, 1
        %v2017 = vadd.f32 %v2015, %v2016
        %v2018 = vsel %vm742, %v622, 0.0
        %v2019 = vsel %vm742, %v623, 0.0
        %v2020 = vadd.f32 %v2018, %v2019
        %v2021 = vsel %vm742, %v624, 0.0
        %v2022 = vadd.f32 %v2020, %v2021
        %v2023 = vsel %vm748, %v625, 0.0
        %v2024 = vadd.f32 %v2022, %v2023
        %v2025 = vrot.slane %v2024, 4
        %v2026 = vadd.f32 %v2024, %v2025
        %v2027 = vrot.slane %v2026, 2
        %v2028 = vadd.f32 %v2026, %v2027
        %v2029 = vrot.slane %v2028, 1
        %v2030 = vadd.f32 %v2028, %v2029
        %v2031 = vsel %vm742, %v626, 0.0
        %v2032 = vsel %vm742, %v627, 0.0
        %v2033 = vadd.f32 %v2031, %v2032
        %v2034 = vsel %vm742, %v628, 0.0
        %v2035 = vadd.f32 %v2033, %v2034
        %v2036 = vsel %vm748, %v629, 0.0
        %v2037 = vadd.f32 %v2035, %v2036
        %v2038 = vrot.slane %v2037, 4
        %v2039 = vadd.f32 %v2037, %v2038
        %v2040 = vrot.slane %v2039, 2
        %v2041 = vadd.f32 %v2039, %v2040
        %v2042 = vrot.slane %v2041, 1
        %v2043 = vadd.f32 %v2041, %v2042
        %v2044 = vsel %vm742, %v630, 0.0
        %v2045 = vsel %vm742, %v631, 0.0
        %v2046 = vadd.f32 %v2044, %v2045
        %v2047 = vsel %vm742, %v632, 0.0
        %v2048 = vadd.f32 %v2046, %v2047
        %v2049 = vsel %vm748, %v633, 0.0
        %v2050 = vadd.f32 %v2048, %v2049
        %v2051 = vrot.slane %v2050, 4
        %v2052 = vadd.f32 %v2050, %v2051
        %v2053 = vrot.slane %v2052, 2
        %v2054 = vadd.f32 %v2052, %v2053
        %v2055 = vrot.slane %v2054, 1
        %v2056 = vadd.f32 %v2054, %v2055
        %v2057 = vsel %vm742, %v634, 0.0
        %v2058 = vsel %vm742, %v635, 0.0
        %v2059 = vadd.f32 %v2057, %v2058
        %v2060 = vsel %vm742, %v636, 0.0
        %v2061 = vadd.f32 %v2059, %v2060
        %v2062 = vsel %vm748, %v637, 0.0
        %v2063 = vadd.f32 %v2061, %v2062
        %v2064 = vrot.slane %v2063, 4
        %v2065 = vadd.f32 %v2063, %v2064
        %v2066 = vrot.slane %v2065, 2
        %v2067 = vadd.f32 %v2065, %v2066
        %v2068 = vrot.slane %v2067, 1
        %v2069 = vadd.f32 %v2067, %v2068
        %v2070 = vsel %vm742, %v638, 0.0
        %v2071 = vsel %vm742, %v639, 0.0
        %v2072 = vadd.f32 %v2070, %v2071
        %v2073 = vsel %vm742, %v640, 0.0
        %v2074 = vadd.f32 %v2072, %v2073
        %v2075 = vsel %vm748, %v641, 0.0
        %v2076 = vadd.f32 %v2074, %v2075
        %v2077 = vrot.slane %v2076, 4
        %v2078 = vadd.f32 %v2076, %v2077
        %v2079 = vrot.slane %v2078, 2
        %v2080 = vadd.f32 %v2078, %v2079
        %v2081 = vrot.slane %v2080, 1
        %v2082 = vadd.f32 %v2080, %v2081
        %v2083 = vsel %vm742, %v642, 0.0
        %v2084 = vsel %vm742, %v643, 0.0
        %v2085 = vadd.f32 %v2083, %v2084
        %v2086 = vsel %vm742, %v644, 0.0
        %v2087 = vadd.f32 %v2085, %v2086
        %v2088 = vsel %vm748, %v645, 0.0
        %v2089 = vadd.f32 %v2087, %v2088
        %v2090 = vrot.slane %v2089, 4
        %v2091 = vadd.f32 %v2089, %v2090
        %v2092 = vrot.slane %v2091, 2
        %v2093 = vadd.f32 %v2091, %v2092
        %v2094 = vrot.slane %v2093, 1
        %v2095 = vadd.f32 %v2093, %v2094
        %v2096 = vsel %vm742, %v646, 0.0
        %v2097 = vsel %vm742, %v647, 0.0
        %v2098 = vadd.f32 %v2096, %v2097
        %v2099 = vsel %vm742, %v648, 0.0
        %v2100 = vadd.f32 %v2098, %v2099
        %v2101 = vsel %vm748, %v649, 0.0
        %v2102 = vadd.f32 %v2100, %v2101
        %v2103 = vrot.slane %v2102, 4
        %v2104 = vadd.f32 %v2102, %v2103
        %v2105 = vrot.slane %v2104, 2
        %v2106 = vadd.f32 %v2104, %v2105
        %v2107 = vrot.slane %v2106, 1
        %v2108 = vadd.f32 %v2106, %v2107
        %v2109 = vsel %vm742, %v650, 0.0
        %v2110 = vsel %vm742, %v651, 0.0
        %v2111 = vadd.f32 %v2109, %v2110
        %v2112 = vsel %vm742, %v652, 0.0
        %v2113 = vadd.f32 %v2111, %v2112
        %v2114 = vsel %vm748, %v653, 0.0
        %v2115 = vadd.f32 %v2113, %v2114
        %v2116 = vrot.slane %v2115, 4
        %v2117 = vadd.f32 %v2115, %v2116
        %v2118 = vrot.slane %v2117, 2
        %v2119 = vadd.f32 %v2117, %v2118
        %v2120 = vrot.slane %v2119, 1
        %v2121 = vadd.f32 %v2119, %v2120
        %v2122 = vsel %vm742, %v654, 0.0
        %v2123 = vsel %vm742, %v655, 0.0
        %v2124 = vadd.f32 %v2122, %v2123
        %v2125 = vsel %vm742, %v656, 0.0
        %v2126 = vadd.f32 %v2124, %v2125
        %v2127 = vsel %vm748, %v657, 0.0
        %v2128 = vadd.f32 %v2126, %v2127
        %v2129 = vrot.slane %v2128, 4
        %v2130 = vadd.f32 %v2128, %v2129
        %v2131 = vrot.slane %v2130, 2
        %v2132 = vadd.f32 %v2130, %v2131
        %v2133 = vrot.slane %v2132, 1
        %v2134 = vadd.f32 %v2132, %v2133
        %v2135 = vsel %vm742, %v658, 0.0
        %v2136 = vsel %vm742, %v659, 0.0
        %v2137 = vadd.f32 %v2135, %v2136
        %v2138 = vsel %vm742, %v660, 0.0
        %v2139 = vadd.f32 %v2137, %v2138
        %v2140 = vsel %vm748, %v661, 0.0
        %v2141 = vadd.f32 %v2139, %v2140
        %v2142 = vrot.slane %v2141, 4
        %v2143 = vadd.f32 %v2141, %v2142
        %v2144 = vrot.slane %v2143, 2
        %v2145 = vadd.f32 %v2143, %v2144
        %v2146 = vrot.slane %v2145, 1
        %v2147 = vadd.f32 %v2145, %v2146
        %v2148 = vsel %vm742, %v662, 0.0
        %v2149 = vsel %vm742, %v663, 0.0
        %v2150 = vadd.f32 %v2148, %v2149
        %v2151 = vsel %vm742, %v664, 0.0
        %v2152 = vadd.f32 %v2150, %v2151
        %v2153 = vsel %vm748, %v665, 0.0
        %v2154 = vadd.f32 %v2152, %v2153
        %v2155 = vrot.slane %v2154, 4
        %v2156 = vadd.f32 %v2154, %v2155
        %v2157 = vrot.slane %v2156, 2
        %v2158 = vadd.f32 %v2156, %v2157
        %v2159 = vrot.slane %v2158, 1
        %v2160 = vadd.f32 %v2158, %v2159
        %v2161 = vsel %vm742, %v666, 0.0
        %v2162 = vsel %vm742, %v667, 0.0
        %v2163 = vadd.f32 %v2161, %v2162
        %v2164 = vsel %vm742, %v668, 0.0
        %v2165 = vadd.f32 %v2163, %v2164
        %v2166 = vsel %vm748, %v669, 0.0
        %v2167 = vadd.f32 %v2165, %v2166
        %v2168 = vrot.slane %v2167, 4
        %v2169 = vadd.f32 %v2167, %v2168
        %v2170 = vrot.slane %v2169, 2
        %v2171 = vadd.f32 %v2169, %v2170
        %v2172 = vrot.slane %v2171, 1
        %v2173 = vadd.f32 %v2171, %v2172
        %v2174 = vsel %vm742, %v670, 0.0
        %v2175 = vsel %vm742, %v671, 0.0
        %v2176 = vadd.f32 %v2174, %v2175
        %v2177 = vsel %vm742, %v672, 0.0
        %v2178 = vadd.f32 %v2176, %v2177
        %v2179 = vsel %vm748, %v673, 0.0
        %v2180 = vadd.f32 %v2178, %v2179
        %v2181 = vrot.slane %v2180, 4
        %v2182 = vadd.f32 %v2180, %v2181
        %v2183 = vrot.slane %v2182, 2
        %v2184 = vadd.f32 %v2182, %v2183
        %v2185 = vrot.slane %v2184, 1
        %v2186 = vadd.f32 %v2184, %v2185
        %v2187 = vsel %vm742, %v674, 0.0
        %v2188 = vsel %vm742, %v675, 0.0
        %v2189 = vadd.f32 %v2187, %v2188
        %v2190 = vsel %vm742, %v676, 0.0
        %v2191 = vadd.f32 %v2189, %v2190
        %v2192 = vsel %vm748, %v677, 0.0
        %v2193 = vadd.f32 %v2191, %v2192
        %v2194 = vrot.slane %v2193, 4
        %v2195 = vadd.f32 %v2193, %v2194
        %v2196 = vrot.slane %v2195, 2
        %v2197 = vadd.f32 %v2195, %v2196
        %v2198 = vrot.slane %v2197, 1
        %v2199 = vadd.f32 %v2197, %v2198
        %v2200 = vsel %vm742, %v678, 0.0
        %v2201 = vsel %vm742, %v679, 0.0
        %v2202 = vadd.f32 %v2200, %v2201
        %v2203 = vsel %vm742, %v680, 0.0
        %v2204 = vadd.f32 %v2202, %v2203
        %v2205 = vsel %vm748, %v681, 0.0
        %v2206 = vadd.f32 %v2204, %v2205
        %v2207 = vrot.slane %v2206, 4
        %v2208 = vadd.f32 %v2206, %v2207
        %v2209 = vrot.slane %v2208, 2
        %v2210 = vadd.f32 %v2208, %v2209
        %v2211 = vrot.slane %v2210, 1
        %v2212 = vadd.f32 %v2210, %v2211
        %v2213 = vsel %vm742, %v682, 0.0
        %v2214 = vsel %vm742, %v683, 0.0
        %v2215 = vadd.f32 %v2213, %v2214
        %v2216 = vsel %vm742, %v684, 0.0
        %v2217 = vadd.f32 %v2215, %v2216
        %v2218 = vsel %vm748, %v685, 0.0
        %v2219 = vadd.f32 %v2217, %v2218
        %v2220 = vrot.slane %v2219, 4
        %v2221 = vadd.f32 %v2219, %v2220
        %v2222 = vrot.slane %v2221, 2
        %v2223 = vadd.f32 %v2221, %v2222
        %v2224 = vrot.slane %v2223, 1
        %v2225 = vadd.f32 %v2223, %v2224
        %v2226 = vsel %vm742, %v686, 0.0
        %v2227 = vsel %vm742, %v687, 0.0
        %v2228 = vadd.f32 %v2226, %v2227
        %v2229 = vsel %vm742, %v688, 0.0
        %v2230 = vadd.f32 %v2228, %v2229
        %v2231 = vsel %vm748, %v689, 0.0
        %v2232 = vadd.f32 %v2230, %v2231
        %v2233 = vrot.slane %v2232, 4
        %v2234 = vadd.f32 %v2232, %v2233
        %v2235 = vrot.slane %v2234, 2
        %v2236 = vadd.f32 %v2234, %v2235
        %v2237 = vrot.slane %v2236, 1
        %v2238 = vadd.f32 %v2236, %v2237
        %v2239 = vsel %vm742, %v690, 0.0
        %v2240 = vsel %vm742, %v691, 0.0
        %v2241 = vadd.f32 %v2239, %v2240
        %v2242 = vsel %vm742, %v692, 0.0
        %v2243 = vadd.f32 %v2241, %v2242
        %v2244 = vsel %vm748, %v693, 0.0
        %v2245 = vadd.f32 %v2243, %v2244
        %v2246 = vrot.slane %v2245, 4
        %v2247 = vadd.f32 %v2245, %v2246
        %v2248 = vrot.slane %v2247, 2
        %v2249 = vadd.f32 %v2247, %v2248
        %v2250 = vrot.slane %v2249, 1
        %v2251 = vadd.f32 %v2249, %v2250
        %v2252 = vsel %vm742, %v694, 0.0
        %v2253 = vsel %vm742, %v695, 0.0
        %v2254 = vadd.f32 %v2252, %v2253
        %v2255 = vsel %vm742, %v696, 0.0
        %v2256 = vadd.f32 %v2254, %v2255
        %v2257 = vsel %vm748, %v697, 0.0
        %v2258 = vadd.f32 %v2256, %v2257
        %v2259 = vrot.slane %v2258, 4
        %v2260 = vadd.f32 %v2258, %v2259
        %v2261 = vrot.slane %v2260, 2
        %v2262 = vadd.f32 %v2260, %v2261
        %v2263 = vrot.slane %v2262, 1
        %v2264 = vadd.f32 %v2262, %v2263
        %v2265 = vsel %vm742, %v698, 0.0
        %v2266 = vsel %vm742, %v699, 0.0
        %v2267 = vadd.f32 %v2265, %v2266
        %v2268 = vsel %vm742, %v700, 0.0
        %v2269 = vadd.f32 %v2267, %v2268
        %v2270 = vsel %vm748, %v701, 0.0
        %v2271 = vadd.f32 %v2269, %v2270
        %v2272 = vrot.slane %v2271, 4
        %v2273 = vadd.f32 %v2271, %v2272
        %v2274 = vrot.slane %v2273, 2
        %v2275 = vadd.f32 %v2273, %v2274
        %v2276 = vrot.slane %v2275, 1
        %v2277 = vadd.f32 %v2275, %v2276
        %v2278 = vsel %vm742, %v702, 0.0
        %v2279 = vsel %vm742, %v703, 0.0
        %v2280 = vadd.f32 %v2278, %v2279
        %v2281 = vsel %vm742, %v704, 0.0
        %v2282 = vadd.f32 %v2280, %v2281
        %v2283 = vsel %vm748, %v705, 0.0
        %v2284 = vadd.f32 %v2282, %v2283
        %v2285 = vrot.slane %v2284, 4
        %v2286 = vadd.f32 %v2284, %v2285
        %v2287 = vrot.slane %v2286, 2
        %v2288 = vadd.f32 %v2286, %v2287
        %v2289 = vrot.slane %v2288, 1
        %v2290 = vadd.f32 %v2288, %v2289
        %v2291 = vsel %vm742, %v706, 0.0
        %v2292 = vsel %vm742, %v707, 0.0
        %v2293 = vadd.f32 %v2291, %v2292
        %v2294 = vsel %vm742, %v708, 0.0
        %v2295 = vadd.f32 %v2293, %v2294
        %v2296 = vsel %vm748, %v709, 0.0
        %v2297 = vadd.f32 %v2295, %v2296
        %v2298 = vrot.slane %v2297, 4
        %v2299 = vadd.f32 %v2297, %v2298
        %v2300 = vrot.slane %v2299, 2
        %v2301 = vadd.f32 %v2299, %v2300
        %v2302 = vrot.slane %v2301, 1
        %v2303 = vadd.f32 %v2301, %v2302
        %v2304 = vsel %vm742, %v710, 0.0
        %v2305 = vsel %vm742, %v711, 0.0
        %v2306 = vadd.f32 %v2304, %v2305
        %v2307 = vsel %vm742, %v712, 0.0
        %v2308 = vadd.f32 %v2306, %v2307
        %v2309 = vsel %vm748, %v713, 0.0
        %v2310 = vadd.f32 %v2308, %v2309
        %v2311 = vrot.slane %v2310, 4
        %v2312 = vadd.f32 %v2310, %v2311
        %v2313 = vrot.slane %v2312, 2
        %v2314 = vadd.f32 %v2312, %v2313
        %v2315 = vrot.slane %v2314, 1
        %v2316 = vadd.f32 %v2314, %v2315
        %v2317 = vsel %vm742, %v714, 0.0
        %v2318 = vsel %vm742, %v715, 0.0
        %v2319 = vadd.f32 %v2317, %v2318
        %v2320 = vsel %vm742, %v716, 0.0
        %v2321 = vadd.f32 %v2319, %v2320
        %v2322 = vsel %vm748, %v717, 0.0
        %v2323 = vadd.f32 %v2321, %v2322
        %v2324 = vrot.slane %v2323, 4
        %v2325 = vadd.f32 %v2323, %v2324
        %v2326 = vrot.slane %v2325, 2
        %v2327 = vadd.f32 %v2325, %v2326
        %v2328 = vrot.slane %v2327, 1
        %v2329 = vadd.f32 %v2327, %v2328
        %v2330 = vsel %vm742, %v718, 0.0
        %v2331 = vsel %vm742, %v719, 0.0
        %v2332 = vadd.f32 %v2330, %v2331
        %v2333 = vsel %vm742, %v720, 0.0
        %v2334 = vadd.f32 %v2332, %v2333
        %v2335 = vsel %vm748, %v721, 0.0
        %v2336 = vadd.f32 %v2334, %v2335
        %v2337 = vrot.slane %v2336, 4
        %v2338 = vadd.f32 %v2336, %v2337
        %v2339 = vrot.slane %v2338, 2
        %v2340 = vadd.f32 %v2338, %v2339
        %v2341 = vrot.slane %v2340, 1
        %v2342 = vadd.f32 %v2340, %v2341
        %v2343 = vsel %vm742, %v722, 0.0
        %v2344 = vsel %vm742, %v723, 0.0
        %v2345 = vadd.f32 %v2343, %v2344
        %v2346 = vsel %vm742, %v724, 0.0
        %v2347 = vadd.f32 %v2345, %v2346
        %v2348 = vsel %vm748, %v725, 0.0
        %v2349 = vadd.f32 %v2347, %v2348
        %v2350 = vrot.slane %v2349, 4
        %v2351 = vadd.f32 %v2349, %v2350
        %v2352 = vrot.slane %v2351, 2
        %v2353 = vadd.f32 %v2351, %v2352
        %v2354 = vrot.slane %v2353, 1
        %v2355 = vadd.f32 %v2353, %v2354
        %v2356 = vsel %vm742, %v726, 0.0
        %v2357 = vsel %vm742, %v727, 0.0
        %v2358 = vadd.f32 %v2356, %v2357
        %v2359 = vsel %vm742, %v728, 0.0
        %v2360 = vadd.f32 %v2358, %v2359
        %v2361 = vsel %vm748, %v729, 0.0
        %v2362 = vadd.f32 %v2360, %v2361
        %v2363 = vrot.slane %v2362, 4
        %v2364 = vadd.f32 %v2362, %v2363
        %v2365 = vrot.slane %v2364, 2
        %v2366 = vadd.f32 %v2364, %v2365
        %v2367 = vrot.slane %v2366, 1
        %v2368 = vadd.f32 %v2366, %v2367
        %v2369 = vsel %vm742, %v730, 0.0
        %v2370 = vsel %vm742, %v731, 0.0
        %v2371 = vadd.f32 %v2369, %v2370
        %v2372 = vsel %vm742, %v732, 0.0
        %v2373 = vadd.f32 %v2371, %v2372
        %v2374 = vsel %vm748, %v733, 0.0
        %v2375 = vadd.f32 %v2373, %v2374
        %v2376 = vrot.slane %v2375, 4
        %v2377 = vadd.f32 %v2375, %v2376
        %v2378 = vrot.slane %v2377, 2
        %v2379 = vadd.f32 %v2377, %v2378
        %v2380 = vrot.slane %v2379, 1
        %v2381 = vadd.f32 %v2379, %v2380
        %v2382 = vsel %vm742, %v734, 0.0
        %v2383 = vsel %vm742, %v735, 0.0
        %v2384 = vadd.f32 %v2382, %v2383
        %v2385 = vsel %vm742, %v736, 0.0
        %v2386 = vadd.f32 %v2384, %v2385
        %v2387 = vsel %vm748, %v737, 0.0
        %v2388 = vadd.f32 %v2386, %v2387
        %v2389 = vrot.slane %v2388, 4
        %v2390 = vadd.f32 %v2388, %v2389
        %v2391 = vrot.slane %v2390, 2
        %v2392 = vadd.f32 %v2390, %v2391
        %v2393 = vrot.slane %v2392, 1
        %v2394 = vadd.f32 %v2392, %v2393
        %v2395 = vsel %vm742, %v738, 0.0
        %v2396 = vsel %vm742, %v739, 0.0
        %v2397 = vadd.f32 %v2395, %v2396
        %v2398 = vsel %vm742, %v740, 0.0
        %v2399 = vadd.f32 %v2397, %v2398
        %v2400 = vsel %vm748, %v741, 0.0
        %v2401 = vadd.f32 %v2399, %v2400
        %v2402 = vrot.slane %v2401, 4
        %v2403 = vadd.f32 %v2401, %v2402
        %v2404 = vrot.slane %v2403, 2
        %v2405 = vadd.f32 %v2403, %v2404
        %v2406 = vrot.slane %v2405, 1
        %v2407 = vadd.f32 %v2405, %v2406
        %v2408 = vld [vmem:[%s2] sm:$0xff]
        %v2409 = vld [vmem:[%s2 + $0x8] sm:$0xff]
        %v2410 = vld [vmem:[%s2 + $0x10] sm:$0xff]
        %v2411 = vld [vmem:[%s2 + $0x18] sm:$0xff]
        %v2412 = vld [vmem:[%s2 + $0x20] sm:$0xff]
        %v2413 = vld [vmem:[%s2 + $0x28] sm:$0xff]
        %v2414 = vld [vmem:[%s2 + $0x30] sm:$0xff]
        %vm2543 = vcmask 1041409
        %v2544 = vsel %vm2543, %v769, %v756
        %vm2545 = vcmask 1042434
        %v2546 = vsel %vm2545, %v782, %v2544
        %vm2547 = vcmask 1043459
        %v2548 = vsel %vm2547, %v795, %v2546
        %vm2549 = vcmask 1044484
        %v2550 = vsel %vm2549, %v808, %v2548
        %vm2551 = vcmask 1045509
        %v2552 = vsel %vm2551, %v821, %v2550
        %vm2553 = vcmask 1046534
        %v2554 = vsel %vm2553, %v834, %v2552
        %vm2555 = vcmask 1047559
        %v2556 = vsel %vm2555, %v847, %v2554
        %v2557 = vsel %vm2543, %v873, %v860
        %v2558 = vsel %vm2545, %v886, %v2557
        %v2559 = vsel %vm2547, %v899, %v2558
        %v2560 = vsel %vm2549, %v912, %v2559
        %v2561 = vsel %vm2551, %v925, %v2560
        %v2562 = vsel %vm2553, %v938, %v2561
        %v2563 = vsel %vm2555, %v951, %v2562
        %v2564 = vsel %vm2543, %v977, %v964
        %v2565 = vsel %vm2545, %v990, %v2564
        %v2566 = vsel %vm2547, %v1003, %v2565
        %v2567 = vsel %vm2549, %v1016, %v2566
        %v2568 = vsel %vm2551, %v1029, %v2567
        %v2569 = vsel %vm2553, %v1042, %v2568
        %v2570 = vsel %vm2555, %v1055, %v2569
        %v2571 = vsel %vm2543, %v1081, %v1068
        %v2572 = vsel %vm2545, %v1094, %v2571
        %v2573 = vsel %vm2547, %v1107, %v2572
        %v2574 = vsel %vm2549, %v1120, %v2573
        %v2575 = vsel %vm2551, %v1133, %v2574
        %v2576 = vsel %vm2553, %v1146, %v2575
        %v2577 = vsel %vm2555, %v1159, %v2576
        %v2578 = vsel %vm2543, %v1185, %v1172
        %v2579 = vsel %vm2545, %v1198, %v2578
        %v2580 = vsel %vm2547, %v1211, %v2579
        %v2581 = vsel %vm2549, %v1224, %v2580
        %v2582 = vsel %vm2551, %v1237, %v2581
        %v2583 = vsel %vm2553, %v1250, %v2582
        %v2584 = vsel %vm2555, %v1263, %v2583
        %v2585 = vsel %vm2543, %v1289, %v1276
        %v2586 = vsel %vm2545, %v1302, %v2585
        %v2587 = vsel %vm2547, %v1315, %v2586
        %v2588 = vsel %vm2549, %v1328, %v2587
        %v2589 = vsel %vm2551, %v1341, %v2588
        %v2590 = vsel %vm2553, %v1354, %v2589
        %v2591 = vsel %vm2555, %v1367, %v2590
        %v2592 = vsel %vm2543, %v1393, %v1380
        %v2593 = vsel %vm2545, %v1406, %v2592
        %v2594 = vsel %vm2547, %v1419, %v2593
        %v2595 = vsel %vm2549, %v1432, %v2594
        %v2596 = vsel %vm2551, %v1445, %v2595
        %v2597 = vsel %vm2553, %v1458, %v2596
        %v2598 = vsel %vm2555, %v1471, %v2597
        %v2599 = vsel %vm2543, %v1497, %v1484
        %v2600 = vsel %vm2545, %v1510, %v2599
        %v2601 = vsel %vm2547, %v1523, %v2600
        %v2602 = vsel %vm2549, %v1536, %v2601
        %v2603 = vsel %vm2551, %v1549, %v2602
        %v2604 = vsel %vm2553, %v1562, %v2603
        %v2605 = vsel %vm2555, %v1575, %v2604
        %v2606 = vsel %vm2543, %v1601, %v1588
        %v2607 = vsel %vm2545, %v1614, %v2606
        %v2608 = vsel %vm2547, %v1627, %v2607
        %v2609 = vsel %vm2549, %v1640, %v2608
        %v2610 = vsel %vm2551, %v1653, %v2609
        %v2611 = vsel %vm2553, %v1666, %v2610
        %v2612 = vsel %vm2555, %v1679, %v2611
        %v2613 = vsel %vm2543, %v1705, %v1692
        %v2614 = vsel %vm2545, %v1718, %v2613
        %v2615 = vsel %vm2547, %v1731, %v2614
        %v2616 = vsel %vm2549, %v1744, %v2615
        %v2617 = vsel %vm2551, %v1757, %v2616
        %v2618 = vsel %vm2553, %v1770, %v2617
        %v2619 = vsel %vm2555, %v1783, %v2618
        %v2620 = vsel %vm2543, %v1809, %v1796
        %v2621 = vsel %vm2545, %v1822, %v2620
        %v2622 = vsel %vm2547, %v1835, %v2621
        %v2623 = vsel %vm2549, %v1848, %v2622
        %v2624 = vsel %vm2551, %v1861, %v2623
        %v2625 = vsel %vm2553, %v1874, %v2624
        %v2626 = vsel %vm2555, %v1887, %v2625
        %v2627 = vsel %vm2543, %v1913, %v1900
        %v2628 = vsel %vm2545, %v1926, %v2627
        %v2629 = vsel %vm2547, %v1939, %v2628
        %v2630 = vsel %vm2549, %v1952, %v2629
        %v2631 = vsel %vm2551, %v1965, %v2630
        %v2632 = vsel %vm2553, %v1978, %v2631
        %v2633 = vsel %vm2555, %v1991, %v2632
        %v2634 = vsel %vm2543, %v2017, %v2004
        %v2635 = vsel %vm2545, %v2030, %v2634
        %v2636 = vsel %vm2547, %v2043, %v2635
        %v2637 = vsel %vm2549, %v2056, %v2636
        %v2638 = vsel %vm2551, %v2069, %v2637
        %v2639 = vsel %vm2553, %v2082, %v2638
        %v2640 = vsel %vm2555, %v2095, %v2639
        %v2641 = vsel %vm2543, %v2121, %v2108
        %v2642 = vsel %vm2545, %v2134, %v2641
        %v2643 = vsel %vm2547, %v2147, %v2642
        %v2644 = vsel %vm2549, %v2160, %v2643
        %v2645 = vsel %vm2551, %v2173, %v2644
        %v2646 = vsel %vm2553, %v2186, %v2645
        %v2647 = vsel %vm2555, %v2199, %v2646
        %v2648 = vsel %vm2543, %v2225, %v2212
        %v2649 = vsel %vm2545, %v2238, %v2648
        %v2650 = vsel %vm2547, %v2251, %v2649
        %v2651 = vsel %vm2549, %v2264, %v2650
        %v2652 = vsel %vm2551, %v2277, %v2651
        %v2653 = vsel %vm2553, %v2290, %v2652
        %v2654 = vsel %vm2555, %v2303, %v2653
        %v2655 = vsel %vm2543, %v2329, %v2316
        %v2656 = vsel %vm2545, %v2342, %v2655
        %v2657 = vsel %vm2547, %v2355, %v2656
        %v2658 = vsel %vm2549, %v2368, %v2657
        %v2659 = vsel %vm2551, %v2381, %v2658
        %v2660 = vsel %vm2553, %v2394, %v2659
        %v2661 = vsel %vm2555, %v2407, %v2660
        %v2662 = vsel %vm742, %v2556, 0
        %v2664 = vsel %vm742, %v2563, 0
        %v2666 = vsel %vm742, %v2570, 0
        %v2668 = vsel %vm742, %v2577, 0
        %v2670 = vsel %vm742, %v2584, 0
        %v2672 = vsel %vm742, %v2591, 0
        %v2674 = vsel %vm742, %v2598, 0
        %v2676 = vsel %vm742, %v2605, 0
        %v2678 = vsel %vm742, %v2612, 0
        %v2680 = vsel %vm742, %v2619, 0
        %v2682 = vsel %vm742, %v2626, 0
        %v2684 = vsel %vm742, %v2633, 0
        %v2686 = vsel %vm742, %v2640, 0
        %v2688 = vsel %vm742, %v2647, 0
        %v2690 = vsel %vm742, %v2654, 0
        %v2692 = vsel %vm742, %v2661, 0
        %2694 = vmatpush.msra.mxu0 0.0
        %2695 = vmatpush.msra.mxu0 0.0
        %2696 = vmatpush.msra.mxu0 0.0
        %2697 = vmatpush.msra.mxu0 0.0
        %2698 = vmatpush.msra.mxu0 0.0
        %2699 = vmatpush.msra.mxu0 0.0
        %2700 = vmatpush.msra.mxu0 0.0
        %2701 = vmatpush.msra.mxu0 0.0
        %2702 = vmatpush.msra.mxu0 0.0
        %2703 = vmatpush.msra.mxu0 %v2414
        %2704 = vmatpush.msra.mxu0 %v2413
        %2705 = vmatpush.msra.mxu0 %v2412
        %2706 = vmatpush.msra.mxu0 %v2411
        %2707 = vmatpush.msra.mxu0 %v2410
        %2708 = vmatpush.msra.mxu0 %v2409
        %2709 = vmatpush.msra.mxu0 %v2408
        %2710 = vmatmul.f32.gmra.mxu0 %v2662
        %v2711 = vpop.f32.mrf.mxu0
        %v2712 = vadd.f32 0.0, %v2711
        %2713 = vmatmul.f32.gmra.mxu0 %v2664
        %v2714 = vpop.f32.mrf.mxu0
        %v2715 = vadd.f32 0.0, %v2714
        %2716 = vmatmul.f32.gmra.mxu0 %v2666
        %v2717 = vpop.f32.mrf.mxu0
        %v2718 = vadd.f32 0.0, %v2717
        %2719 = vmatmul.f32.gmra.mxu0 %v2668
        %v2720 = vpop.f32.mrf.mxu0
        %v2721 = vadd.f32 0.0, %v2720
        %2722 = vmatmul.f32.gmra.mxu0 %v2670
        %v2723 = vpop.f32.mrf.mxu0
        %v2724 = vadd.f32 0.0, %v2723
        %2725 = vmatmul.f32.gmra.mxu0 %v2672
        %v2726 = vpop.f32.mrf.mxu0
        %v2727 = vadd.f32 0.0, %v2726
        %2728 = vmatmul.f32.gmra.mxu0 %v2674
        %v2729 = vpop.f32.mrf.mxu0
        %v2730 = vadd.f32 0.0, %v2729
        %2731 = vmatmul.f32.gmra.mxu0 %v2676
        %v2732 = vpop.f32.mrf.mxu0
        %v2733 = vadd.f32 0.0, %v2732
        %2734 = vmatmul.f32.gmra.mxu0 %v2678
        %v2735 = vpop.f32.mrf.mxu0
        %v2736 = vadd.f32 0.0, %v2735
        %2737 = vmatmul.f32.gmra.mxu0 %v2680
        %v2738 = vpop.f32.mrf.mxu0
        %v2739 = vadd.f32 0.0, %v2738
        %2740 = vmatmul.f32.gmra.mxu0 %v2682
        %v2741 = vpop.f32.mrf.mxu0
        %v2742 = vadd.f32 0.0, %v2741
        %2743 = vmatmul.f32.gmra.mxu0 %v2684
        %v2744 = vpop.f32.mrf.mxu0
        %v2745 = vadd.f32 0.0, %v2744
        %2746 = vmatmul.f32.gmra.mxu0 %v2686
        %v2747 = vpop.f32.mrf.mxu0
        %v2748 = vadd.f32 0.0, %v2747
        %2749 = vmatmul.f32.gmra.mxu0 %v2688
        %v2750 = vpop.f32.mrf.mxu0
        %v2751 = vadd.f32 0.0, %v2750
        %2752 = vmatmul.f32.gmra.mxu0 %v2690
        %v2753 = vpop.f32.mrf.mxu0
        %v2754 = vadd.f32 0.0, %v2753
        %2755 = vmatmul.f32.gmra.mxu0 %v2692
        %v2756 = vpop.f32.mrf.mxu0
        %v2757 = vadd.f32 0.0, %v2756
        %2758 = vdwg.mxu0
        %s2759 = scalar_lea.vmem %s227, 32
        %v2760 = vld [vmem:[%s2759] sm:$0xff]
        %v2761 = vld [vmem:[%s2759 + $0x8] sm:$0xff]
        %v2762 = vld [vmem:[%s2759 + $0x10] sm:$0xff]
        %v2763 = vld [vmem:[%s2759 + $0x18] sm:$0xf]
        %v2764 = vld [vmem:[%s2759 + $0x40] sm:$0xff]
        %v2765 = vld [vmem:[%s2759 + $0x48] sm:$0xff]
        %v2766 = vld [vmem:[%s2759 + $0x50] sm:$0xff]
        %v2767 = vld [vmem:[%s2759 + $0x58] sm:$0xf]
        %v2768 = vld [vmem:[%s2759 + $0x80] sm:$0xff]
        %v2769 = vld [vmem:[%s2759 + $0x88] sm:$0xff]
        %v2770 = vld [vmem:[%s2759 + $0x90] sm:$0xff]
        %v2771 = vld [vmem:[%s2759 + $0x98] sm:$0xf]
        %v2772 = vld [vmem:[%s2759 + $0xc0] sm:$0xff]
        %v2773 = vld [vmem:[%s2759 + $0xc8] sm:$0xff]
        %v2774 = vld [vmem:[%s2759 + $0xd0] sm:$0xff]
        %v2775 = vld [vmem:[%s2759 + $0xd8] sm:$0xf]
        %v2776 = vld [vmem:[%s2759 + $0x100] sm:$0xff]
        %v2777 = vld [vmem:[%s2759 + $0x108] sm:$0xff]
        %v2778 = vld [vmem:[%s2759 + $0x110] sm:$0xff]
        %v2779 = vld [vmem:[%s2759 + $0x118] sm:$0xf]
        %v2780 = vld [vmem:[%s2759 + $0x140] sm:$0xff]
        %v2781 = vld [vmem:[%s2759 + $0x148] sm:$0xff]
        %v2782 = vld [vmem:[%s2759 + $0x150] sm:$0xff]
        %v2783 = vld [vmem:[%s2759 + $0x158] sm:$0xf]
        %v2784 = vld [vmem:[%s2759 + $0x180] sm:$0xff]
        %v2785 = vld [vmem:[%s2759 + $0x188] sm:$0xff]
        %v2786 = vld [vmem:[%s2759 + $0x190] sm:$0xff]
        %v2787 = vld [vmem:[%s2759 + $0x198] sm:$0xf]
        %v2788 = vld [vmem:[%s2759 + $0x1c0] sm:$0xff]
        %v2789 = vld [vmem:[%s2759 + $0x1c8] sm:$0xff]
        %v2790 = vld [vmem:[%s2759 + $0x1d0] sm:$0xff]
        %v2791 = vld [vmem:[%s2759 + $0x1d8] sm:$0xf]
        %v2792 = vld [vmem:[%s2759 + $0x200] sm:$0xff]
        %v2793 = vld [vmem:[%s2759 + $0x208] sm:$0xff]
        %v2794 = vld [vmem:[%s2759 + $0x210] sm:$0xff]
        %v2795 = vld [vmem:[%s2759 + $0x218] sm:$0xf]
        %v2796 = vld [vmem:[%s2759 + $0x240] sm:$0xff]
        %v2797 = vld [vmem:[%s2759 + $0x248] sm:$0xff]
        %v2798 = vld [vmem:[%s2759 + $0x250] sm:$0xff]
        %v2799 = vld [vmem:[%s2759 + $0x258] sm:$0xf]
        %v2800 = vld [vmem:[%s2759 + $0x280] sm:$0xff]
        %v2801 = vld [vmem:[%s2759 + $0x288] sm:$0xff]
        %v2802 = vld [vmem:[%s2759 + $0x290] sm:$0xff]
        %v2803 = vld [vmem:[%s2759 + $0x298] sm:$0xf]
        %v2804 = vld [vmem:[%s2759 + $0x2c0] sm:$0xff]
        %v2805 = vld [vmem:[%s2759 + $0x2c8] sm:$0xff]
        %v2806 = vld [vmem:[%s2759 + $0x2d0] sm:$0xff]
        %v2807 = vld [vmem:[%s2759 + $0x2d8] sm:$0xf]
        %v2808 = vld [vmem:[%s2759 + $0x300] sm:$0xff]
        %v2809 = vld [vmem:[%s2759 + $0x308] sm:$0xff]
        %v2810 = vld [vmem:[%s2759 + $0x310] sm:$0xff]
        %v2811 = vld [vmem:[%s2759 + $0x318] sm:$0xf]
        %v2812 = vld [vmem:[%s2759 + $0x340] sm:$0xff]
        %v2813 = vld [vmem:[%s2759 + $0x348] sm:$0xff]
        %v2814 = vld [vmem:[%s2759 + $0x350] sm:$0xff]
        %v2815 = vld [vmem:[%s2759 + $0x358] sm:$0xf]
        %v2816 = vld [vmem:[%s2759 + $0x380] sm:$0xff]
        %v2817 = vld [vmem:[%s2759 + $0x388] sm:$0xff]
        %v2818 = vld [vmem:[%s2759 + $0x390] sm:$0xff]
        %v2819 = vld [vmem:[%s2759 + $0x398] sm:$0xf]
        %v2820 = vld [vmem:[%s2759 + $0x3c0] sm:$0xff]
        %v2821 = vld [vmem:[%s2759 + $0x3c8] sm:$0xff]
        %v2822 = vld [vmem:[%s2759 + $0x3d0] sm:$0xff]
        %v2823 = vld [vmem:[%s2759 + $0x3d8] sm:$0xf]
        %v2824 = vld [vmem:[%s2759 + $0x400] sm:$0xff]
        %v2825 = vld [vmem:[%s2759 + $0x408] sm:$0xff]
        %v2826 = vld [vmem:[%s2759 + $0x410] sm:$0xff]
        %v2827 = vld [vmem:[%s2759 + $0x418] sm:$0xf]
        %v2828 = vld [vmem:[%s2759 + $0x440] sm:$0xff]
        %v2829 = vld [vmem:[%s2759 + $0x448] sm:$0xff]
        %v2830 = vld [vmem:[%s2759 + $0x450] sm:$0xff]
        %v2831 = vld [vmem:[%s2759 + $0x458] sm:$0xf]
        %v2832 = vld [vmem:[%s2759 + $0x480] sm:$0xff]
        %v2833 = vld [vmem:[%s2759 + $0x488] sm:$0xff]
        %v2834 = vld [vmem:[%s2759 + $0x490] sm:$0xff]
        %v2835 = vld [vmem:[%s2759 + $0x498] sm:$0xf]
        %v2836 = vld [vmem:[%s2759 + $0x4c0] sm:$0xff]
        %v2837 = vld [vmem:[%s2759 + $0x4c8] sm:$0xff]
        %v2838 = vld [vmem:[%s2759 + $0x4d0] sm:$0xff]
        %v2839 = vld [vmem:[%s2759 + $0x4d8] sm:$0xf]
        %v2840 = vld [vmem:[%s2759 + $0x500] sm:$0xff]
        %v2841 = vld [vmem:[%s2759 + $0x508] sm:$0xff]
        %v2842 = vld [vmem:[%s2759 + $0x510] sm:$0xff]
        %v2843 = vld [vmem:[%s2759 + $0x518] sm:$0xf]
        %v2844 = vld [vmem:[%s2759 + $0x540] sm:$0xff]
        %v2845 = vld [vmem:[%s2759 + $0x548] sm:$0xff]
        %v2846 = vld [vmem:[%s2759 + $0x550] sm:$0xff]
        %v2847 = vld [vmem:[%s2759 + $0x558] sm:$0xf]
        %v2848 = vld [vmem:[%s2759 + $0x580] sm:$0xff]
        %v2849 = vld [vmem:[%s2759 + $0x588] sm:$0xff]
        %v2850 = vld [vmem:[%s2759 + $0x590] sm:$0xff]
        %v2851 = vld [vmem:[%s2759 + $0x598] sm:$0xf]
        %v2852 = vld [vmem:[%s2759 + $0x5c0] sm:$0xff]
        %v2853 = vld [vmem:[%s2759 + $0x5c8] sm:$0xff]
        %v2854 = vld [vmem:[%s2759 + $0x5d0] sm:$0xff]
        %v2855 = vld [vmem:[%s2759 + $0x5d8] sm:$0xf]
        %v2856 = vld [vmem:[%s2759 + $0x600] sm:$0xff]
        %v2857 = vld [vmem:[%s2759 + $0x608] sm:$0xff]
        %v2858 = vld [vmem:[%s2759 + $0x610] sm:$0xff]
        %v2859 = vld [vmem:[%s2759 + $0x618] sm:$0xf]
        %v2860 = vld [vmem:[%s2759 + $0x640] sm:$0xff]
        %v2861 = vld [vmem:[%s2759 + $0x648] sm:$0xff]
        %v2862 = vld [vmem:[%s2759 + $0x650] sm:$0xff]
        %v2863 = vld [vmem:[%s2759 + $0x658] sm:$0xf]
        %v2864 = vld [vmem:[%s2759 + $0x680] sm:$0xff]
        %v2865 = vld [vmem:[%s2759 + $0x688] sm:$0xff]
        %v2866 = vld [vmem:[%s2759 + $0x690] sm:$0xff]
        %v2867 = vld [vmem:[%s2759 + $0x698] sm:$0xf]
        %v2868 = vld [vmem:[%s2759 + $0x6c0] sm:$0xff]
        %v2869 = vld [vmem:[%s2759 + $0x6c8] sm:$0xff]
        %v2870 = vld [vmem:[%s2759 + $0x6d0] sm:$0xff]
        %v2871 = vld [vmem:[%s2759 + $0x6d8] sm:$0xf]
        %v2872 = vld [vmem:[%s2759 + $0x700] sm:$0xff]
        %v2873 = vld [vmem:[%s2759 + $0x708] sm:$0xff]
        %v2874 = vld [vmem:[%s2759 + $0x710] sm:$0xff]
        %v2875 = vld [vmem:[%s2759 + $0x718] sm:$0xf]
        %v2876 = vld [vmem:[%s2759 + $0x740] sm:$0xff]
        %v2877 = vld [vmem:[%s2759 + $0x748] sm:$0xff]
        %v2878 = vld [vmem:[%s2759 + $0x750] sm:$0xff]
        %v2879 = vld [vmem:[%s2759 + $0x758] sm:$0xf]
        %v2880 = vld [vmem:[%s2759 + $0x780] sm:$0xff]
        %v2881 = vld [vmem:[%s2759 + $0x788] sm:$0xff]
        %v2882 = vld [vmem:[%s2759 + $0x790] sm:$0xff]
        %v2883 = vld [vmem:[%s2759 + $0x798] sm:$0xf]
        %v2884 = vld [vmem:[%s2759 + $0x7c0] sm:$0xff]
        %v2885 = vld [vmem:[%s2759 + $0x7c8] sm:$0xff]
        %v2886 = vld [vmem:[%s2759 + $0x7d0] sm:$0xff]
        %v2887 = vld [vmem:[%s2759 + $0x7d8] sm:$0xf]
        %v2888 = vld [vmem:[%s2759 + $0x800] sm:$0xff]
        %v2889 = vld [vmem:[%s2759 + $0x808] sm:$0xff]
        %v2890 = vld [vmem:[%s2759 + $0x810] sm:$0xff]
        %v2891 = vld [vmem:[%s2759 + $0x818] sm:$0xf]
        %v2892 = vld [vmem:[%s2759 + $0x840] sm:$0xff]
        %v2893 = vld [vmem:[%s2759 + $0x848] sm:$0xff]
        %v2894 = vld [vmem:[%s2759 + $0x850] sm:$0xff]
        %v2895 = vld [vmem:[%s2759 + $0x858] sm:$0xf]
        %v2896 = vld [vmem:[%s2759 + $0x880] sm:$0xff]
        %v2897 = vld [vmem:[%s2759 + $0x888] sm:$0xff]
        %v2898 = vld [vmem:[%s2759 + $0x890] sm:$0xff]
        %v2899 = vld [vmem:[%s2759 + $0x898] sm:$0xf]
        %v2900 = vld [vmem:[%s2759 + $0x8c0] sm:$0xff]
        %v2901 = vld [vmem:[%s2759 + $0x8c8] sm:$0xff]
        %v2902 = vld [vmem:[%s2759 + $0x8d0] sm:$0xff]
        %v2903 = vld [vmem:[%s2759 + $0x8d8] sm:$0xf]
        %v2904 = vld [vmem:[%s2759 + $0x900] sm:$0xff]
        %v2905 = vld [vmem:[%s2759 + $0x908] sm:$0xff]
        %v2906 = vld [vmem:[%s2759 + $0x910] sm:$0xff]
        %v2907 = vld [vmem:[%s2759 + $0x918] sm:$0xf]
        %v2908 = vld [vmem:[%s2759 + $0x940] sm:$0xff]
        %v2909 = vld [vmem:[%s2759 + $0x948] sm:$0xff]
        %v2910 = vld [vmem:[%s2759 + $0x950] sm:$0xff]
        %v2911 = vld [vmem:[%s2759 + $0x958] sm:$0xf]
        %v2912 = vld [vmem:[%s2759 + $0x980] sm:$0xff]
        %v2913 = vld [vmem:[%s2759 + $0x988] sm:$0xff]
        %v2914 = vld [vmem:[%s2759 + $0x990] sm:$0xff]
        %v2915 = vld [vmem:[%s2759 + $0x998] sm:$0xf]
        %v2916 = vld [vmem:[%s2759 + $0x9c0] sm:$0xff]
        %v2917 = vld [vmem:[%s2759 + $0x9c8] sm:$0xff]
        %v2918 = vld [vmem:[%s2759 + $0x9d0] sm:$0xff]
        %v2919 = vld [vmem:[%s2759 + $0x9d8] sm:$0xf]
        %v2920 = vld [vmem:[%s2759 + $0xa00] sm:$0xff]
        %v2921 = vld [vmem:[%s2759 + $0xa08] sm:$0xff]
        %v2922 = vld [vmem:[%s2759 + $0xa10] sm:$0xff]
        %v2923 = vld [vmem:[%s2759 + $0xa18] sm:$0xf]
        %v2924 = vld [vmem:[%s2759 + $0xa40] sm:$0xff]
        %v2925 = vld [vmem:[%s2759 + $0xa48] sm:$0xff]
        %v2926 = vld [vmem:[%s2759 + $0xa50] sm:$0xff]
        %v2927 = vld [vmem:[%s2759 + $0xa58] sm:$0xf]
        %v2928 = vld [vmem:[%s2759 + $0xa80] sm:$0xff]
        %v2929 = vld [vmem:[%s2759 + $0xa88] sm:$0xff]
        %v2930 = vld [vmem:[%s2759 + $0xa90] sm:$0xff]
        %v2931 = vld [vmem:[%s2759 + $0xa98] sm:$0xf]
        %v2932 = vld [vmem:[%s2759 + $0xac0] sm:$0xff]
        %v2933 = vld [vmem:[%s2759 + $0xac8] sm:$0xff]
        %v2934 = vld [vmem:[%s2759 + $0xad0] sm:$0xff]
        %v2935 = vld [vmem:[%s2759 + $0xad8] sm:$0xf]
        %v2936 = vld [vmem:[%s2759 + $0xb00] sm:$0xff]
        %v2937 = vld [vmem:[%s2759 + $0xb08] sm:$0xff]
        %v2938 = vld [vmem:[%s2759 + $0xb10] sm:$0xff]
        %v2939 = vld [vmem:[%s2759 + $0xb18] sm:$0xf]
        %v2940 = vld [vmem:[%s2759 + $0xb40] sm:$0xff]
        %v2941 = vld [vmem:[%s2759 + $0xb48] sm:$0xff]
        %v2942 = vld [vmem:[%s2759 + $0xb50] sm:$0xff]
        %v2943 = vld [vmem:[%s2759 + $0xb58] sm:$0xf]
        %v2944 = vld [vmem:[%s2759 + $0xb80] sm:$0xff]
        %v2945 = vld [vmem:[%s2759 + $0xb88] sm:$0xff]
        %v2946 = vld [vmem:[%s2759 + $0xb90] sm:$0xff]
        %v2947 = vld [vmem:[%s2759 + $0xb98] sm:$0xf]
        %v2948 = vld [vmem:[%s2759 + $0xbc0] sm:$0xff]
        %v2949 = vld [vmem:[%s2759 + $0xbc8] sm:$0xff]
        %v2950 = vld [vmem:[%s2759 + $0xbd0] sm:$0xff]
        %v2951 = vld [vmem:[%s2759 + $0xbd8] sm:$0xf]
        %v2952 = vld [vmem:[%s2759 + $0xc00] sm:$0xff]
        %v2953 = vld [vmem:[%s2759 + $0xc08] sm:$0xff]
        %v2954 = vld [vmem:[%s2759 + $0xc10] sm:$0xff]
        %v2955 = vld [vmem:[%s2759 + $0xc18] sm:$0xf]
        %v2956 = vld [vmem:[%s2759 + $0xc40] sm:$0xff]
        %v2957 = vld [vmem:[%s2759 + $0xc48] sm:$0xff]
        %v2958 = vld [vmem:[%s2759 + $0xc50] sm:$0xff]
        %v2959 = vld [vmem:[%s2759 + $0xc58] sm:$0xf]
        %v2960 = vld [vmem:[%s2759 + $0xc80] sm:$0xff]
        %v2961 = vld [vmem:[%s2759 + $0xc88] sm:$0xff]
        %v2962 = vld [vmem:[%s2759 + $0xc90] sm:$0xff]
        %v2963 = vld [vmem:[%s2759 + $0xc98] sm:$0xf]
        %v2964 = vld [vmem:[%s2759 + $0xcc0] sm:$0xff]
        %v2965 = vld [vmem:[%s2759 + $0xcc8] sm:$0xff]
        %v2966 = vld [vmem:[%s2759 + $0xcd0] sm:$0xff]
        %v2967 = vld [vmem:[%s2759 + $0xcd8] sm:$0xf]
        %v2968 = vld [vmem:[%s2759 + $0xd00] sm:$0xff]
        %v2969 = vld [vmem:[%s2759 + $0xd08] sm:$0xff]
        %v2970 = vld [vmem:[%s2759 + $0xd10] sm:$0xff]
        %v2971 = vld [vmem:[%s2759 + $0xd18] sm:$0xf]
        %v2972 = vld [vmem:[%s2759 + $0xd40] sm:$0xff]
        %v2973 = vld [vmem:[%s2759 + $0xd48] sm:$0xff]
        %v2974 = vld [vmem:[%s2759 + $0xd50] sm:$0xff]
        %v2975 = vld [vmem:[%s2759 + $0xd58] sm:$0xf]
        %v2976 = vld [vmem:[%s2759 + $0xd80] sm:$0xff]
        %v2977 = vld [vmem:[%s2759 + $0xd88] sm:$0xff]
        %v2978 = vld [vmem:[%s2759 + $0xd90] sm:$0xff]
        %v2979 = vld [vmem:[%s2759 + $0xd98] sm:$0xf]
        %v2980 = vld [vmem:[%s2759 + $0xdc0] sm:$0xff]
        %v2981 = vld [vmem:[%s2759 + $0xdc8] sm:$0xff]
        %v2982 = vld [vmem:[%s2759 + $0xdd0] sm:$0xff]
        %v2983 = vld [vmem:[%s2759 + $0xdd8] sm:$0xf]
        %v2984 = vld [vmem:[%s2759 + $0xe00] sm:$0xff]
        %v2985 = vld [vmem:[%s2759 + $0xe08] sm:$0xff]
        %v2986 = vld [vmem:[%s2759 + $0xe10] sm:$0xff]
        %v2987 = vld [vmem:[%s2759 + $0xe18] sm:$0xf]
        %v2988 = vld [vmem:[%s2759 + $0xe40] sm:$0xff]
        %v2989 = vld [vmem:[%s2759 + $0xe48] sm:$0xff]
        %v2990 = vld [vmem:[%s2759 + $0xe50] sm:$0xff]
        %v2991 = vld [vmem:[%s2759 + $0xe58] sm:$0xf]
        %v2992 = vld [vmem:[%s2759 + $0xe80] sm:$0xff]
        %v2993 = vld [vmem:[%s2759 + $0xe88] sm:$0xff]
        %v2994 = vld [vmem:[%s2759 + $0xe90] sm:$0xff]
        %v2995 = vld [vmem:[%s2759 + $0xe98] sm:$0xf]
        %v2996 = vld [vmem:[%s2759 + $0xec0] sm:$0xff]
        %v2997 = vld [vmem:[%s2759 + $0xec8] sm:$0xff]
        %v2998 = vld [vmem:[%s2759 + $0xed0] sm:$0xff]
        %v2999 = vld [vmem:[%s2759 + $0xed8] sm:$0xf]
        %v3000 = vld [vmem:[%s2759 + $0xf00] sm:$0xff]
        %v3001 = vld [vmem:[%s2759 + $0xf08] sm:$0xff]
        %v3002 = vld [vmem:[%s2759 + $0xf10] sm:$0xff]
        %v3003 = vld [vmem:[%s2759 + $0xf18] sm:$0xf]
        %v3004 = vld [vmem:[%s2759 + $0xf40] sm:$0xff]
        %v3005 = vld [vmem:[%s2759 + $0xf48] sm:$0xff]
        %v3006 = vld [vmem:[%s2759 + $0xf50] sm:$0xff]
        %v3007 = vld [vmem:[%s2759 + $0xf58] sm:$0xf]
        %v3008 = vld [vmem:[%s2759 + $0xf80] sm:$0xff]
        %v3009 = vld [vmem:[%s2759 + $0xf88] sm:$0xff]
        %v3010 = vld [vmem:[%s2759 + $0xf90] sm:$0xff]
        %v3011 = vld [vmem:[%s2759 + $0xf98] sm:$0xf]
        %v3012 = vld [vmem:[%s2759 + $0xfc0] sm:$0xff]
        %v3013 = vld [vmem:[%s2759 + $0xfc8] sm:$0xff]
        %v3014 = vld [vmem:[%s2759 + $0xfd0] sm:$0xff]
        %v3015 = vld [vmem:[%s2759 + $0xfd8] sm:$0xf]
        %v3016 = vld [vmem:[%s2759 + $0x1000] sm:$0xff]
        %v3017 = vld [vmem:[%s2759 + $0x1008] sm:$0xff]
        %v3018 = vld [vmem:[%s2759 + $0x1010] sm:$0xff]
        %v3019 = vld [vmem:[%s2759 + $0x1018] sm:$0xf]
        %v3020 = vld [vmem:[%s2759 + $0x1040] sm:$0xff]
        %v3021 = vld [vmem:[%s2759 + $0x1048] sm:$0xff]
        %v3022 = vld [vmem:[%s2759 + $0x1050] sm:$0xff]
        %v3023 = vld [vmem:[%s2759 + $0x1058] sm:$0xf]
        %v3024 = vld [vmem:[%s2759 + $0x1080] sm:$0xff]
        %v3025 = vld [vmem:[%s2759 + $0x1088] sm:$0xff]
        %v3026 = vld [vmem:[%s2759 + $0x1090] sm:$0xff]
        %v3027 = vld [vmem:[%s2759 + $0x1098] sm:$0xf]
        %v3028 = vld [vmem:[%s2759 + $0x10c0] sm:$0xff]
        %v3029 = vld [vmem:[%s2759 + $0x10c8] sm:$0xff]
        %v3030 = vld [vmem:[%s2759 + $0x10d0] sm:$0xff]
        %v3031 = vld [vmem:[%s2759 + $0x10d8] sm:$0xf]
        %v3032 = vld [vmem:[%s2759 + $0x1100] sm:$0xff]
        %v3033 = vld [vmem:[%s2759 + $0x1108] sm:$0xff]
        %v3034 = vld [vmem:[%s2759 + $0x1110] sm:$0xff]
        %v3035 = vld [vmem:[%s2759 + $0x1118] sm:$0xf]
        %v3036 = vld [vmem:[%s2759 + $0x1140] sm:$0xff]
        %v3037 = vld [vmem:[%s2759 + $0x1148] sm:$0xff]
        %v3038 = vld [vmem:[%s2759 + $0x1150] sm:$0xff]
        %v3039 = vld [vmem:[%s2759 + $0x1158] sm:$0xf]
        %v3040 = vld [vmem:[%s2759 + $0x1180] sm:$0xff]
        %v3041 = vld [vmem:[%s2759 + $0x1188] sm:$0xff]
        %v3042 = vld [vmem:[%s2759 + $0x1190] sm:$0xff]
        %v3043 = vld [vmem:[%s2759 + $0x1198] sm:$0xf]
        %v3044 = vld [vmem:[%s2759 + $0x11c0] sm:$0xff]
        %v3045 = vld [vmem:[%s2759 + $0x11c8] sm:$0xff]
        %v3046 = vld [vmem:[%s2759 + $0x11d0] sm:$0xff]
        %v3047 = vld [vmem:[%s2759 + $0x11d8] sm:$0xf]
        %v3048 = vld [vmem:[%s2759 + $0x1200] sm:$0xff]
        %v3049 = vld [vmem:[%s2759 + $0x1208] sm:$0xff]
        %v3050 = vld [vmem:[%s2759 + $0x1210] sm:$0xff]
        %v3051 = vld [vmem:[%s2759 + $0x1218] sm:$0xf]
        %v3052 = vld [vmem:[%s2759 + $0x1240] sm:$0xff]
        %v3053 = vld [vmem:[%s2759 + $0x1248] sm:$0xff]
        %v3054 = vld [vmem:[%s2759 + $0x1250] sm:$0xff]
        %v3055 = vld [vmem:[%s2759 + $0x1258] sm:$0xf]
        %v3056 = vld [vmem:[%s2759 + $0x1280] sm:$0xff]
        %v3057 = vld [vmem:[%s2759 + $0x1288] sm:$0xff]
        %v3058 = vld [vmem:[%s2759 + $0x1290] sm:$0xff]
        %v3059 = vld [vmem:[%s2759 + $0x1298] sm:$0xf]
        %v3060 = vld [vmem:[%s2759 + $0x12c0] sm:$0xff]
        %v3061 = vld [vmem:[%s2759 + $0x12c8] sm:$0xff]
        %v3062 = vld [vmem:[%s2759 + $0x12d0] sm:$0xff]
        %v3063 = vld [vmem:[%s2759 + $0x12d8] sm:$0xf]
        %v3064 = vld [vmem:[%s2759 + $0x1300] sm:$0xff]
        %v3065 = vld [vmem:[%s2759 + $0x1308] sm:$0xff]
        %v3066 = vld [vmem:[%s2759 + $0x1310] sm:$0xff]
        %v3067 = vld [vmem:[%s2759 + $0x1318] sm:$0xf]
        %v3068 = vld [vmem:[%s2759 + $0x1340] sm:$0xff]
        %v3069 = vld [vmem:[%s2759 + $0x1348] sm:$0xff]
        %v3070 = vld [vmem:[%s2759 + $0x1350] sm:$0xff]
        %v3071 = vld [vmem:[%s2759 + $0x1358] sm:$0xf]
        %v3072 = vld [vmem:[%s2759 + $0x1380] sm:$0xff]
        %v3073 = vld [vmem:[%s2759 + $0x1388] sm:$0xff]
        %v3074 = vld [vmem:[%s2759 + $0x1390] sm:$0xff]
        %v3075 = vld [vmem:[%s2759 + $0x1398] sm:$0xf]
        %v3076 = vld [vmem:[%s2759 + $0x13c0] sm:$0xff]
        %v3077 = vld [vmem:[%s2759 + $0x13c8] sm:$0xff]
        %v3078 = vld [vmem:[%s2759 + $0x13d0] sm:$0xff]
        %v3079 = vld [vmem:[%s2759 + $0x13d8] sm:$0xf]
        %v3080 = vld [vmem:[%s2759 + $0x1400] sm:$0xff]
        %v3081 = vld [vmem:[%s2759 + $0x1408] sm:$0xff]
        %v3082 = vld [vmem:[%s2759 + $0x1410] sm:$0xff]
        %v3083 = vld [vmem:[%s2759 + $0x1418] sm:$0xf]
        %v3084 = vld [vmem:[%s2759 + $0x1440] sm:$0xff]
        %v3085 = vld [vmem:[%s2759 + $0x1448] sm:$0xff]
        %v3086 = vld [vmem:[%s2759 + $0x1450] sm:$0xff]
        %v3087 = vld [vmem:[%s2759 + $0x1458] sm:$0xf]
        %v3088 = vld [vmem:[%s2759 + $0x1480] sm:$0xff]
        %v3089 = vld [vmem:[%s2759 + $0x1488] sm:$0xff]
        %v3090 = vld [vmem:[%s2759 + $0x1490] sm:$0xff]
        %v3091 = vld [vmem:[%s2759 + $0x1498] sm:$0xf]
        %v3092 = vld [vmem:[%s2759 + $0x14c0] sm:$0xff]
        %v3093 = vld [vmem:[%s2759 + $0x14c8] sm:$0xff]
        %v3094 = vld [vmem:[%s2759 + $0x14d0] sm:$0xff]
        %v3095 = vld [vmem:[%s2759 + $0x14d8] sm:$0xf]
        %v3096 = vld [vmem:[%s2759 + $0x1500] sm:$0xff]
        %v3097 = vld [vmem:[%s2759 + $0x1508] sm:$0xff]
        %v3098 = vld [vmem:[%s2759 + $0x1510] sm:$0xff]
        %v3099 = vld [vmem:[%s2759 + $0x1518] sm:$0xf]
        %v3100 = vld [vmem:[%s2759 + $0x1540] sm:$0xff]
        %v3101 = vld [vmem:[%s2759 + $0x1548] sm:$0xff]
        %v3102 = vld [vmem:[%s2759 + $0x1550] sm:$0xff]
        %v3103 = vld [vmem:[%s2759 + $0x1558] sm:$0xf]
        %v3104 = vld [vmem:[%s2759 + $0x1580] sm:$0xff]
        %v3105 = vld [vmem:[%s2759 + $0x1588] sm:$0xff]
        %v3106 = vld [vmem:[%s2759 + $0x1590] sm:$0xff]
        %v3107 = vld [vmem:[%s2759 + $0x1598] sm:$0xf]
        %v3108 = vld [vmem:[%s2759 + $0x15c0] sm:$0xff]
        %v3109 = vld [vmem:[%s2759 + $0x15c8] sm:$0xff]
        %v3110 = vld [vmem:[%s2759 + $0x15d0] sm:$0xff]
        %v3111 = vld [vmem:[%s2759 + $0x15d8] sm:$0xf]
        %v3112 = vld [vmem:[%s2759 + $0x1600] sm:$0xff]
        %v3113 = vld [vmem:[%s2759 + $0x1608] sm:$0xff]
        %v3114 = vld [vmem:[%s2759 + $0x1610] sm:$0xff]
        %v3115 = vld [vmem:[%s2759 + $0x1618] sm:$0xf]
        %v3116 = vld [vmem:[%s2759 + $0x1640] sm:$0xff]
        %v3117 = vld [vmem:[%s2759 + $0x1648] sm:$0xff]
        %v3118 = vld [vmem:[%s2759 + $0x1650] sm:$0xff]
        %v3119 = vld [vmem:[%s2759 + $0x1658] sm:$0xf]
        %v3120 = vld [vmem:[%s2759 + $0x1680] sm:$0xff]
        %v3121 = vld [vmem:[%s2759 + $0x1688] sm:$0xff]
        %v3122 = vld [vmem:[%s2759 + $0x1690] sm:$0xff]
        %v3123 = vld [vmem:[%s2759 + $0x1698] sm:$0xf]
        %v3124 = vld [vmem:[%s2759 + $0x16c0] sm:$0xff]
        %v3125 = vld [vmem:[%s2759 + $0x16c8] sm:$0xff]
        %v3126 = vld [vmem:[%s2759 + $0x16d0] sm:$0xff]
        %v3127 = vld [vmem:[%s2759 + $0x16d8] sm:$0xf]
        %v3128 = vld [vmem:[%s2759 + $0x1700] sm:$0xff]
        %v3129 = vld [vmem:[%s2759 + $0x1708] sm:$0xff]
        %v3130 = vld [vmem:[%s2759 + $0x1710] sm:$0xff]
        %v3131 = vld [vmem:[%s2759 + $0x1718] sm:$0xf]
        %v3132 = vld [vmem:[%s2759 + $0x1740] sm:$0xff]
        %v3133 = vld [vmem:[%s2759 + $0x1748] sm:$0xff]
        %v3134 = vld [vmem:[%s2759 + $0x1750] sm:$0xff]
        %v3135 = vld [vmem:[%s2759 + $0x1758] sm:$0xf]
        %v3136 = vld [vmem:[%s2759 + $0x1780] sm:$0xff]
        %v3137 = vld [vmem:[%s2759 + $0x1788] sm:$0xff]
        %v3138 = vld [vmem:[%s2759 + $0x1790] sm:$0xff]
        %v3139 = vld [vmem:[%s2759 + $0x1798] sm:$0xf]
        %v3140 = vld [vmem:[%s2759 + $0x17c0] sm:$0xff]
        %v3141 = vld [vmem:[%s2759 + $0x17c8] sm:$0xff]
        %v3142 = vld [vmem:[%s2759 + $0x17d0] sm:$0xff]
        %v3143 = vld [vmem:[%s2759 + $0x17d8] sm:$0xf]
        %v3144 = vld [vmem:[%s2759 + $0x1800] sm:$0xff]
        %v3145 = vld [vmem:[%s2759 + $0x1808] sm:$0xff]
        %v3146 = vld [vmem:[%s2759 + $0x1810] sm:$0xff]
        %v3147 = vld [vmem:[%s2759 + $0x1818] sm:$0xf]
        %v3148 = vld [vmem:[%s2759 + $0x1840] sm:$0xff]
        %v3149 = vld [vmem:[%s2759 + $0x1848] sm:$0xff]
        %v3150 = vld [vmem:[%s2759 + $0x1850] sm:$0xff]
        %v3151 = vld [vmem:[%s2759 + $0x1858] sm:$0xf]
        %v3152 = vld [vmem:[%s2759 + $0x1880] sm:$0xff]
        %v3153 = vld [vmem:[%s2759 + $0x1888] sm:$0xff]
        %v3154 = vld [vmem:[%s2759 + $0x1890] sm:$0xff]
        %v3155 = vld [vmem:[%s2759 + $0x1898] sm:$0xf]
        %v3156 = vld [vmem:[%s2759 + $0x18c0] sm:$0xff]
        %v3157 = vld [vmem:[%s2759 + $0x18c8] sm:$0xff]
        %v3158 = vld [vmem:[%s2759 + $0x18d0] sm:$0xff]
        %v3159 = vld [vmem:[%s2759 + $0x18d8] sm:$0xf]
        %v3160 = vld [vmem:[%s2759 + $0x1900] sm:$0xff]
        %v3161 = vld [vmem:[%s2759 + $0x1908] sm:$0xff]
        %v3162 = vld [vmem:[%s2759 + $0x1910] sm:$0xff]
        %v3163 = vld [vmem:[%s2759 + $0x1918] sm:$0xf]
        %v3164 = vld [vmem:[%s2759 + $0x1940] sm:$0xff]
        %v3165 = vld [vmem:[%s2759 + $0x1948] sm:$0xff]
        %v3166 = vld [vmem:[%s2759 + $0x1950] sm:$0xff]
        %v3167 = vld [vmem:[%s2759 + $0x1958] sm:$0xf]
        %v3168 = vld [vmem:[%s2759 + $0x1980] sm:$0xff]
        %v3169 = vld [vmem:[%s2759 + $0x1988] sm:$0xff]
        %v3170 = vld [vmem:[%s2759 + $0x1990] sm:$0xff]
        %v3171 = vld [vmem:[%s2759 + $0x1998] sm:$0xf]
        %v3172 = vld [vmem:[%s2759 + $0x19c0] sm:$0xff]
        %v3173 = vld [vmem:[%s2759 + $0x19c8] sm:$0xff]
        %v3174 = vld [vmem:[%s2759 + $0x19d0] sm:$0xff]
        %v3175 = vld [vmem:[%s2759 + $0x19d8] sm:$0xf]
        %v3176 = vld [vmem:[%s2759 + $0x1a00] sm:$0xff]
        %v3177 = vld [vmem:[%s2759 + $0x1a08] sm:$0xff]
        %v3178 = vld [vmem:[%s2759 + $0x1a10] sm:$0xff]
        %v3179 = vld [vmem:[%s2759 + $0x1a18] sm:$0xf]
        %v3180 = vld [vmem:[%s2759 + $0x1a40] sm:$0xff]
        %v3181 = vld [vmem:[%s2759 + $0x1a48] sm:$0xff]
        %v3182 = vld [vmem:[%s2759 + $0x1a50] sm:$0xff]
        %v3183 = vld [vmem:[%s2759 + $0x1a58] sm:$0xf]
        %v3184 = vld [vmem:[%s2759 + $0x1a80] sm:$0xff]
        %v3185 = vld [vmem:[%s2759 + $0x1a88] sm:$0xff]
        %v3186 = vld [vmem:[%s2759 + $0x1a90] sm:$0xff]
        %v3187 = vld [vmem:[%s2759 + $0x1a98] sm:$0xf]
        %v3188 = vld [vmem:[%s2759 + $0x1ac0] sm:$0xff]
        %v3189 = vld [vmem:[%s2759 + $0x1ac8] sm:$0xff]
        %v3190 = vld [vmem:[%s2759 + $0x1ad0] sm:$0xff]
        %v3191 = vld [vmem:[%s2759 + $0x1ad8] sm:$0xf]
        %v3192 = vld [vmem:[%s2759 + $0x1b00] sm:$0xff]
        %v3193 = vld [vmem:[%s2759 + $0x1b08] sm:$0xff]
        %v3194 = vld [vmem:[%s2759 + $0x1b10] sm:$0xff]
        %v3195 = vld [vmem:[%s2759 + $0x1b18] sm:$0xf]
        %v3196 = vld [vmem:[%s2759 + $0x1b40] sm:$0xff]
        %v3197 = vld [vmem:[%s2759 + $0x1b48] sm:$0xff]
        %v3198 = vld [vmem:[%s2759 + $0x1b50] sm:$0xff]
        %v3199 = vld [vmem:[%s2759 + $0x1b58] sm:$0xf]
        %v3200 = vld [vmem:[%s2759 + $0x1b80] sm:$0xff]
        %v3201 = vld [vmem:[%s2759 + $0x1b88] sm:$0xff]
        %v3202 = vld [vmem:[%s2759 + $0x1b90] sm:$0xff]
        %v3203 = vld [vmem:[%s2759 + $0x1b98] sm:$0xf]
        %v3204 = vld [vmem:[%s2759 + $0x1bc0] sm:$0xff]
        %v3205 = vld [vmem:[%s2759 + $0x1bc8] sm:$0xff]
        %v3206 = vld [vmem:[%s2759 + $0x1bd0] sm:$0xff]
        %v3207 = vld [vmem:[%s2759 + $0x1bd8] sm:$0xf]
        %v3208 = vld [vmem:[%s2759 + $0x1c00] sm:$0xff]
        %v3209 = vld [vmem:[%s2759 + $0x1c08] sm:$0xff]
        %v3210 = vld [vmem:[%s2759 + $0x1c10] sm:$0xff]
        %v3211 = vld [vmem:[%s2759 + $0x1c18] sm:$0xf]
        %v3212 = vld [vmem:[%s2759 + $0x1c40] sm:$0xff]
        %v3213 = vld [vmem:[%s2759 + $0x1c48] sm:$0xff]
        %v3214 = vld [vmem:[%s2759 + $0x1c50] sm:$0xff]
        %v3215 = vld [vmem:[%s2759 + $0x1c58] sm:$0xf]
        %v3216 = vld [vmem:[%s2759 + $0x1c80] sm:$0xff]
        %v3217 = vld [vmem:[%s2759 + $0x1c88] sm:$0xff]
        %v3218 = vld [vmem:[%s2759 + $0x1c90] sm:$0xff]
        %v3219 = vld [vmem:[%s2759 + $0x1c98] sm:$0xf]
        %v3220 = vld [vmem:[%s2759 + $0x1cc0] sm:$0xff]
        %v3221 = vld [vmem:[%s2759 + $0x1cc8] sm:$0xff]
        %v3222 = vld [vmem:[%s2759 + $0x1cd0] sm:$0xff]
        %v3223 = vld [vmem:[%s2759 + $0x1cd8] sm:$0xf]
        %v3224 = vld [vmem:[%s2759 + $0x1d00] sm:$0xff]
        %v3225 = vld [vmem:[%s2759 + $0x1d08] sm:$0xff]
        %v3226 = vld [vmem:[%s2759 + $0x1d10] sm:$0xff]
        %v3227 = vld [vmem:[%s2759 + $0x1d18] sm:$0xf]
        %v3228 = vld [vmem:[%s2759 + $0x1d40] sm:$0xff]
        %v3229 = vld [vmem:[%s2759 + $0x1d48] sm:$0xff]
        %v3230 = vld [vmem:[%s2759 + $0x1d50] sm:$0xff]
        %v3231 = vld [vmem:[%s2759 + $0x1d58] sm:$0xf]
        %v3232 = vld [vmem:[%s2759 + $0x1d80] sm:$0xff]
        %v3233 = vld [vmem:[%s2759 + $0x1d88] sm:$0xff]
        %v3234 = vld [vmem:[%s2759 + $0x1d90] sm:$0xff]
        %v3235 = vld [vmem:[%s2759 + $0x1d98] sm:$0xf]
        %v3236 = vld [vmem:[%s2759 + $0x1dc0] sm:$0xff]
        %v3237 = vld [vmem:[%s2759 + $0x1dc8] sm:$0xff]
        %v3238 = vld [vmem:[%s2759 + $0x1dd0] sm:$0xff]
        %v3239 = vld [vmem:[%s2759 + $0x1dd8] sm:$0xf]
        %v3240 = vld [vmem:[%s2759 + $0x1e00] sm:$0xff]
        %v3241 = vld [vmem:[%s2759 + $0x1e08] sm:$0xff]
        %v3242 = vld [vmem:[%s2759 + $0x1e10] sm:$0xff]
        %v3243 = vld [vmem:[%s2759 + $0x1e18] sm:$0xf]
        %v3244 = vld [vmem:[%s2759 + $0x1e40] sm:$0xff]
        %v3245 = vld [vmem:[%s2759 + $0x1e48] sm:$0xff]
        %v3246 = vld [vmem:[%s2759 + $0x1e50] sm:$0xff]
        %v3247 = vld [vmem:[%s2759 + $0x1e58] sm:$0xf]
        %v3248 = vld [vmem:[%s2759 + $0x1e80] sm:$0xff]
        %v3249 = vld [vmem:[%s2759 + $0x1e88] sm:$0xff]
        %v3250 = vld [vmem:[%s2759 + $0x1e90] sm:$0xff]
        %v3251 = vld [vmem:[%s2759 + $0x1e98] sm:$0xf]
        %v3252 = vld [vmem:[%s2759 + $0x1ec0] sm:$0xff]
        %v3253 = vld [vmem:[%s2759 + $0x1ec8] sm:$0xff]
        %v3254 = vld [vmem:[%s2759 + $0x1ed0] sm:$0xff]
        %v3255 = vld [vmem:[%s2759 + $0x1ed8] sm:$0xf]
        %v3256 = vld [vmem:[%s2759 + $0x1f00] sm:$0xff]
        %v3257 = vld [vmem:[%s2759 + $0x1f08] sm:$0xff]
        %v3258 = vld [vmem:[%s2759 + $0x1f10] sm:$0xff]
        %v3259 = vld [vmem:[%s2759 + $0x1f18] sm:$0xf]
        %v3260 = vld [vmem:[%s2759 + $0x1f40] sm:$0xff]
        %v3261 = vld [vmem:[%s2759 + $0x1f48] sm:$0xff]
        %v3262 = vld [vmem:[%s2759 + $0x1f50] sm:$0xff]
        %v3263 = vld [vmem:[%s2759 + $0x1f58] sm:$0xf]
        %v3264 = vld [vmem:[%s2759 + $0x1f80] sm:$0xff]
        %v3265 = vld [vmem:[%s2759 + $0x1f88] sm:$0xff]
        %v3266 = vld [vmem:[%s2759 + $0x1f90] sm:$0xff]
        %v3267 = vld [vmem:[%s2759 + $0x1f98] sm:$0xf]
        %v3268 = vld [vmem:[%s2759 + $0x1fc0] sm:$0xff]
        %v3269 = vld [vmem:[%s2759 + $0x1fc8] sm:$0xff]
        %v3270 = vld [vmem:[%s2759 + $0x1fd0] sm:$0xff]
        %v3271 = vld [vmem:[%s2759 + $0x1fd8] sm:$0xf]
        %v3272 = vsel %vm742, %v2760, 0.0
        %v3273 = vsel %vm742, %v2761, 0.0
        %v3274 = vadd.f32 %v3272, %v3273
        %v3275 = vsel %vm742, %v2762, 0.0
        %v3276 = vadd.f32 %v3274, %v3275
        %v3277 = vsel %vm748, %v2763, 0.0
        %v3278 = vadd.f32 %v3276, %v3277
        %v3279 = vrot.slane %v3278, 4
        %v3280 = vadd.f32 %v3278, %v3279
        %v3281 = vrot.slane %v3280, 2
        %v3282 = vadd.f32 %v3280, %v3281
        %v3283 = vrot.slane %v3282, 1
        %v3284 = vadd.f32 %v3282, %v3283
        %v3285 = vsel %vm742, %v2764, 0.0
        %v3286 = vsel %vm742, %v2765, 0.0
        %v3287 = vadd.f32 %v3285, %v3286
        %v3288 = vsel %vm742, %v2766, 0.0
        %v3289 = vadd.f32 %v3287, %v3288
        %v3290 = vsel %vm748, %v2767, 0.0
        %v3291 = vadd.f32 %v3289, %v3290
        %v3292 = vrot.slane %v3291, 4
        %v3293 = vadd.f32 %v3291, %v3292
        %v3294 = vrot.slane %v3293, 2
        %v3295 = vadd.f32 %v3293, %v3294
        %v3296 = vrot.slane %v3295, 1
        %v3297 = vadd.f32 %v3295, %v3296
        %v3298 = vsel %vm742, %v2768, 0.0
        %v3299 = vsel %vm742, %v2769, 0.0
        %v3300 = vadd.f32 %v3298, %v3299
        %v3301 = vsel %vm742, %v2770, 0.0
        %v3302 = vadd.f32 %v3300, %v3301
        %v3303 = vsel %vm748, %v2771, 0.0
        %v3304 = vadd.f32 %v3302, %v3303
        %v3305 = vrot.slane %v3304, 4
        %v3306 = vadd.f32 %v3304, %v3305
        %v3307 = vrot.slane %v3306, 2
        %v3308 = vadd.f32 %v3306, %v3307
        %v3309 = vrot.slane %v3308, 1
        %v3310 = vadd.f32 %v3308, %v3309
        %v3311 = vsel %vm742, %v2772, 0.0
        %v3312 = vsel %vm742, %v2773, 0.0
        %v3313 = vadd.f32 %v3311, %v3312
        %v3314 = vsel %vm742, %v2774, 0.0
        %v3315 = vadd.f32 %v3313, %v3314
        %v3316 = vsel %vm748, %v2775, 0.0
        %v3317 = vadd.f32 %v3315, %v3316
        %v3318 = vrot.slane %v3317, 4
        %v3319 = vadd.f32 %v3317, %v3318
        %v3320 = vrot.slane %v3319, 2
        %v3321 = vadd.f32 %v3319, %v3320
        %v3322 = vrot.slane %v3321, 1
        %v3323 = vadd.f32 %v3321, %v3322
        %v3324 = vsel %vm742, %v2776, 0.0
        %v3325 = vsel %vm742, %v2777, 0.0
        %v3326 = vadd.f32 %v3324, %v3325
        %v3327 = vsel %vm742, %v2778, 0.0
        %v3328 = vadd.f32 %v3326, %v3327
        %v3329 = vsel %vm748, %v2779, 0.0
        %v3330 = vadd.f32 %v3328, %v3329
        %v3331 = vrot.slane %v3330, 4
        %v3332 = vadd.f32 %v3330, %v3331
        %v3333 = vrot.slane %v3332, 2
        %v3334 = vadd.f32 %v3332, %v3333
        %v3335 = vrot.slane %v3334, 1
        %v3336 = vadd.f32 %v3334, %v3335
        %v3337 = vsel %vm742, %v2780, 0.0
        %v3338 = vsel %vm742, %v2781, 0.0
        %v3339 = vadd.f32 %v3337, %v3338
        %v3340 = vsel %vm742, %v2782, 0.0
        %v3341 = vadd.f32 %v3339, %v3340
        %v3342 = vsel %vm748, %v2783, 0.0
        %v3343 = vadd.f32 %v3341, %v3342
        %v3344 = vrot.slane %v3343, 4
        %v3345 = vadd.f32 %v3343, %v3344
        %v3346 = vrot.slane %v3345, 2
        %v3347 = vadd.f32 %v3345, %v3346
        %v3348 = vrot.slane %v3347, 1
        %v3349 = vadd.f32 %v3347, %v3348
        %v3350 = vsel %vm742, %v2784, 0.0
        %v3351 = vsel %vm742, %v2785, 0.0
        %v3352 = vadd.f32 %v3350, %v3351
        %v3353 = vsel %vm742, %v2786, 0.0
        %v3354 = vadd.f32 %v3352, %v3353
        %v3355 = vsel %vm748, %v2787, 0.0
        %v3356 = vadd.f32 %v3354, %v3355
        %v3357 = vrot.slane %v3356, 4
        %v3358 = vadd.f32 %v3356, %v3357
        %v3359 = vrot.slane %v3358, 2
        %v3360 = vadd.f32 %v3358, %v3359
        %v3361 = vrot.slane %v3360, 1
        %v3362 = vadd.f32 %v3360, %v3361
        %v3363 = vsel %vm742, %v2788, 0.0
        %v3364 = vsel %vm742, %v2789, 0.0
        %v3365 = vadd.f32 %v3363, %v3364
        %v3366 = vsel %vm742, %v2790, 0.0
        %v3367 = vadd.f32 %v3365, %v3366
        %v3368 = vsel %vm748, %v2791, 0.0
        %v3369 = vadd.f32 %v3367, %v3368
        %v3370 = vrot.slane %v3369, 4
        %v3371 = vadd.f32 %v3369, %v3370
        %v3372 = vrot.slane %v3371, 2
        %v3373 = vadd.f32 %v3371, %v3372
        %v3374 = vrot.slane %v3373, 1
        %v3375 = vadd.f32 %v3373, %v3374
        %v3376 = vsel %vm742, %v2792, 0.0
        %v3377 = vsel %vm742, %v2793, 0.0
        %v3378 = vadd.f32 %v3376, %v3377
        %v3379 = vsel %vm742, %v2794, 0.0
        %v3380 = vadd.f32 %v3378, %v3379
        %v3381 = vsel %vm748, %v2795, 0.0
        %v3382 = vadd.f32 %v3380, %v3381
        %v3383 = vrot.slane %v3382, 4
        %v3384 = vadd.f32 %v3382, %v3383
        %v3385 = vrot.slane %v3384, 2
        %v3386 = vadd.f32 %v3384, %v3385
        %v3387 = vrot.slane %v3386, 1
        %v3388 = vadd.f32 %v3386, %v3387
        %v3389 = vsel %vm742, %v2796, 0.0
        %v3390 = vsel %vm742, %v2797, 0.0
        %v3391 = vadd.f32 %v3389, %v3390
        %v3392 = vsel %vm742, %v2798, 0.0
        %v3393 = vadd.f32 %v3391, %v3392
        %v3394 = vsel %vm748, %v2799, 0.0
        %v3395 = vadd.f32 %v3393, %v3394
        %v3396 = vrot.slane %v3395, 4
        %v3397 = vadd.f32 %v3395, %v3396
        %v3398 = vrot.slane %v3397, 2
        %v3399 = vadd.f32 %v3397, %v3398
        %v3400 = vrot.slane %v3399, 1
        %v3401 = vadd.f32 %v3399, %v3400
        %v3402 = vsel %vm742, %v2800, 0.0
        %v3403 = vsel %vm742, %v2801, 0.0
        %v3404 = vadd.f32 %v3402, %v3403
        %v3405 = vsel %vm742, %v2802, 0.0
        %v3406 = vadd.f32 %v3404, %v3405
        %v3407 = vsel %vm748, %v2803, 0.0
        %v3408 = vadd.f32 %v3406, %v3407
        %v3409 = vrot.slane %v3408, 4
        %v3410 = vadd.f32 %v3408, %v3409
        %v3411 = vrot.slane %v3410, 2
        %v3412 = vadd.f32 %v3410, %v3411
        %v3413 = vrot.slane %v3412, 1
        %v3414 = vadd.f32 %v3412, %v3413
        %v3415 = vsel %vm742, %v2804, 0.0
        %v3416 = vsel %vm742, %v2805, 0.0
        %v3417 = vadd.f32 %v3415, %v3416
        %v3418 = vsel %vm742, %v2806, 0.0
        %v3419 = vadd.f32 %v3417, %v3418
        %v3420 = vsel %vm748, %v2807, 0.0
        %v3421 = vadd.f32 %v3419, %v3420
        %v3422 = vrot.slane %v3421, 4
        %v3423 = vadd.f32 %v3421, %v3422
        %v3424 = vrot.slane %v3423, 2
        %v3425 = vadd.f32 %v3423, %v3424
        %v3426 = vrot.slane %v3425, 1
        %v3427 = vadd.f32 %v3425, %v3426
        %v3428 = vsel %vm742, %v2808, 0.0
        %v3429 = vsel %vm742, %v2809, 0.0
        %v3430 = vadd.f32 %v3428, %v3429
        %v3431 = vsel %vm742, %v2810, 0.0
        %v3432 = vadd.f32 %v3430, %v3431
        %v3433 = vsel %vm748, %v2811, 0.0
        %v3434 = vadd.f32 %v3432, %v3433
        %v3435 = vrot.slane %v3434, 4
        %v3436 = vadd.f32 %v3434, %v3435
        %v3437 = vrot.slane %v3436, 2
        %v3438 = vadd.f32 %v3436, %v3437
        %v3439 = vrot.slane %v3438, 1
        %v3440 = vadd.f32 %v3438, %v3439
        %v3441 = vsel %vm742, %v2812, 0.0
        %v3442 = vsel %vm742, %v2813, 0.0
        %v3443 = vadd.f32 %v3441, %v3442
        %v3444 = vsel %vm742, %v2814, 0.0
        %v3445 = vadd.f32 %v3443, %v3444
        %v3446 = vsel %vm748, %v2815, 0.0
        %v3447 = vadd.f32 %v3445, %v3446
        %v3448 = vrot.slane %v3447, 4
        %v3449 = vadd.f32 %v3447, %v3448
        %v3450 = vrot.slane %v3449, 2
        %v3451 = vadd.f32 %v3449, %v3450
        %v3452 = vrot.slane %v3451, 1
        %v3453 = vadd.f32 %v3451, %v3452
        %v3454 = vsel %vm742, %v2816, 0.0
        %v3455 = vsel %vm742, %v2817, 0.0
        %v3456 = vadd.f32 %v3454, %v3455
        %v3457 = vsel %vm742, %v2818, 0.0
        %v3458 = vadd.f32 %v3456, %v3457
        %v3459 = vsel %vm748, %v2819, 0.0
        %v3460 = vadd.f32 %v3458, %v3459
        %v3461 = vrot.slane %v3460, 4
        %v3462 = vadd.f32 %v3460, %v3461
        %v3463 = vrot.slane %v3462, 2
        %v3464 = vadd.f32 %v3462, %v3463
        %v3465 = vrot.slane %v3464, 1
        %v3466 = vadd.f32 %v3464, %v3465
        %v3467 = vsel %vm742, %v2820, 0.0
        %v3468 = vsel %vm742, %v2821, 0.0
        %v3469 = vadd.f32 %v3467, %v3468
        %v3470 = vsel %vm742, %v2822, 0.0
        %v3471 = vadd.f32 %v3469, %v3470
        %v3472 = vsel %vm748, %v2823, 0.0
        %v3473 = vadd.f32 %v3471, %v3472
        %v3474 = vrot.slane %v3473, 4
        %v3475 = vadd.f32 %v3473, %v3474
        %v3476 = vrot.slane %v3475, 2
        %v3477 = vadd.f32 %v3475, %v3476
        %v3478 = vrot.slane %v3477, 1
        %v3479 = vadd.f32 %v3477, %v3478
        %v3480 = vsel %vm742, %v2824, 0.0
        %v3481 = vsel %vm742, %v2825, 0.0
        %v3482 = vadd.f32 %v3480, %v3481
        %v3483 = vsel %vm742, %v2826, 0.0
        %v3484 = vadd.f32 %v3482, %v3483
        %v3485 = vsel %vm748, %v2827, 0.0
        %v3486 = vadd.f32 %v3484, %v3485
        %v3487 = vrot.slane %v3486, 4
        %v3488 = vadd.f32 %v3486, %v3487
        %v3489 = vrot.slane %v3488, 2
        %v3490 = vadd.f32 %v3488, %v3489
        %v3491 = vrot.slane %v3490, 1
        %v3492 = vadd.f32 %v3490, %v3491
        %v3493 = vsel %vm742, %v2828, 0.0
        %v3494 = vsel %vm742, %v2829, 0.0
        %v3495 = vadd.f32 %v3493, %v3494
        %v3496 = vsel %vm742, %v2830, 0.0
        %v3497 = vadd.f32 %v3495, %v3496
        %v3498 = vsel %vm748, %v2831, 0.0
        %v3499 = vadd.f32 %v3497, %v3498
        %v3500 = vrot.slane %v3499, 4
        %v3501 = vadd.f32 %v3499, %v3500
        %v3502 = vrot.slane %v3501, 2
        %v3503 = vadd.f32 %v3501, %v3502
        %v3504 = vrot.slane %v3503, 1
        %v3505 = vadd.f32 %v3503, %v3504
        %v3506 = vsel %vm742, %v2832, 0.0
        %v3507 = vsel %vm742, %v2833, 0.0
        %v3508 = vadd.f32 %v3506, %v3507
        %v3509 = vsel %vm742, %v2834, 0.0
        %v3510 = vadd.f32 %v3508, %v3509
        %v3511 = vsel %vm748, %v2835, 0.0
        %v3512 = vadd.f32 %v3510, %v3511
        %v3513 = vrot.slane %v3512, 4
        %v3514 = vadd.f32 %v3512, %v3513
        %v3515 = vrot.slane %v3514, 2
        %v3516 = vadd.f32 %v3514, %v3515
        %v3517 = vrot.slane %v3516, 1
        %v3518 = vadd.f32 %v3516, %v3517
        %v3519 = vsel %vm742, %v2836, 0.0
        %v3520 = vsel %vm742, %v2837, 0.0
        %v3521 = vadd.f32 %v3519, %v3520
        %v3522 = vsel %vm742, %v2838, 0.0
        %v3523 = vadd.f32 %v3521, %v3522
        %v3524 = vsel %vm748, %v2839, 0.0
        %v3525 = vadd.f32 %v3523, %v3524
        %v3526 = vrot.slane %v3525, 4
        %v3527 = vadd.f32 %v3525, %v3526
        %v3528 = vrot.slane %v3527, 2
        %v3529 = vadd.f32 %v3527, %v3528
        %v3530 = vrot.slane %v3529, 1
        %v3531 = vadd.f32 %v3529, %v3530
        %v3532 = vsel %vm742, %v2840, 0.0
        %v3533 = vsel %vm742, %v2841, 0.0
        %v3534 = vadd.f32 %v3532, %v3533
        %v3535 = vsel %vm742, %v2842, 0.0
        %v3536 = vadd.f32 %v3534, %v3535
        %v3537 = vsel %vm748, %v2843, 0.0
        %v3538 = vadd.f32 %v3536, %v3537
        %v3539 = vrot.slane %v3538, 4
        %v3540 = vadd.f32 %v3538, %v3539
        %v3541 = vrot.slane %v3540, 2
        %v3542 = vadd.f32 %v3540, %v3541
        %v3543 = vrot.slane %v3542, 1
        %v3544 = vadd.f32 %v3542, %v3543
        %v3545 = vsel %vm742, %v2844, 0.0
        %v3546 = vsel %vm742, %v2845, 0.0
        %v3547 = vadd.f32 %v3545, %v3546
        %v3548 = vsel %vm742, %v2846, 0.0
        %v3549 = vadd.f32 %v3547, %v3548
        %v3550 = vsel %vm748, %v2847, 0.0
        %v3551 = vadd.f32 %v3549, %v3550
        %v3552 = vrot.slane %v3551, 4
        %v3553 = vadd.f32 %v3551, %v3552
        %v3554 = vrot.slane %v3553, 2
        %v3555 = vadd.f32 %v3553, %v3554
        %v3556 = vrot.slane %v3555, 1
        %v3557 = vadd.f32 %v3555, %v3556
        %v3558 = vsel %vm742, %v2848, 0.0
        %v3559 = vsel %vm742, %v2849, 0.0
        %v3560 = vadd.f32 %v3558, %v3559
        %v3561 = vsel %vm742, %v2850, 0.0
        %v3562 = vadd.f32 %v3560, %v3561
        %v3563 = vsel %vm748, %v2851, 0.0
        %v3564 = vadd.f32 %v3562, %v3563
        %v3565 = vrot.slane %v3564, 4
        %v3566 = vadd.f32 %v3564, %v3565
        %v3567 = vrot.slane %v3566, 2
        %v3568 = vadd.f32 %v3566, %v3567
        %v3569 = vrot.slane %v3568, 1
        %v3570 = vadd.f32 %v3568, %v3569
        %v3571 = vsel %vm742, %v2852, 0.0
        %v3572 = vsel %vm742, %v2853, 0.0
        %v3573 = vadd.f32 %v3571, %v3572
        %v3574 = vsel %vm742, %v2854, 0.0
        %v3575 = vadd.f32 %v3573, %v3574
        %v3576 = vsel %vm748, %v2855, 0.0
        %v3577 = vadd.f32 %v3575, %v3576
        %v3578 = vrot.slane %v3577, 4
        %v3579 = vadd.f32 %v3577, %v3578
        %v3580 = vrot.slane %v3579, 2
        %v3581 = vadd.f32 %v3579, %v3580
        %v3582 = vrot.slane %v3581, 1
        %v3583 = vadd.f32 %v3581, %v3582
        %v3584 = vsel %vm742, %v2856, 0.0
        %v3585 = vsel %vm742, %v2857, 0.0
        %v3586 = vadd.f32 %v3584, %v3585
        %v3587 = vsel %vm742, %v2858, 0.0
        %v3588 = vadd.f32 %v3586, %v3587
        %v3589 = vsel %vm748, %v2859, 0.0
        %v3590 = vadd.f32 %v3588, %v3589
        %v3591 = vrot.slane %v3590, 4
        %v3592 = vadd.f32 %v3590, %v3591
        %v3593 = vrot.slane %v3592, 2
        %v3594 = vadd.f32 %v3592, %v3593
        %v3595 = vrot.slane %v3594, 1
        %v3596 = vadd.f32 %v3594, %v3595
        %v3597 = vsel %vm742, %v2860, 0.0
        %v3598 = vsel %vm742, %v2861, 0.0
        %v3599 = vadd.f32 %v3597, %v3598
        %v3600 = vsel %vm742, %v2862, 0.0
        %v3601 = vadd.f32 %v3599, %v3600
        %v3602 = vsel %vm748, %v2863, 0.0
        %v3603 = vadd.f32 %v3601, %v3602
        %v3604 = vrot.slane %v3603, 4
        %v3605 = vadd.f32 %v3603, %v3604
        %v3606 = vrot.slane %v3605, 2
        %v3607 = vadd.f32 %v3605, %v3606
        %v3608 = vrot.slane %v3607, 1
        %v3609 = vadd.f32 %v3607, %v3608
        %v3610 = vsel %vm742, %v2864, 0.0
        %v3611 = vsel %vm742, %v2865, 0.0
        %v3612 = vadd.f32 %v3610, %v3611
        %v3613 = vsel %vm742, %v2866, 0.0
        %v3614 = vadd.f32 %v3612, %v3613
        %v3615 = vsel %vm748, %v2867, 0.0
        %v3616 = vadd.f32 %v3614, %v3615
        %v3617 = vrot.slane %v3616, 4
        %v3618 = vadd.f32 %v3616, %v3617
        %v3619 = vrot.slane %v3618, 2
        %v3620 = vadd.f32 %v3618, %v3619
        %v3621 = vrot.slane %v3620, 1
        %v3622 = vadd.f32 %v3620, %v3621
        %v3623 = vsel %vm742, %v2868, 0.0
        %v3624 = vsel %vm742, %v2869, 0.0
        %v3625 = vadd.f32 %v3623, %v3624
        %v3626 = vsel %vm742, %v2870, 0.0
        %v3627 = vadd.f32 %v3625, %v3626
        %v3628 = vsel %vm748, %v2871, 0.0
        %v3629 = vadd.f32 %v3627, %v3628
        %v3630 = vrot.slane %v3629, 4
        %v3631 = vadd.f32 %v3629, %v3630
        %v3632 = vrot.slane %v3631, 2
        %v3633 = vadd.f32 %v3631, %v3632
        %v3634 = vrot.slane %v3633, 1
        %v3635 = vadd.f32 %v3633, %v3634
        %v3636 = vsel %vm742, %v2872, 0.0
        %v3637 = vsel %vm742, %v2873, 0.0
        %v3638 = vadd.f32 %v3636, %v3637
        %v3639 = vsel %vm742, %v2874, 0.0
        %v3640 = vadd.f32 %v3638, %v3639
        %v3641 = vsel %vm748, %v2875, 0.0
        %v3642 = vadd.f32 %v3640, %v3641
        %v3643 = vrot.slane %v3642, 4
        %v3644 = vadd.f32 %v3642, %v3643
        %v3645 = vrot.slane %v3644, 2
        %v3646 = vadd.f32 %v3644, %v3645
        %v3647 = vrot.slane %v3646, 1
        %v3648 = vadd.f32 %v3646, %v3647
        %v3649 = vsel %vm742, %v2876, 0.0
        %v3650 = vsel %vm742, %v2877, 0.0
        %v3651 = vadd.f32 %v3649, %v3650
        %v3652 = vsel %vm742, %v2878, 0.0
        %v3653 = vadd.f32 %v3651, %v3652
        %v3654 = vsel %vm748, %v2879, 0.0
        %v3655 = vadd.f32 %v3653, %v3654
        %v3656 = vrot.slane %v3655, 4
        %v3657 = vadd.f32 %v3655, %v3656
        %v3658 = vrot.slane %v3657, 2
        %v3659 = vadd.f32 %v3657, %v3658
        %v3660 = vrot.slane %v3659, 1
        %v3661 = vadd.f32 %v3659, %v3660
        %v3662 = vsel %vm742, %v2880, 0.0
        %v3663 = vsel %vm742, %v2881, 0.0
        %v3664 = vadd.f32 %v3662, %v3663
        %v3665 = vsel %vm742, %v2882, 0.0
        %v3666 = vadd.f32 %v3664, %v3665
        %v3667 = vsel %vm748, %v2883, 0.0
        %v3668 = vadd.f32 %v3666, %v3667
        %v3669 = vrot.slane %v3668, 4
        %v3670 = vadd.f32 %v3668, %v3669
        %v3671 = vrot.slane %v3670, 2
        %v3672 = vadd.f32 %v3670, %v3671
        %v3673 = vrot.slane %v3672, 1
        %v3674 = vadd.f32 %v3672, %v3673
        %v3675 = vsel %vm742, %v2884, 0.0
        %v3676 = vsel %vm742, %v2885, 0.0
        %v3677 = vadd.f32 %v3675, %v3676
        %v3678 = vsel %vm742, %v2886, 0.0
        %v3679 = vadd.f32 %v3677, %v3678
        %v3680 = vsel %vm748, %v2887, 0.0
        %v3681 = vadd.f32 %v3679, %v3680
        %v3682 = vrot.slane %v3681, 4
        %v3683 = vadd.f32 %v3681, %v3682
        %v3684 = vrot.slane %v3683, 2
        %v3685 = vadd.f32 %v3683, %v3684
        %v3686 = vrot.slane %v3685, 1
        %v3687 = vadd.f32 %v3685, %v3686
        %v3688 = vsel %vm742, %v2888, 0.0
        %v3689 = vsel %vm742, %v2889, 0.0
        %v3690 = vadd.f32 %v3688, %v3689
        %v3691 = vsel %vm742, %v2890, 0.0
        %v3692 = vadd.f32 %v3690, %v3691
        %v3693 = vsel %vm748, %v2891, 0.0
        %v3694 = vadd.f32 %v3692, %v3693
        %v3695 = vrot.slane %v3694, 4
        %v3696 = vadd.f32 %v3694, %v3695
        %v3697 = vrot.slane %v3696, 2
        %v3698 = vadd.f32 %v3696, %v3697
        %v3699 = vrot.slane %v3698, 1
        %v3700 = vadd.f32 %v3698, %v3699
        %v3701 = vsel %vm742, %v2892, 0.0
        %v3702 = vsel %vm742, %v2893, 0.0
        %v3703 = vadd.f32 %v3701, %v3702
        %v3704 = vsel %vm742, %v2894, 0.0
        %v3705 = vadd.f32 %v3703, %v3704
        %v3706 = vsel %vm748, %v2895, 0.0
        %v3707 = vadd.f32 %v3705, %v3706
        %v3708 = vrot.slane %v3707, 4
        %v3709 = vadd.f32 %v3707, %v3708
        %v3710 = vrot.slane %v3709, 2
        %v3711 = vadd.f32 %v3709, %v3710
        %v3712 = vrot.slane %v3711, 1
        %v3713 = vadd.f32 %v3711, %v3712
        %v3714 = vsel %vm742, %v2896, 0.0
        %v3715 = vsel %vm742, %v2897, 0.0
        %v3716 = vadd.f32 %v3714, %v3715
        %v3717 = vsel %vm742, %v2898, 0.0
        %v3718 = vadd.f32 %v3716, %v3717
        %v3719 = vsel %vm748, %v2899, 0.0
        %v3720 = vadd.f32 %v3718, %v3719
        %v3721 = vrot.slane %v3720, 4
        %v3722 = vadd.f32 %v3720, %v3721
        %v3723 = vrot.slane %v3722, 2
        %v3724 = vadd.f32 %v3722, %v3723
        %v3725 = vrot.slane %v3724, 1
        %v3726 = vadd.f32 %v3724, %v3725
        %v3727 = vsel %vm742, %v2900, 0.0
        %v3728 = vsel %vm742, %v2901, 0.0
        %v3729 = vadd.f32 %v3727, %v3728
        %v3730 = vsel %vm742, %v2902, 0.0
        %v3731 = vadd.f32 %v3729, %v3730
        %v3732 = vsel %vm748, %v2903, 0.0
        %v3733 = vadd.f32 %v3731, %v3732
        %v3734 = vrot.slane %v3733, 4
        %v3735 = vadd.f32 %v3733, %v3734
        %v3736 = vrot.slane %v3735, 2
        %v3737 = vadd.f32 %v3735, %v3736
        %v3738 = vrot.slane %v3737, 1
        %v3739 = vadd.f32 %v3737, %v3738
        %v3740 = vsel %vm742, %v2904, 0.0
        %v3741 = vsel %vm742, %v2905, 0.0
        %v3742 = vadd.f32 %v3740, %v3741
        %v3743 = vsel %vm742, %v2906, 0.0
        %v3744 = vadd.f32 %v3742, %v3743
        %v3745 = vsel %vm748, %v2907, 0.0
        %v3746 = vadd.f32 %v3744, %v3745
        %v3747 = vrot.slane %v3746, 4
        %v3748 = vadd.f32 %v3746, %v3747
        %v3749 = vrot.slane %v3748, 2
        %v3750 = vadd.f32 %v3748, %v3749
        %v3751 = vrot.slane %v3750, 1
        %v3752 = vadd.f32 %v3750, %v3751
        %v3753 = vsel %vm742, %v2908, 0.0
        %v3754 = vsel %vm742, %v2909, 0.0
        %v3755 = vadd.f32 %v3753, %v3754
        %v3756 = vsel %vm742, %v2910, 0.0
        %v3757 = vadd.f32 %v3755, %v3756
        %v3758 = vsel %vm748, %v2911, 0.0
        %v3759 = vadd.f32 %v3757, %v3758
        %v3760 = vrot.slane %v3759, 4
        %v3761 = vadd.f32 %v3759, %v3760
        %v3762 = vrot.slane %v3761, 2
        %v3763 = vadd.f32 %v3761, %v3762
        %v3764 = vrot.slane %v3763, 1
        %v3765 = vadd.f32 %v3763, %v3764
        %v3766 = vsel %vm742, %v2912, 0.0
        %v3767 = vsel %vm742, %v2913, 0.0
        %v3768 = vadd.f32 %v3766, %v3767
        %v3769 = vsel %vm742, %v2914, 0.0
        %v3770 = vadd.f32 %v3768, %v3769
        %v3771 = vsel %vm748, %v2915, 0.0
        %v3772 = vadd.f32 %v3770, %v3771
        %v3773 = vrot.slane %v3772, 4
        %v3774 = vadd.f32 %v3772, %v3773
        %v3775 = vrot.slane %v3774, 2
        %v3776 = vadd.f32 %v3774, %v3775
        %v3777 = vrot.slane %v3776, 1
        %v3778 = vadd.f32 %v3776, %v3777
        %v3779 = vsel %vm742, %v2916, 0.0
        %v3780 = vsel %vm742, %v2917, 0.0
        %v3781 = vadd.f32 %v3779, %v3780
        %v3782 = vsel %vm742, %v2918, 0.0
        %v3783 = vadd.f32 %v3781, %v3782
        %v3784 = vsel %vm748, %v2919, 0.0
        %v3785 = vadd.f32 %v3783, %v3784
        %v3786 = vrot.slane %v3785, 4
        %v3787 = vadd.f32 %v3785, %v3786
        %v3788 = vrot.slane %v3787, 2
        %v3789 = vadd.f32 %v3787, %v3788
        %v3790 = vrot.slane %v3789, 1
        %v3791 = vadd.f32 %v3789, %v3790
        %v3792 = vsel %vm742, %v2920, 0.0
        %v3793 = vsel %vm742, %v2921, 0.0
        %v3794 = vadd.f32 %v3792, %v3793
        %v3795 = vsel %vm742, %v2922, 0.0
        %v3796 = vadd.f32 %v3794, %v3795
        %v3797 = vsel %vm748, %v2923, 0.0
        %v3798 = vadd.f32 %v3796, %v3797
        %v3799 = vrot.slane %v3798, 4
        %v3800 = vadd.f32 %v3798, %v3799
        %v3801 = vrot.slane %v3800, 2
        %v3802 = vadd.f32 %v3800, %v3801
        %v3803 = vrot.slane %v3802, 1
        %v3804 = vadd.f32 %v3802, %v3803
        %v3805 = vsel %vm742, %v2924, 0.0
        %v3806 = vsel %vm742, %v2925, 0.0
        %v3807 = vadd.f32 %v3805, %v3806
        %v3808 = vsel %vm742, %v2926, 0.0
        %v3809 = vadd.f32 %v3807, %v3808
        %v3810 = vsel %vm748, %v2927, 0.0
        %v3811 = vadd.f32 %v3809, %v3810
        %v3812 = vrot.slane %v3811, 4
        %v3813 = vadd.f32 %v3811, %v3812
        %v3814 = vrot.slane %v3813, 2
        %v3815 = vadd.f32 %v3813, %v3814
        %v3816 = vrot.slane %v3815, 1
        %v3817 = vadd.f32 %v3815, %v3816
        %v3818 = vsel %vm742, %v2928, 0.0
        %v3819 = vsel %vm742, %v2929, 0.0
        %v3820 = vadd.f32 %v3818, %v3819
        %v3821 = vsel %vm742, %v2930, 0.0
        %v3822 = vadd.f32 %v3820, %v3821
        %v3823 = vsel %vm748, %v2931, 0.0
        %v3824 = vadd.f32 %v3822, %v3823
        %v3825 = vrot.slane %v3824, 4
        %v3826 = vadd.f32 %v3824, %v3825
        %v3827 = vrot.slane %v3826, 2
        %v3828 = vadd.f32 %v3826, %v3827
        %v3829 = vrot.slane %v3828, 1
        %v3830 = vadd.f32 %v3828, %v3829
        %v3831 = vsel %vm742, %v2932, 0.0
        %v3832 = vsel %vm742, %v2933, 0.0
        %v3833 = vadd.f32 %v3831, %v3832
        %v3834 = vsel %vm742, %v2934, 0.0
        %v3835 = vadd.f32 %v3833, %v3834
        %v3836 = vsel %vm748, %v2935, 0.0
        %v3837 = vadd.f32 %v3835, %v3836
        %v3838 = vrot.slane %v3837, 4
        %v3839 = vadd.f32 %v3837, %v3838
        %v3840 = vrot.slane %v3839, 2
        %v3841 = vadd.f32 %v3839, %v3840
        %v3842 = vrot.slane %v3841, 1
        %v3843 = vadd.f32 %v3841, %v3842
        %v3844 = vsel %vm742, %v2936, 0.0
        %v3845 = vsel %vm742, %v2937, 0.0
        %v3846 = vadd.f32 %v3844, %v3845
        %v3847 = vsel %vm742, %v2938, 0.0
        %v3848 = vadd.f32 %v3846, %v3847
        %v3849 = vsel %vm748, %v2939, 0.0
        %v3850 = vadd.f32 %v3848, %v3849
        %v3851 = vrot.slane %v3850, 4
        %v3852 = vadd.f32 %v3850, %v3851
        %v3853 = vrot.slane %v3852, 2
        %v3854 = vadd.f32 %v3852, %v3853
        %v3855 = vrot.slane %v3854, 1
        %v3856 = vadd.f32 %v3854, %v3855
        %v3857 = vsel %vm742, %v2940, 0.0
        %v3858 = vsel %vm742, %v2941, 0.0
        %v3859 = vadd.f32 %v3857, %v3858
        %v3860 = vsel %vm742, %v2942, 0.0
        %v3861 = vadd.f32 %v3859, %v3860
        %v3862 = vsel %vm748, %v2943, 0.0
        %v3863 = vadd.f32 %v3861, %v3862
        %v3864 = vrot.slane %v3863, 4
        %v3865 = vadd.f32 %v3863, %v3864
        %v3866 = vrot.slane %v3865, 2
        %v3867 = vadd.f32 %v3865, %v3866
        %v3868 = vrot.slane %v3867, 1
        %v3869 = vadd.f32 %v3867, %v3868
        %v3870 = vsel %vm742, %v2944, 0.0
        %v3871 = vsel %vm742, %v2945, 0.0
        %v3872 = vadd.f32 %v3870, %v3871
        %v3873 = vsel %vm742, %v2946, 0.0
        %v3874 = vadd.f32 %v3872, %v3873
        %v3875 = vsel %vm748, %v2947, 0.0
        %v3876 = vadd.f32 %v3874, %v3875
        %v3877 = vrot.slane %v3876, 4
        %v3878 = vadd.f32 %v3876, %v3877
        %v3879 = vrot.slane %v3878, 2
        %v3880 = vadd.f32 %v3878, %v3879
        %v3881 = vrot.slane %v3880, 1
        %v3882 = vadd.f32 %v3880, %v3881
        %v3883 = vsel %vm742, %v2948, 0.0
        %v3884 = vsel %vm742, %v2949, 0.0
        %v3885 = vadd.f32 %v3883, %v3884
        %v3886 = vsel %vm742, %v2950, 0.0
        %v3887 = vadd.f32 %v3885, %v3886
        %v3888 = vsel %vm748, %v2951, 0.0
        %v3889 = vadd.f32 %v3887, %v3888
        %v3890 = vrot.slane %v3889, 4
        %v3891 = vadd.f32 %v3889, %v3890
        %v3892 = vrot.slane %v3891, 2
        %v3893 = vadd.f32 %v3891, %v3892
        %v3894 = vrot.slane %v3893, 1
        %v3895 = vadd.f32 %v3893, %v3894
        %v3896 = vsel %vm742, %v2952, 0.0
        %v3897 = vsel %vm742, %v2953, 0.0
        %v3898 = vadd.f32 %v3896, %v3897
        %v3899 = vsel %vm742, %v2954, 0.0
        %v3900 = vadd.f32 %v3898, %v3899
        %v3901 = vsel %vm748, %v2955, 0.0
        %v3902 = vadd.f32 %v3900, %v3901
        %v3903 = vrot.slane %v3902, 4
        %v3904 = vadd.f32 %v3902, %v3903
        %v3905 = vrot.slane %v3904, 2
        %v3906 = vadd.f32 %v3904, %v3905
        %v3907 = vrot.slane %v3906, 1
        %v3908 = vadd.f32 %v3906, %v3907
        %v3909 = vsel %vm742, %v2956, 0.0
        %v3910 = vsel %vm742, %v2957, 0.0
        %v3911 = vadd.f32 %v3909, %v3910
        %v3912 = vsel %vm742, %v2958, 0.0
        %v3913 = vadd.f32 %v3911, %v3912
        %v3914 = vsel %vm748, %v2959, 0.0
        %v3915 = vadd.f32 %v3913, %v3914
        %v3916 = vrot.slane %v3915, 4
        %v3917 = vadd.f32 %v3915, %v3916
        %v3918 = vrot.slane %v3917, 2
        %v3919 = vadd.f32 %v3917, %v3918
        %v3920 = vrot.slane %v3919, 1
        %v3921 = vadd.f32 %v3919, %v3920
        %v3922 = vsel %vm742, %v2960, 0.0
        %v3923 = vsel %vm742, %v2961, 0.0
        %v3924 = vadd.f32 %v3922, %v3923
        %v3925 = vsel %vm742, %v2962, 0.0
        %v3926 = vadd.f32 %v3924, %v3925
        %v3927 = vsel %vm748, %v2963, 0.0
        %v3928 = vadd.f32 %v3926, %v3927
        %v3929 = vrot.slane %v3928, 4
        %v3930 = vadd.f32 %v3928, %v3929
        %v3931 = vrot.slane %v3930, 2
        %v3932 = vadd.f32 %v3930, %v3931
        %v3933 = vrot.slane %v3932, 1
        %v3934 = vadd.f32 %v3932, %v3933
        %v3935 = vsel %vm742, %v2964, 0.0
        %v3936 = vsel %vm742, %v2965, 0.0
        %v3937 = vadd.f32 %v3935, %v3936
        %v3938 = vsel %vm742, %v2966, 0.0
        %v3939 = vadd.f32 %v3937, %v3938
        %v3940 = vsel %vm748, %v2967, 0.0
        %v3941 = vadd.f32 %v3939, %v3940
        %v3942 = vrot.slane %v3941, 4
        %v3943 = vadd.f32 %v3941, %v3942
        %v3944 = vrot.slane %v3943, 2
        %v3945 = vadd.f32 %v3943, %v3944
        %v3946 = vrot.slane %v3945, 1
        %v3947 = vadd.f32 %v3945, %v3946
        %v3948 = vsel %vm742, %v2968, 0.0
        %v3949 = vsel %vm742, %v2969, 0.0
        %v3950 = vadd.f32 %v3948, %v3949
        %v3951 = vsel %vm742, %v2970, 0.0
        %v3952 = vadd.f32 %v3950, %v3951
        %v3953 = vsel %vm748, %v2971, 0.0
        %v3954 = vadd.f32 %v3952, %v3953
        %v3955 = vrot.slane %v3954, 4
        %v3956 = vadd.f32 %v3954, %v3955
        %v3957 = vrot.slane %v3956, 2
        %v3958 = vadd.f32 %v3956, %v3957
        %v3959 = vrot.slane %v3958, 1
        %v3960 = vadd.f32 %v3958, %v3959
        %v3961 = vsel %vm742, %v2972, 0.0
        %v3962 = vsel %vm742, %v2973, 0.0
        %v3963 = vadd.f32 %v3961, %v3962
        %v3964 = vsel %vm742, %v2974, 0.0
        %v3965 = vadd.f32 %v3963, %v3964
        %v3966 = vsel %vm748, %v2975, 0.0
        %v3967 = vadd.f32 %v3965, %v3966
        %v3968 = vrot.slane %v3967, 4
        %v3969 = vadd.f32 %v3967, %v3968
        %v3970 = vrot.slane %v3969, 2
        %v3971 = vadd.f32 %v3969, %v3970
        %v3972 = vrot.slane %v3971, 1
        %v3973 = vadd.f32 %v3971, %v3972
        %v3974 = vsel %vm742, %v2976, 0.0
        %v3975 = vsel %vm742, %v2977, 0.0
        %v3976 = vadd.f32 %v3974, %v3975
        %v3977 = vsel %vm742, %v2978, 0.0
        %v3978 = vadd.f32 %v3976, %v3977
        %v3979 = vsel %vm748, %v2979, 0.0
        %v3980 = vadd.f32 %v3978, %v3979
        %v3981 = vrot.slane %v3980, 4
        %v3982 = vadd.f32 %v3980, %v3981
        %v3983 = vrot.slane %v3982, 2
        %v3984 = vadd.f32 %v3982, %v3983
        %v3985 = vrot.slane %v3984, 1
        %v3986 = vadd.f32 %v3984, %v3985
        %v3987 = vsel %vm742, %v2980, 0.0
        %v3988 = vsel %vm742, %v2981, 0.0
        %v3989 = vadd.f32 %v3987, %v3988
        %v3990 = vsel %vm742, %v2982, 0.0
        %v3991 = vadd.f32 %v3989, %v3990
        %v3992 = vsel %vm748, %v2983, 0.0
        %v3993 = vadd.f32 %v3991, %v3992
        %v3994 = vrot.slane %v3993, 4
        %v3995 = vadd.f32 %v3993, %v3994
        %v3996 = vrot.slane %v3995, 2
        %v3997 = vadd.f32 %v3995, %v3996
        %v3998 = vrot.slane %v3997, 1
        %v3999 = vadd.f32 %v3997, %v3998
        %v4000 = vsel %vm742, %v2984, 0.0
        %v4001 = vsel %vm742, %v2985, 0.0
        %v4002 = vadd.f32 %v4000, %v4001
        %v4003 = vsel %vm742, %v2986, 0.0
        %v4004 = vadd.f32 %v4002, %v4003
        %v4005 = vsel %vm748, %v2987, 0.0
        %v4006 = vadd.f32 %v4004, %v4005
        %v4007 = vrot.slane %v4006, 4
        %v4008 = vadd.f32 %v4006, %v4007
        %v4009 = vrot.slane %v4008, 2
        %v4010 = vadd.f32 %v4008, %v4009
        %v4011 = vrot.slane %v4010, 1
        %v4012 = vadd.f32 %v4010, %v4011
        %v4013 = vsel %vm742, %v2988, 0.0
        %v4014 = vsel %vm742, %v2989, 0.0
        %v4015 = vadd.f32 %v4013, %v4014
        %v4016 = vsel %vm742, %v2990, 0.0
        %v4017 = vadd.f32 %v4015, %v4016
        %v4018 = vsel %vm748, %v2991, 0.0
        %v4019 = vadd.f32 %v4017, %v4018
        %v4020 = vrot.slane %v4019, 4
        %v4021 = vadd.f32 %v4019, %v4020
        %v4022 = vrot.slane %v4021, 2
        %v4023 = vadd.f32 %v4021, %v4022
        %v4024 = vrot.slane %v4023, 1
        %v4025 = vadd.f32 %v4023, %v4024
        %v4026 = vsel %vm742, %v2992, 0.0
        %v4027 = vsel %vm742, %v2993, 0.0
        %v4028 = vadd.f32 %v4026, %v4027
        %v4029 = vsel %vm742, %v2994, 0.0
        %v4030 = vadd.f32 %v4028, %v4029
        %v4031 = vsel %vm748, %v2995, 0.0
        %v4032 = vadd.f32 %v4030, %v4031
        %v4033 = vrot.slane %v4032, 4
        %v4034 = vadd.f32 %v4032, %v4033
        %v4035 = vrot.slane %v4034, 2
        %v4036 = vadd.f32 %v4034, %v4035
        %v4037 = vrot.slane %v4036, 1
        %v4038 = vadd.f32 %v4036, %v4037
        %v4039 = vsel %vm742, %v2996, 0.0
        %v4040 = vsel %vm742, %v2997, 0.0
        %v4041 = vadd.f32 %v4039, %v4040
        %v4042 = vsel %vm742, %v2998, 0.0
        %v4043 = vadd.f32 %v4041, %v4042
        %v4044 = vsel %vm748, %v2999, 0.0
        %v4045 = vadd.f32 %v4043, %v4044
        %v4046 = vrot.slane %v4045, 4
        %v4047 = vadd.f32 %v4045, %v4046
        %v4048 = vrot.slane %v4047, 2
        %v4049 = vadd.f32 %v4047, %v4048
        %v4050 = vrot.slane %v4049, 1
        %v4051 = vadd.f32 %v4049, %v4050
        %v4052 = vsel %vm742, %v3000, 0.0
        %v4053 = vsel %vm742, %v3001, 0.0
        %v4054 = vadd.f32 %v4052, %v4053
        %v4055 = vsel %vm742, %v3002, 0.0
        %v4056 = vadd.f32 %v4054, %v4055
        %v4057 = vsel %vm748, %v3003, 0.0
        %v4058 = vadd.f32 %v4056, %v4057
        %v4059 = vrot.slane %v4058, 4
        %v4060 = vadd.f32 %v4058, %v4059
        %v4061 = vrot.slane %v4060, 2
        %v4062 = vadd.f32 %v4060, %v4061
        %v4063 = vrot.slane %v4062, 1
        %v4064 = vadd.f32 %v4062, %v4063
        %v4065 = vsel %vm742, %v3004, 0.0
        %v4066 = vsel %vm742, %v3005, 0.0
        %v4067 = vadd.f32 %v4065, %v4066
        %v4068 = vsel %vm742, %v3006, 0.0
        %v4069 = vadd.f32 %v4067, %v4068
        %v4070 = vsel %vm748, %v3007, 0.0
        %v4071 = vadd.f32 %v4069, %v4070
        %v4072 = vrot.slane %v4071, 4
        %v4073 = vadd.f32 %v4071, %v4072
        %v4074 = vrot.slane %v4073, 2
        %v4075 = vadd.f32 %v4073, %v4074
        %v4076 = vrot.slane %v4075, 1
        %v4077 = vadd.f32 %v4075, %v4076
        %v4078 = vsel %vm742, %v3008, 0.0
        %v4079 = vsel %vm742, %v3009, 0.0
        %v4080 = vadd.f32 %v4078, %v4079
        %v4081 = vsel %vm742, %v3010, 0.0
        %v4082 = vadd.f32 %v4080, %v4081
        %v4083 = vsel %vm748, %v3011, 0.0
        %v4084 = vadd.f32 %v4082, %v4083
        %v4085 = vrot.slane %v4084, 4
        %v4086 = vadd.f32 %v4084, %v4085
        %v4087 = vrot.slane %v4086, 2
        %v4088 = vadd.f32 %v4086, %v4087
        %v4089 = vrot.slane %v4088, 1
        %v4090 = vadd.f32 %v4088, %v4089
        %v4091 = vsel %vm742, %v3012, 0.0
        %v4092 = vsel %vm742, %v3013, 0.0
        %v4093 = vadd.f32 %v4091, %v4092
        %v4094 = vsel %vm742, %v3014, 0.0
        %v4095 = vadd.f32 %v4093, %v4094
        %v4096 = vsel %vm748, %v3015, 0.0
        %v4097 = vadd.f32 %v4095, %v4096
        %v4098 = vrot.slane %v4097, 4
        %v4099 = vadd.f32 %v4097, %v4098
        %v4100 = vrot.slane %v4099, 2
        %v4101 = vadd.f32 %v4099, %v4100
        %v4102 = vrot.slane %v4101, 1
        %v4103 = vadd.f32 %v4101, %v4102
        %v4104 = vsel %vm742, %v3016, 0.0
        %v4105 = vsel %vm742, %v3017, 0.0
        %v4106 = vadd.f32 %v4104, %v4105
        %v4107 = vsel %vm742, %v3018, 0.0
        %v4108 = vadd.f32 %v4106, %v4107
        %v4109 = vsel %vm748, %v3019, 0.0
        %v4110 = vadd.f32 %v4108, %v4109
        %v4111 = vrot.slane %v4110, 4
        %v4112 = vadd.f32 %v4110, %v4111
        %v4113 = vrot.slane %v4112, 2
        %v4114 = vadd.f32 %v4112, %v4113
        %v4115 = vrot.slane %v4114, 1
        %v4116 = vadd.f32 %v4114, %v4115
        %v4117 = vsel %vm742, %v3020, 0.0
        %v4118 = vsel %vm742, %v3021, 0.0
        %v4119 = vadd.f32 %v4117, %v4118
        %v4120 = vsel %vm742, %v3022, 0.0
        %v4121 = vadd.f32 %v4119, %v4120
        %v4122 = vsel %vm748, %v3023, 0.0
        %v4123 = vadd.f32 %v4121, %v4122
        %v4124 = vrot.slane %v4123, 4
        %v4125 = vadd.f32 %v4123, %v4124
        %v4126 = vrot.slane %v4125, 2
        %v4127 = vadd.f32 %v4125, %v4126
        %v4128 = vrot.slane %v4127, 1
        %v4129 = vadd.f32 %v4127, %v4128
        %v4130 = vsel %vm742, %v3024, 0.0
        %v4131 = vsel %vm742, %v3025, 0.0
        %v4132 = vadd.f32 %v4130, %v4131
        %v4133 = vsel %vm742, %v3026, 0.0
        %v4134 = vadd.f32 %v4132, %v4133
        %v4135 = vsel %vm748, %v3027, 0.0
        %v4136 = vadd.f32 %v4134, %v4135
        %v4137 = vrot.slane %v4136, 4
        %v4138 = vadd.f32 %v4136, %v4137
        %v4139 = vrot.slane %v4138, 2
        %v4140 = vadd.f32 %v4138, %v4139
        %v4141 = vrot.slane %v4140, 1
        %v4142 = vadd.f32 %v4140, %v4141
        %v4143 = vsel %vm742, %v3028, 0.0
        %v4144 = vsel %vm742, %v3029, 0.0
        %v4145 = vadd.f32 %v4143, %v4144
        %v4146 = vsel %vm742, %v3030, 0.0
        %v4147 = vadd.f32 %v4145, %v4146
        %v4148 = vsel %vm748, %v3031, 0.0
        %v4149 = vadd.f32 %v4147, %v4148
        %v4150 = vrot.slane %v4149, 4
        %v4151 = vadd.f32 %v4149, %v4150
        %v4152 = vrot.slane %v4151, 2
        %v4153 = vadd.f32 %v4151, %v4152
        %v4154 = vrot.slane %v4153, 1
        %v4155 = vadd.f32 %v4153, %v4154
        %v4156 = vsel %vm742, %v3032, 0.0
        %v4157 = vsel %vm742, %v3033, 0.0
        %v4158 = vadd.f32 %v4156, %v4157
        %v4159 = vsel %vm742, %v3034, 0.0
        %v4160 = vadd.f32 %v4158, %v4159
        %v4161 = vsel %vm748, %v3035, 0.0
        %v4162 = vadd.f32 %v4160, %v4161
        %v4163 = vrot.slane %v4162, 4
        %v4164 = vadd.f32 %v4162, %v4163
        %v4165 = vrot.slane %v4164, 2
        %v4166 = vadd.f32 %v4164, %v4165
        %v4167 = vrot.slane %v4166, 1
        %v4168 = vadd.f32 %v4166, %v4167
        %v4169 = vsel %vm742, %v3036, 0.0
        %v4170 = vsel %vm742, %v3037, 0.0
        %v4171 = vadd.f32 %v4169, %v4170
        %v4172 = vsel %vm742, %v3038, 0.0
        %v4173 = vadd.f32 %v4171, %v4172
        %v4174 = vsel %vm748, %v3039, 0.0
        %v4175 = vadd.f32 %v4173, %v4174
        %v4176 = vrot.slane %v4175, 4
        %v4177 = vadd.f32 %v4175, %v4176
        %v4178 = vrot.slane %v4177, 2
        %v4179 = vadd.f32 %v4177, %v4178
        %v4180 = vrot.slane %v4179, 1
        %v4181 = vadd.f32 %v4179, %v4180
        %v4182 = vsel %vm742, %v3040, 0.0
        %v4183 = vsel %vm742, %v3041, 0.0
        %v4184 = vadd.f32 %v4182, %v4183
        %v4185 = vsel %vm742, %v3042, 0.0
        %v4186 = vadd.f32 %v4184, %v4185
        %v4187 = vsel %vm748, %v3043, 0.0
        %v4188 = vadd.f32 %v4186, %v4187
        %v4189 = vrot.slane %v4188, 4
        %v4190 = vadd.f32 %v4188, %v4189
        %v4191 = vrot.slane %v4190, 2
        %v4192 = vadd.f32 %v4190, %v4191
        %v4193 = vrot.slane %v4192, 1
        %v4194 = vadd.f32 %v4192, %v4193
        %v4195 = vsel %vm742, %v3044, 0.0
        %v4196 = vsel %vm742, %v3045, 0.0
        %v4197 = vadd.f32 %v4195, %v4196
        %v4198 = vsel %vm742, %v3046, 0.0
        %v4199 = vadd.f32 %v4197, %v4198
        %v4200 = vsel %vm748, %v3047, 0.0
        %v4201 = vadd.f32 %v4199, %v4200
        %v4202 = vrot.slane %v4201, 4
        %v4203 = vadd.f32 %v4201, %v4202
        %v4204 = vrot.slane %v4203, 2
        %v4205 = vadd.f32 %v4203, %v4204
        %v4206 = vrot.slane %v4205, 1
        %v4207 = vadd.f32 %v4205, %v4206
        %v4208 = vsel %vm742, %v3048, 0.0
        %v4209 = vsel %vm742, %v3049, 0.0
        %v4210 = vadd.f32 %v4208, %v4209
        %v4211 = vsel %vm742, %v3050, 0.0
        %v4212 = vadd.f32 %v4210, %v4211
        %v4213 = vsel %vm748, %v3051, 0.0
        %v4214 = vadd.f32 %v4212, %v4213
        %v4215 = vrot.slane %v4214, 4
        %v4216 = vadd.f32 %v4214, %v4215
        %v4217 = vrot.slane %v4216, 2
        %v4218 = vadd.f32 %v4216, %v4217
        %v4219 = vrot.slane %v4218, 1
        %v4220 = vadd.f32 %v4218, %v4219
        %v4221 = vsel %vm742, %v3052, 0.0
        %v4222 = vsel %vm742, %v3053, 0.0
        %v4223 = vadd.f32 %v4221, %v4222
        %v4224 = vsel %vm742, %v3054, 0.0
        %v4225 = vadd.f32 %v4223, %v4224
        %v4226 = vsel %vm748, %v3055, 0.0
        %v4227 = vadd.f32 %v4225, %v4226
        %v4228 = vrot.slane %v4227, 4
        %v4229 = vadd.f32 %v4227, %v4228
        %v4230 = vrot.slane %v4229, 2
        %v4231 = vadd.f32 %v4229, %v4230
        %v4232 = vrot.slane %v4231, 1
        %v4233 = vadd.f32 %v4231, %v4232
        %v4234 = vsel %vm742, %v3056, 0.0
        %v4235 = vsel %vm742, %v3057, 0.0
        %v4236 = vadd.f32 %v4234, %v4235
        %v4237 = vsel %vm742, %v3058, 0.0
        %v4238 = vadd.f32 %v4236, %v4237
        %v4239 = vsel %vm748, %v3059, 0.0
        %v4240 = vadd.f32 %v4238, %v4239
        %v4241 = vrot.slane %v4240, 4
        %v4242 = vadd.f32 %v4240, %v4241
        %v4243 = vrot.slane %v4242, 2
        %v4244 = vadd.f32 %v4242, %v4243
        %v4245 = vrot.slane %v4244, 1
        %v4246 = vadd.f32 %v4244, %v4245
        %v4247 = vsel %vm742, %v3060, 0.0
        %v4248 = vsel %vm742, %v3061, 0.0
        %v4249 = vadd.f32 %v4247, %v4248
        %v4250 = vsel %vm742, %v3062, 0.0
        %v4251 = vadd.f32 %v4249, %v4250
        %v4252 = vsel %vm748, %v3063, 0.0
        %v4253 = vadd.f32 %v4251, %v4252
        %v4254 = vrot.slane %v4253, 4
        %v4255 = vadd.f32 %v4253, %v4254
        %v4256 = vrot.slane %v4255, 2
        %v4257 = vadd.f32 %v4255, %v4256
        %v4258 = vrot.slane %v4257, 1
        %v4259 = vadd.f32 %v4257, %v4258
        %v4260 = vsel %vm742, %v3064, 0.0
        %v4261 = vsel %vm742, %v3065, 0.0
        %v4262 = vadd.f32 %v4260, %v4261
        %v4263 = vsel %vm742, %v3066, 0.0
        %v4264 = vadd.f32 %v4262, %v4263
        %v4265 = vsel %vm748, %v3067, 0.0
        %v4266 = vadd.f32 %v4264, %v4265
        %v4267 = vrot.slane %v4266, 4
        %v4268 = vadd.f32 %v4266, %v4267
        %v4269 = vrot.slane %v4268, 2
        %v4270 = vadd.f32 %v4268, %v4269
        %v4271 = vrot.slane %v4270, 1
        %v4272 = vadd.f32 %v4270, %v4271
        %v4273 = vsel %vm742, %v3068, 0.0
        %v4274 = vsel %vm742, %v3069, 0.0
        %v4275 = vadd.f32 %v4273, %v4274
        %v4276 = vsel %vm742, %v3070, 0.0
        %v4277 = vadd.f32 %v4275, %v4276
        %v4278 = vsel %vm748, %v3071, 0.0
        %v4279 = vadd.f32 %v4277, %v4278
        %v4280 = vrot.slane %v4279, 4
        %v4281 = vadd.f32 %v4279, %v4280
        %v4282 = vrot.slane %v4281, 2
        %v4283 = vadd.f32 %v4281, %v4282
        %v4284 = vrot.slane %v4283, 1
        %v4285 = vadd.f32 %v4283, %v4284
        %v4286 = vsel %vm742, %v3072, 0.0
        %v4287 = vsel %vm742, %v3073, 0.0
        %v4288 = vadd.f32 %v4286, %v4287
        %v4289 = vsel %vm742, %v3074, 0.0
        %v4290 = vadd.f32 %v4288, %v4289
        %v4291 = vsel %vm748, %v3075, 0.0
        %v4292 = vadd.f32 %v4290, %v4291
        %v4293 = vrot.slane %v4292, 4
        %v4294 = vadd.f32 %v4292, %v4293
        %v4295 = vrot.slane %v4294, 2
        %v4296 = vadd.f32 %v4294, %v4295
        %v4297 = vrot.slane %v4296, 1
        %v4298 = vadd.f32 %v4296, %v4297
        %v4299 = vsel %vm742, %v3076, 0.0
        %v4300 = vsel %vm742, %v3077, 0.0
        %v4301 = vadd.f32 %v4299, %v4300
        %v4302 = vsel %vm742, %v3078, 0.0
        %v4303 = vadd.f32 %v4301, %v4302
        %v4304 = vsel %vm748, %v3079, 0.0
        %v4305 = vadd.f32 %v4303, %v4304
        %v4306 = vrot.slane %v4305, 4
        %v4307 = vadd.f32 %v4305, %v4306
        %v4308 = vrot.slane %v4307, 2
        %v4309 = vadd.f32 %v4307, %v4308
        %v4310 = vrot.slane %v4309, 1
        %v4311 = vadd.f32 %v4309, %v4310
        %v4312 = vsel %vm742, %v3080, 0.0
        %v4313 = vsel %vm742, %v3081, 0.0
        %v4314 = vadd.f32 %v4312, %v4313
        %v4315 = vsel %vm742, %v3082, 0.0
        %v4316 = vadd.f32 %v4314, %v4315
        %v4317 = vsel %vm748, %v3083, 0.0
        %v4318 = vadd.f32 %v4316, %v4317
        %v4319 = vrot.slane %v4318, 4
        %v4320 = vadd.f32 %v4318, %v4319
        %v4321 = vrot.slane %v4320, 2
        %v4322 = vadd.f32 %v4320, %v4321
        %v4323 = vrot.slane %v4322, 1
        %v4324 = vadd.f32 %v4322, %v4323
        %v4325 = vsel %vm742, %v3084, 0.0
        %v4326 = vsel %vm742, %v3085, 0.0
        %v4327 = vadd.f32 %v4325, %v4326
        %v4328 = vsel %vm742, %v3086, 0.0
        %v4329 = vadd.f32 %v4327, %v4328
        %v4330 = vsel %vm748, %v3087, 0.0
        %v4331 = vadd.f32 %v4329, %v4330
        %v4332 = vrot.slane %v4331, 4
        %v4333 = vadd.f32 %v4331, %v4332
        %v4334 = vrot.slane %v4333, 2
        %v4335 = vadd.f32 %v4333, %v4334
        %v4336 = vrot.slane %v4335, 1
        %v4337 = vadd.f32 %v4335, %v4336
        %v4338 = vsel %vm742, %v3088, 0.0
        %v4339 = vsel %vm742, %v3089, 0.0
        %v4340 = vadd.f32 %v4338, %v4339
        %v4341 = vsel %vm742, %v3090, 0.0
        %v4342 = vadd.f32 %v4340, %v4341
        %v4343 = vsel %vm748, %v3091, 0.0
        %v4344 = vadd.f32 %v4342, %v4343
        %v4345 = vrot.slane %v4344, 4
        %v4346 = vadd.f32 %v4344, %v4345
        %v4347 = vrot.slane %v4346, 2
        %v4348 = vadd.f32 %v4346, %v4347
        %v4349 = vrot.slane %v4348, 1
        %v4350 = vadd.f32 %v4348, %v4349
        %v4351 = vsel %vm742, %v3092, 0.0
        %v4352 = vsel %vm742, %v3093, 0.0
        %v4353 = vadd.f32 %v4351, %v4352
        %v4354 = vsel %vm742, %v3094, 0.0
        %v4355 = vadd.f32 %v4353, %v4354
        %v4356 = vsel %vm748, %v3095, 0.0
        %v4357 = vadd.f32 %v4355, %v4356
        %v4358 = vrot.slane %v4357, 4
        %v4359 = vadd.f32 %v4357, %v4358
        %v4360 = vrot.slane %v4359, 2
        %v4361 = vadd.f32 %v4359, %v4360
        %v4362 = vrot.slane %v4361, 1
        %v4363 = vadd.f32 %v4361, %v4362
        %v4364 = vsel %vm742, %v3096, 0.0
        %v4365 = vsel %vm742, %v3097, 0.0
        %v4366 = vadd.f32 %v4364, %v4365
        %v4367 = vsel %vm742, %v3098, 0.0
        %v4368 = vadd.f32 %v4366, %v4367
        %v4369 = vsel %vm748, %v3099, 0.0
        %v4370 = vadd.f32 %v4368, %v4369
        %v4371 = vrot.slane %v4370, 4
        %v4372 = vadd.f32 %v4370, %v4371
        %v4373 = vrot.slane %v4372, 2
        %v4374 = vadd.f32 %v4372, %v4373
        %v4375 = vrot.slane %v4374, 1
        %v4376 = vadd.f32 %v4374, %v4375
        %v4377 = vsel %vm742, %v3100, 0.0
        %v4378 = vsel %vm742, %v3101, 0.0
        %v4379 = vadd.f32 %v4377, %v4378
        %v4380 = vsel %vm742, %v3102, 0.0
        %v4381 = vadd.f32 %v4379, %v4380
        %v4382 = vsel %vm748, %v3103, 0.0
        %v4383 = vadd.f32 %v4381, %v4382
        %v4384 = vrot.slane %v4383, 4
        %v4385 = vadd.f32 %v4383, %v4384
        %v4386 = vrot.slane %v4385, 2
        %v4387 = vadd.f32 %v4385, %v4386
        %v4388 = vrot.slane %v4387, 1
        %v4389 = vadd.f32 %v4387, %v4388
        %v4390 = vsel %vm742, %v3104, 0.0
        %v4391 = vsel %vm742, %v3105, 0.0
        %v4392 = vadd.f32 %v4390, %v4391
        %v4393 = vsel %vm742, %v3106, 0.0
        %v4394 = vadd.f32 %v4392, %v4393
        %v4395 = vsel %vm748, %v3107, 0.0
        %v4396 = vadd.f32 %v4394, %v4395
        %v4397 = vrot.slane %v4396, 4
        %v4398 = vadd.f32 %v4396, %v4397
        %v4399 = vrot.slane %v4398, 2
        %v4400 = vadd.f32 %v4398, %v4399
        %v4401 = vrot.slane %v4400, 1
        %v4402 = vadd.f32 %v4400, %v4401
        %v4403 = vsel %vm742, %v3108, 0.0
        %v4404 = vsel %vm742, %v3109, 0.0
        %v4405 = vadd.f32 %v4403, %v4404
        %v4406 = vsel %vm742, %v3110, 0.0
        %v4407 = vadd.f32 %v4405, %v4406
        %v4408 = vsel %vm748, %v3111, 0.0
        %v4409 = vadd.f32 %v4407, %v4408
        %v4410 = vrot.slane %v4409, 4
        %v4411 = vadd.f32 %v4409, %v4410
        %v4412 = vrot.slane %v4411, 2
        %v4413 = vadd.f32 %v4411, %v4412
        %v4414 = vrot.slane %v4413, 1
        %v4415 = vadd.f32 %v4413, %v4414
        %v4416 = vsel %vm742, %v3112, 0.0
        %v4417 = vsel %vm742, %v3113, 0.0
        %v4418 = vadd.f32 %v4416, %v4417
        %v4419 = vsel %vm742, %v3114, 0.0
        %v4420 = vadd.f32 %v4418, %v4419
        %v4421 = vsel %vm748, %v3115, 0.0
        %v4422 = vadd.f32 %v4420, %v4421
        %v4423 = vrot.slane %v4422, 4
        %v4424 = vadd.f32 %v4422, %v4423
        %v4425 = vrot.slane %v4424, 2
        %v4426 = vadd.f32 %v4424, %v4425
        %v4427 = vrot.slane %v4426, 1
        %v4428 = vadd.f32 %v4426, %v4427
        %v4429 = vsel %vm742, %v3116, 0.0
        %v4430 = vsel %vm742, %v3117, 0.0
        %v4431 = vadd.f32 %v4429, %v4430
        %v4432 = vsel %vm742, %v3118, 0.0
        %v4433 = vadd.f32 %v4431, %v4432
        %v4434 = vsel %vm748, %v3119, 0.0
        %v4435 = vadd.f32 %v4433, %v4434
        %v4436 = vrot.slane %v4435, 4
        %v4437 = vadd.f32 %v4435, %v4436
        %v4438 = vrot.slane %v4437, 2
        %v4439 = vadd.f32 %v4437, %v4438
        %v4440 = vrot.slane %v4439, 1
        %v4441 = vadd.f32 %v4439, %v4440
        %v4442 = vsel %vm742, %v3120, 0.0
        %v4443 = vsel %vm742, %v3121, 0.0
        %v4444 = vadd.f32 %v4442, %v4443
        %v4445 = vsel %vm742, %v3122, 0.0
        %v4446 = vadd.f32 %v4444, %v4445
        %v4447 = vsel %vm748, %v3123, 0.0
        %v4448 = vadd.f32 %v4446, %v4447
        %v4449 = vrot.slane %v4448, 4
        %v4450 = vadd.f32 %v4448, %v4449
        %v4451 = vrot.slane %v4450, 2
        %v4452 = vadd.f32 %v4450, %v4451
        %v4453 = vrot.slane %v4452, 1
        %v4454 = vadd.f32 %v4452, %v4453
        %v4455 = vsel %vm742, %v3124, 0.0
        %v4456 = vsel %vm742, %v3125, 0.0
        %v4457 = vadd.f32 %v4455, %v4456
        %v4458 = vsel %vm742, %v3126, 0.0
        %v4459 = vadd.f32 %v4457, %v4458
        %v4460 = vsel %vm748, %v3127, 0.0
        %v4461 = vadd.f32 %v4459, %v4460
        %v4462 = vrot.slane %v4461, 4
        %v4463 = vadd.f32 %v4461, %v4462
        %v4464 = vrot.slane %v4463, 2
        %v4465 = vadd.f32 %v4463, %v4464
        %v4466 = vrot.slane %v4465, 1
        %v4467 = vadd.f32 %v4465, %v4466
        %v4468 = vsel %vm742, %v3128, 0.0
        %v4469 = vsel %vm742, %v3129, 0.0
        %v4470 = vadd.f32 %v4468, %v4469
        %v4471 = vsel %vm742, %v3130, 0.0
        %v4472 = vadd.f32 %v4470, %v4471
        %v4473 = vsel %vm748, %v3131, 0.0
        %v4474 = vadd.f32 %v4472, %v4473
        %v4475 = vrot.slane %v4474, 4
        %v4476 = vadd.f32 %v4474, %v4475
        %v4477 = vrot.slane %v4476, 2
        %v4478 = vadd.f32 %v4476, %v4477
        %v4479 = vrot.slane %v4478, 1
        %v4480 = vadd.f32 %v4478, %v4479
        %v4481 = vsel %vm742, %v3132, 0.0
        %v4482 = vsel %vm742, %v3133, 0.0
        %v4483 = vadd.f32 %v4481, %v4482
        %v4484 = vsel %vm742, %v3134, 0.0
        %v4485 = vadd.f32 %v4483, %v4484
        %v4486 = vsel %vm748, %v3135, 0.0
        %v4487 = vadd.f32 %v4485, %v4486
        %v4488 = vrot.slane %v4487, 4
        %v4489 = vadd.f32 %v4487, %v4488
        %v4490 = vrot.slane %v4489, 2
        %v4491 = vadd.f32 %v4489, %v4490
        %v4492 = vrot.slane %v4491, 1
        %v4493 = vadd.f32 %v4491, %v4492
        %v4494 = vsel %vm742, %v3136, 0.0
        %v4495 = vsel %vm742, %v3137, 0.0
        %v4496 = vadd.f32 %v4494, %v4495
        %v4497 = vsel %vm742, %v3138, 0.0
        %v4498 = vadd.f32 %v4496, %v4497
        %v4499 = vsel %vm748, %v3139, 0.0
        %v4500 = vadd.f32 %v4498, %v4499
        %v4501 = vrot.slane %v4500, 4
        %v4502 = vadd.f32 %v4500, %v4501
        %v4503 = vrot.slane %v4502, 2
        %v4504 = vadd.f32 %v4502, %v4503
        %v4505 = vrot.slane %v4504, 1
        %v4506 = vadd.f32 %v4504, %v4505
        %v4507 = vsel %vm742, %v3140, 0.0
        %v4508 = vsel %vm742, %v3141, 0.0
        %v4509 = vadd.f32 %v4507, %v4508
        %v4510 = vsel %vm742, %v3142, 0.0
        %v4511 = vadd.f32 %v4509, %v4510
        %v4512 = vsel %vm748, %v3143, 0.0
        %v4513 = vadd.f32 %v4511, %v4512
        %v4514 = vrot.slane %v4513, 4
        %v4515 = vadd.f32 %v4513, %v4514
        %v4516 = vrot.slane %v4515, 2
        %v4517 = vadd.f32 %v4515, %v4516
        %v4518 = vrot.slane %v4517, 1
        %v4519 = vadd.f32 %v4517, %v4518
        %v4520 = vsel %vm742, %v3144, 0.0
        %v4521 = vsel %vm742, %v3145, 0.0
        %v4522 = vadd.f32 %v4520, %v4521
        %v4523 = vsel %vm742, %v3146, 0.0
        %v4524 = vadd.f32 %v4522, %v4523
        %v4525 = vsel %vm748, %v3147, 0.0
        %v4526 = vadd.f32 %v4524, %v4525
        %v4527 = vrot.slane %v4526, 4
        %v4528 = vadd.f32 %v4526, %v4527
        %v4529 = vrot.slane %v4528, 2
        %v4530 = vadd.f32 %v4528, %v4529
        %v4531 = vrot.slane %v4530, 1
        %v4532 = vadd.f32 %v4530, %v4531
        %v4533 = vsel %vm742, %v3148, 0.0
        %v4534 = vsel %vm742, %v3149, 0.0
        %v4535 = vadd.f32 %v4533, %v4534
        %v4536 = vsel %vm742, %v3150, 0.0
        %v4537 = vadd.f32 %v4535, %v4536
        %v4538 = vsel %vm748, %v3151, 0.0
        %v4539 = vadd.f32 %v4537, %v4538
        %v4540 = vrot.slane %v4539, 4
        %v4541 = vadd.f32 %v4539, %v4540
        %v4542 = vrot.slane %v4541, 2
        %v4543 = vadd.f32 %v4541, %v4542
        %v4544 = vrot.slane %v4543, 1
        %v4545 = vadd.f32 %v4543, %v4544
        %v4546 = vsel %vm742, %v3152, 0.0
        %v4547 = vsel %vm742, %v3153, 0.0
        %v4548 = vadd.f32 %v4546, %v4547
        %v4549 = vsel %vm742, %v3154, 0.0
        %v4550 = vadd.f32 %v4548, %v4549
        %v4551 = vsel %vm748, %v3155, 0.0
        %v4552 = vadd.f32 %v4550, %v4551
        %v4553 = vrot.slane %v4552, 4
        %v4554 = vadd.f32 %v4552, %v4553
        %v4555 = vrot.slane %v4554, 2
        %v4556 = vadd.f32 %v4554, %v4555
        %v4557 = vrot.slane %v4556, 1
        %v4558 = vadd.f32 %v4556, %v4557
        %v4559 = vsel %vm742, %v3156, 0.0
        %v4560 = vsel %vm742, %v3157, 0.0
        %v4561 = vadd.f32 %v4559, %v4560
        %v4562 = vsel %vm742, %v3158, 0.0
        %v4563 = vadd.f32 %v4561, %v4562
        %v4564 = vsel %vm748, %v3159, 0.0
        %v4565 = vadd.f32 %v4563, %v4564
        %v4566 = vrot.slane %v4565, 4
        %v4567 = vadd.f32 %v4565, %v4566
        %v4568 = vrot.slane %v4567, 2
        %v4569 = vadd.f32 %v4567, %v4568
        %v4570 = vrot.slane %v4569, 1
        %v4571 = vadd.f32 %v4569, %v4570
        %v4572 = vsel %vm742, %v3160, 0.0
        %v4573 = vsel %vm742, %v3161, 0.0
        %v4574 = vadd.f32 %v4572, %v4573
        %v4575 = vsel %vm742, %v3162, 0.0
        %v4576 = vadd.f32 %v4574, %v4575
        %v4577 = vsel %vm748, %v3163, 0.0
        %v4578 = vadd.f32 %v4576, %v4577
        %v4579 = vrot.slane %v4578, 4
        %v4580 = vadd.f32 %v4578, %v4579
        %v4581 = vrot.slane %v4580, 2
        %v4582 = vadd.f32 %v4580, %v4581
        %v4583 = vrot.slane %v4582, 1
        %v4584 = vadd.f32 %v4582, %v4583
        %v4585 = vsel %vm742, %v3164, 0.0
        %v4586 = vsel %vm742, %v3165, 0.0
        %v4587 = vadd.f32 %v4585, %v4586
        %v4588 = vsel %vm742, %v3166, 0.0
        %v4589 = vadd.f32 %v4587, %v4588
        %v4590 = vsel %vm748, %v3167, 0.0
        %v4591 = vadd.f32 %v4589, %v4590
        %v4592 = vrot.slane %v4591, 4
        %v4593 = vadd.f32 %v4591, %v4592
        %v4594 = vrot.slane %v4593, 2
        %v4595 = vadd.f32 %v4593, %v4594
        %v4596 = vrot.slane %v4595, 1
        %v4597 = vadd.f32 %v4595, %v4596
        %v4598 = vsel %vm742, %v3168, 0.0
        %v4599 = vsel %vm742, %v3169, 0.0
        %v4600 = vadd.f32 %v4598, %v4599
        %v4601 = vsel %vm742, %v3170, 0.0
        %v4602 = vadd.f32 %v4600, %v4601
        %v4603 = vsel %vm748, %v3171, 0.0
        %v4604 = vadd.f32 %v4602, %v4603
        %v4605 = vrot.slane %v4604, 4
        %v4606 = vadd.f32 %v4604, %v4605
        %v4607 = vrot.slane %v4606, 2
        %v4608 = vadd.f32 %v4606, %v4607
        %v4609 = vrot.slane %v4608, 1
        %v4610 = vadd.f32 %v4608, %v4609
        %v4611 = vsel %vm742, %v3172, 0.0
        %v4612 = vsel %vm742, %v3173, 0.0
        %v4613 = vadd.f32 %v4611, %v4612
        %v4614 = vsel %vm742, %v3174, 0.0
        %v4615 = vadd.f32 %v4613, %v4614
        %v4616 = vsel %vm748, %v3175, 0.0
        %v4617 = vadd.f32 %v4615, %v4616
        %v4618 = vrot.slane %v4617, 4
        %v4619 = vadd.f32 %v4617, %v4618
        %v4620 = vrot.slane %v4619, 2
        %v4621 = vadd.f32 %v4619, %v4620
        %v4622 = vrot.slane %v4621, 1
        %v4623 = vadd.f32 %v4621, %v4622
        %v4624 = vsel %vm742, %v3176, 0.0
        %v4625 = vsel %vm742, %v3177, 0.0
        %v4626 = vadd.f32 %v4624, %v4625
        %v4627 = vsel %vm742, %v3178, 0.0
        %v4628 = vadd.f32 %v4626, %v4627
        %v4629 = vsel %vm748, %v3179, 0.0
        %v4630 = vadd.f32 %v4628, %v4629
        %v4631 = vrot.slane %v4630, 4
        %v4632 = vadd.f32 %v4630, %v4631
        %v4633 = vrot.slane %v4632, 2
        %v4634 = vadd.f32 %v4632, %v4633
        %v4635 = vrot.slane %v4634, 1
        %v4636 = vadd.f32 %v4634, %v4635
        %v4637 = vsel %vm742, %v3180, 0.0
        %v4638 = vsel %vm742, %v3181, 0.0
        %v4639 = vadd.f32 %v4637, %v4638
        %v4640 = vsel %vm742, %v3182, 0.0
        %v4641 = vadd.f32 %v4639, %v4640
        %v4642 = vsel %vm748, %v3183, 0.0
        %v4643 = vadd.f32 %v4641, %v4642
        %v4644 = vrot.slane %v4643, 4
        %v4645 = vadd.f32 %v4643, %v4644
        %v4646 = vrot.slane %v4645, 2
        %v4647 = vadd.f32 %v4645, %v4646
        %v4648 = vrot.slane %v4647, 1
        %v4649 = vadd.f32 %v4647, %v4648
        %v4650 = vsel %vm742, %v3184, 0.0
        %v4651 = vsel %vm742, %v3185, 0.0
        %v4652 = vadd.f32 %v4650, %v4651
        %v4653 = vsel %vm742, %v3186, 0.0
        %v4654 = vadd.f32 %v4652, %v4653
        %v4655 = vsel %vm748, %v3187, 0.0
        %v4656 = vadd.f32 %v4654, %v4655
        %v4657 = vrot.slane %v4656, 4
        %v4658 = vadd.f32 %v4656, %v4657
        %v4659 = vrot.slane %v4658, 2
        %v4660 = vadd.f32 %v4658, %v4659
        %v4661 = vrot.slane %v4660, 1
        %v4662 = vadd.f32 %v4660, %v4661
        %v4663 = vsel %vm742, %v3188, 0.0
        %v4664 = vsel %vm742, %v3189, 0.0
        %v4665 = vadd.f32 %v4663, %v4664
        %v4666 = vsel %vm742, %v3190, 0.0
        %v4667 = vadd.f32 %v4665, %v4666
        %v4668 = vsel %vm748, %v3191, 0.0
        %v4669 = vadd.f32 %v4667, %v4668
        %v4670 = vrot.slane %v4669, 4
        %v4671 = vadd.f32 %v4669, %v4670
        %v4672 = vrot.slane %v4671, 2
        %v4673 = vadd.f32 %v4671, %v4672
        %v4674 = vrot.slane %v4673, 1
        %v4675 = vadd.f32 %v4673, %v4674
        %v4676 = vsel %vm742, %v3192, 0.0
        %v4677 = vsel %vm742, %v3193, 0.0
        %v4678 = vadd.f32 %v4676, %v4677
        %v4679 = vsel %vm742, %v3194, 0.0
        %v4680 = vadd.f32 %v4678, %v4679
        %v4681 = vsel %vm748, %v3195, 0.0
        %v4682 = vadd.f32 %v4680, %v4681
        %v4683 = vrot.slane %v4682, 4
        %v4684 = vadd.f32 %v4682, %v4683
        %v4685 = vrot.slane %v4684, 2
        %v4686 = vadd.f32 %v4684, %v4685
        %v4687 = vrot.slane %v4686, 1
        %v4688 = vadd.f32 %v4686, %v4687
        %v4689 = vsel %vm742, %v3196, 0.0
        %v4690 = vsel %vm742, %v3197, 0.0
        %v4691 = vadd.f32 %v4689, %v4690
        %v4692 = vsel %vm742, %v3198, 0.0
        %v4693 = vadd.f32 %v4691, %v4692
        %v4694 = vsel %vm748, %v3199, 0.0
        %v4695 = vadd.f32 %v4693, %v4694
        %v4696 = vrot.slane %v4695, 4
        %v4697 = vadd.f32 %v4695, %v4696
        %v4698 = vrot.slane %v4697, 2
        %v4699 = vadd.f32 %v4697, %v4698
        %v4700 = vrot.slane %v4699, 1
        %v4701 = vadd.f32 %v4699, %v4700
        %v4702 = vsel %vm742, %v3200, 0.0
        %v4703 = vsel %vm742, %v3201, 0.0
        %v4704 = vadd.f32 %v4702, %v4703
        %v4705 = vsel %vm742, %v3202, 0.0
        %v4706 = vadd.f32 %v4704, %v4705
        %v4707 = vsel %vm748, %v3203, 0.0
        %v4708 = vadd.f32 %v4706, %v4707
        %v4709 = vrot.slane %v4708, 4
        %v4710 = vadd.f32 %v4708, %v4709
        %v4711 = vrot.slane %v4710, 2
        %v4712 = vadd.f32 %v4710, %v4711
        %v4713 = vrot.slane %v4712, 1
        %v4714 = vadd.f32 %v4712, %v4713
        %v4715 = vsel %vm742, %v3204, 0.0
        %v4716 = vsel %vm742, %v3205, 0.0
        %v4717 = vadd.f32 %v4715, %v4716
        %v4718 = vsel %vm742, %v3206, 0.0
        %v4719 = vadd.f32 %v4717, %v4718
        %v4720 = vsel %vm748, %v3207, 0.0
        %v4721 = vadd.f32 %v4719, %v4720
        %v4722 = vrot.slane %v4721, 4
        %v4723 = vadd.f32 %v4721, %v4722
        %v4724 = vrot.slane %v4723, 2
        %v4725 = vadd.f32 %v4723, %v4724
        %v4726 = vrot.slane %v4725, 1
        %v4727 = vadd.f32 %v4725, %v4726
        %v4728 = vsel %vm742, %v3208, 0.0
        %v4729 = vsel %vm742, %v3209, 0.0
        %v4730 = vadd.f32 %v4728, %v4729
        %v4731 = vsel %vm742, %v3210, 0.0
        %v4732 = vadd.f32 %v4730, %v4731
        %v4733 = vsel %vm748, %v3211, 0.0
        %v4734 = vadd.f32 %v4732, %v4733
        %v4735 = vrot.slane %v4734, 4
        %v4736 = vadd.f32 %v4734, %v4735
        %v4737 = vrot.slane %v4736, 2
        %v4738 = vadd.f32 %v4736, %v4737
        %v4739 = vrot.slane %v4738, 1
        %v4740 = vadd.f32 %v4738, %v4739
        %v4741 = vsel %vm742, %v3212, 0.0
        %v4742 = vsel %vm742, %v3213, 0.0
        %v4743 = vadd.f32 %v4741, %v4742
        %v4744 = vsel %vm742, %v3214, 0.0
        %v4745 = vadd.f32 %v4743, %v4744
        %v4746 = vsel %vm748, %v3215, 0.0
        %v4747 = vadd.f32 %v4745, %v4746
        %v4748 = vrot.slane %v4747, 4
        %v4749 = vadd.f32 %v4747, %v4748
        %v4750 = vrot.slane %v4749, 2
        %v4751 = vadd.f32 %v4749, %v4750
        %v4752 = vrot.slane %v4751, 1
        %v4753 = vadd.f32 %v4751, %v4752
        %v4754 = vsel %vm742, %v3216, 0.0
        %v4755 = vsel %vm742, %v3217, 0.0
        %v4756 = vadd.f32 %v4754, %v4755
        %v4757 = vsel %vm742, %v3218, 0.0
        %v4758 = vadd.f32 %v4756, %v4757
        %v4759 = vsel %vm748, %v3219, 0.0
        %v4760 = vadd.f32 %v4758, %v4759
        %v4761 = vrot.slane %v4760, 4
        %v4762 = vadd.f32 %v4760, %v4761
        %v4763 = vrot.slane %v4762, 2
        %v4764 = vadd.f32 %v4762, %v4763
        %v4765 = vrot.slane %v4764, 1
        %v4766 = vadd.f32 %v4764, %v4765
        %v4767 = vsel %vm742, %v3220, 0.0
        %v4768 = vsel %vm742, %v3221, 0.0
        %v4769 = vadd.f32 %v4767, %v4768
        %v4770 = vsel %vm742, %v3222, 0.0
        %v4771 = vadd.f32 %v4769, %v4770
        %v4772 = vsel %vm748, %v3223, 0.0
        %v4773 = vadd.f32 %v4771, %v4772
        %v4774 = vrot.slane %v4773, 4
        %v4775 = vadd.f32 %v4773, %v4774
        %v4776 = vrot.slane %v4775, 2
        %v4777 = vadd.f32 %v4775, %v4776
        %v4778 = vrot.slane %v4777, 1
        %v4779 = vadd.f32 %v4777, %v4778
        %v4780 = vsel %vm742, %v3224, 0.0
        %v4781 = vsel %vm742, %v3225, 0.0
        %v4782 = vadd.f32 %v4780, %v4781
        %v4783 = vsel %vm742, %v3226, 0.0
        %v4784 = vadd.f32 %v4782, %v4783
        %v4785 = vsel %vm748, %v3227, 0.0
        %v4786 = vadd.f32 %v4784, %v4785
        %v4787 = vrot.slane %v4786, 4
        %v4788 = vadd.f32 %v4786, %v4787
        %v4789 = vrot.slane %v4788, 2
        %v4790 = vadd.f32 %v4788, %v4789
        %v4791 = vrot.slane %v4790, 1
        %v4792 = vadd.f32 %v4790, %v4791
        %v4793 = vsel %vm742, %v3228, 0.0
        %v4794 = vsel %vm742, %v3229, 0.0
        %v4795 = vadd.f32 %v4793, %v4794
        %v4796 = vsel %vm742, %v3230, 0.0
        %v4797 = vadd.f32 %v4795, %v4796
        %v4798 = vsel %vm748, %v3231, 0.0
        %v4799 = vadd.f32 %v4797, %v4798
        %v4800 = vrot.slane %v4799, 4
        %v4801 = vadd.f32 %v4799, %v4800
        %v4802 = vrot.slane %v4801, 2
        %v4803 = vadd.f32 %v4801, %v4802
        %v4804 = vrot.slane %v4803, 1
        %v4805 = vadd.f32 %v4803, %v4804
        %v4806 = vsel %vm742, %v3232, 0.0
        %v4807 = vsel %vm742, %v3233, 0.0
        %v4808 = vadd.f32 %v4806, %v4807
        %v4809 = vsel %vm742, %v3234, 0.0
        %v4810 = vadd.f32 %v4808, %v4809
        %v4811 = vsel %vm748, %v3235, 0.0
        %v4812 = vadd.f32 %v4810, %v4811
        %v4813 = vrot.slane %v4812, 4
        %v4814 = vadd.f32 %v4812, %v4813
        %v4815 = vrot.slane %v4814, 2
        %v4816 = vadd.f32 %v4814, %v4815
        %v4817 = vrot.slane %v4816, 1
        %v4818 = vadd.f32 %v4816, %v4817
        %v4819 = vsel %vm742, %v3236, 0.0
        %v4820 = vsel %vm742, %v3237, 0.0
        %v4821 = vadd.f32 %v4819, %v4820
        %v4822 = vsel %vm742, %v3238, 0.0
        %v4823 = vadd.f32 %v4821, %v4822
        %v4824 = vsel %vm748, %v3239, 0.0
        %v4825 = vadd.f32 %v4823, %v4824
        %v4826 = vrot.slane %v4825, 4
        %v4827 = vadd.f32 %v4825, %v4826
        %v4828 = vrot.slane %v4827, 2
        %v4829 = vadd.f32 %v4827, %v4828
        %v4830 = vrot.slane %v4829, 1
        %v4831 = vadd.f32 %v4829, %v4830
        %v4832 = vsel %vm742, %v3240, 0.0
        %v4833 = vsel %vm742, %v3241, 0.0
        %v4834 = vadd.f32 %v4832, %v4833
        %v4835 = vsel %vm742, %v3242, 0.0
        %v4836 = vadd.f32 %v4834, %v4835
        %v4837 = vsel %vm748, %v3243, 0.0
        %v4838 = vadd.f32 %v4836, %v4837
        %v4839 = vrot.slane %v4838, 4
        %v4840 = vadd.f32 %v4838, %v4839
        %v4841 = vrot.slane %v4840, 2
        %v4842 = vadd.f32 %v4840, %v4841
        %v4843 = vrot.slane %v4842, 1
        %v4844 = vadd.f32 %v4842, %v4843
        %v4845 = vsel %vm742, %v3244, 0.0
        %v4846 = vsel %vm742, %v3245, 0.0
        %v4847 = vadd.f32 %v4845, %v4846
        %v4848 = vsel %vm742, %v3246, 0.0
        %v4849 = vadd.f32 %v4847, %v4848
        %v4850 = vsel %vm748, %v3247, 0.0
        %v4851 = vadd.f32 %v4849, %v4850
        %v4852 = vrot.slane %v4851, 4
        %v4853 = vadd.f32 %v4851, %v4852
        %v4854 = vrot.slane %v4853, 2
        %v4855 = vadd.f32 %v4853, %v4854
        %v4856 = vrot.slane %v4855, 1
        %v4857 = vadd.f32 %v4855, %v4856
        %v4858 = vsel %vm742, %v3248, 0.0
        %v4859 = vsel %vm742, %v3249, 0.0
        %v4860 = vadd.f32 %v4858, %v4859
        %v4861 = vsel %vm742, %v3250, 0.0
        %v4862 = vadd.f32 %v4860, %v4861
        %v4863 = vsel %vm748, %v3251, 0.0
        %v4864 = vadd.f32 %v4862, %v4863
        %v4865 = vrot.slane %v4864, 4
        %v4866 = vadd.f32 %v4864, %v4865
        %v4867 = vrot.slane %v4866, 2
        %v4868 = vadd.f32 %v4866, %v4867
        %v4869 = vrot.slane %v4868, 1
        %v4870 = vadd.f32 %v4868, %v4869
        %v4871 = vsel %vm742, %v3252, 0.0
        %v4872 = vsel %vm742, %v3253, 0.0
        %v4873 = vadd.f32 %v4871, %v4872
        %v4874 = vsel %vm742, %v3254, 0.0
        %v4875 = vadd.f32 %v4873, %v4874
        %v4876 = vsel %vm748, %v3255, 0.0
        %v4877 = vadd.f32 %v4875, %v4876
        %v4878 = vrot.slane %v4877, 4
        %v4879 = vadd.f32 %v4877, %v4878
        %v4880 = vrot.slane %v4879, 2
        %v4881 = vadd.f32 %v4879, %v4880
        %v4882 = vrot.slane %v4881, 1
        %v4883 = vadd.f32 %v4881, %v4882
        %v4884 = vsel %vm742, %v3256, 0.0
        %v4885 = vsel %vm742, %v3257, 0.0
        %v4886 = vadd.f32 %v4884, %v4885
        %v4887 = vsel %vm742, %v3258, 0.0
        %v4888 = vadd.f32 %v4886, %v4887
        %v4889 = vsel %vm748, %v3259, 0.0
        %v4890 = vadd.f32 %v4888, %v4889
        %v4891 = vrot.slane %v4890, 4
        %v4892 = vadd.f32 %v4890, %v4891
        %v4893 = vrot.slane %v4892, 2
        %v4894 = vadd.f32 %v4892, %v4893
        %v4895 = vrot.slane %v4894, 1
        %v4896 = vadd.f32 %v4894, %v4895
        %v4897 = vsel %vm742, %v3260, 0.0
        %v4898 = vsel %vm742, %v3261, 0.0
        %v4899 = vadd.f32 %v4897, %v4898
        %v4900 = vsel %vm742, %v3262, 0.0
        %v4901 = vadd.f32 %v4899, %v4900
        %v4902 = vsel %vm748, %v3263, 0.0
        %v4903 = vadd.f32 %v4901, %v4902
        %v4904 = vrot.slane %v4903, 4
        %v4905 = vadd.f32 %v4903, %v4904
        %v4906 = vrot.slane %v4905, 2
        %v4907 = vadd.f32 %v4905, %v4906
        %v4908 = vrot.slane %v4907, 1
        %v4909 = vadd.f32 %v4907, %v4908
        %v4910 = vsel %vm742, %v3264, 0.0
        %v4911 = vsel %vm742, %v3265, 0.0
        %v4912 = vadd.f32 %v4910, %v4911
        %v4913 = vsel %vm742, %v3266, 0.0
        %v4914 = vadd.f32 %v4912, %v4913
        %v4915 = vsel %vm748, %v3267, 0.0
        %v4916 = vadd.f32 %v4914, %v4915
        %v4917 = vrot.slane %v4916, 4
        %v4918 = vadd.f32 %v4916, %v4917
        %v4919 = vrot.slane %v4918, 2
        %v4920 = vadd.f32 %v4918, %v4919
        %v4921 = vrot.slane %v4920, 1
        %v4922 = vadd.f32 %v4920, %v4921
        %v4923 = vsel %vm742, %v3268, 0.0
        %v4924 = vsel %vm742, %v3269, 0.0
        %v4925 = vadd.f32 %v4923, %v4924
        %v4926 = vsel %vm742, %v3270, 0.0
        %v4927 = vadd.f32 %v4925, %v4926
        %v4928 = vsel %vm748, %v3271, 0.0
        %v4929 = vadd.f32 %v4927, %v4928
        %v4930 = vrot.slane %v4929, 4
        %v4931 = vadd.f32 %v4929, %v4930
        %v4932 = vrot.slane %v4931, 2
        %v4933 = vadd.f32 %v4931, %v4932
        %v4934 = vrot.slane %v4933, 1
        %v4935 = vadd.f32 %v4933, %v4934
        %v5064 = vsel %vm2543, %v3297, %v3284
        %v5065 = vsel %vm2545, %v3310, %v5064
        %v5066 = vsel %vm2547, %v3323, %v5065
        %v5067 = vsel %vm2549, %v3336, %v5066
        %v5068 = vsel %vm2551, %v3349, %v5067
        %v5069 = vsel %vm2553, %v3362, %v5068
        %v5070 = vsel %vm2555, %v3375, %v5069
        %v5071 = vsel %vm2543, %v3401, %v3388
        %v5072 = vsel %vm2545, %v3414, %v5071
        %v5073 = vsel %vm2547, %v3427, %v5072
        %v5074 = vsel %vm2549, %v3440, %v5073
        %v5075 = vsel %vm2551, %v3453, %v5074
        %v5076 = vsel %vm2553, %v3466, %v5075
        %v5077 = vsel %vm2555, %v3479, %v5076
        %v5078 = vsel %vm2543, %v3505, %v3492
        %v5079 = vsel %vm2545, %v3518, %v5078
        %v5080 = vsel %vm2547, %v3531, %v5079
        %v5081 = vsel %vm2549, %v3544, %v5080
        %v5082 = vsel %vm2551, %v3557, %v5081
        %v5083 = vsel %vm2553, %v3570, %v5082
        %v5084 = vsel %vm2555, %v3583, %v5083
        %v5085 = vsel %vm2543, %v3609, %v3596
        %v5086 = vsel %vm2545, %v3622, %v5085
        %v5087 = vsel %vm2547, %v3635, %v5086
        %v5088 = vsel %vm2549, %v3648, %v5087
        %v5089 = vsel %vm2551, %v3661, %v5088
        %v5090 = vsel %vm2553, %v3674, %v5089
        %v5091 = vsel %vm2555, %v3687, %v5090
        %v5092 = vsel %vm2543, %v3713, %v3700
        %v5093 = vsel %vm2545, %v3726, %v5092
        %v5094 = vsel %vm2547, %v3739, %v5093
        %v5095 = vsel %vm2549, %v3752, %v5094
        %v5096 = vsel %vm2551, %v3765, %v5095
        %v5097 = vsel %vm2553, %v3778, %v5096
        %v5098 = vsel %vm2555, %v3791, %v5097
        %v5099 = vsel %vm2543, %v3817, %v3804
        %v5100 = vsel %vm2545, %v3830, %v5099
        %v5101 = vsel %vm2547, %v3843, %v5100
        %v5102 = vsel %vm2549, %v3856, %v5101
        %v5103 = vsel %vm2551, %v3869, %v5102
        %v5104 = vsel %vm2553, %v3882, %v5103
        %v5105 = vsel %vm2555, %v3895, %v5104
        %v5106 = vsel %vm2543, %v3921, %v3908
        %v5107 = vsel %vm2545, %v3934, %v5106
        %v5108 = vsel %vm2547, %v3947, %v5107
        %v5109 = vsel %vm2549, %v3960, %v5108
        %v5110 = vsel %vm2551, %v3973, %v5109
        %v5111 = vsel %vm2553, %v3986, %v5110
        %v5112 = vsel %vm2555, %v3999, %v5111
        %v5113 = vsel %vm2543, %v4025, %v4012
        %v5114 = vsel %vm2545, %v4038, %v5113
        %v5115 = vsel %vm2547, %v4051, %v5114
        %v5116 = vsel %vm2549, %v4064, %v5115
        %v5117 = vsel %vm2551, %v4077, %v5116
        %v5118 = vsel %vm2553, %v4090, %v5117
        %v5119 = vsel %vm2555, %v4103, %v5118
        %v5120 = vsel %vm2543, %v4129, %v4116
        %v5121 = vsel %vm2545, %v4142, %v5120
        %v5122 = vsel %vm2547, %v4155, %v5121
        %v5123 = vsel %vm2549, %v4168, %v5122
        %v5124 = vsel %vm2551, %v4181, %v5123
        %v5125 = vsel %vm2553, %v4194, %v5124
        %v5126 = vsel %vm2555, %v4207, %v5125
        %v5127 = vsel %vm2543, %v4233, %v4220
        %v5128 = vsel %vm2545, %v4246, %v5127
        %v5129 = vsel %vm2547, %v4259, %v5128
        %v5130 = vsel %vm2549, %v4272, %v5129
        %v5131 = vsel %vm2551, %v4285, %v5130
        %v5132 = vsel %vm2553, %v4298, %v5131
        %v5133 = vsel %vm2555, %v4311, %v5132
        %v5134 = vsel %vm2543, %v4337, %v4324
        %v5135 = vsel %vm2545, %v4350, %v5134
        %v5136 = vsel %vm2547, %v4363, %v5135
        %v5137 = vsel %vm2549, %v4376, %v5136
        %v5138 = vsel %vm2551, %v4389, %v5137
        %v5139 = vsel %vm2553, %v4402, %v5138
        %v5140 = vsel %vm2555, %v4415, %v5139
        %v5141 = vsel %vm2543, %v4441, %v4428
        %v5142 = vsel %vm2545, %v4454, %v5141
        %v5143 = vsel %vm2547, %v4467, %v5142
        %v5144 = vsel %vm2549, %v4480, %v5143
        %v5145 = vsel %vm2551, %v4493, %v5144
        %v5146 = vsel %vm2553, %v4506, %v5145
        %v5147 = vsel %vm2555, %v4519, %v5146
        %v5148 = vsel %vm2543, %v4545, %v4532
        %v5149 = vsel %vm2545, %v4558, %v5148
        %v5150 = vsel %vm2547, %v4571, %v5149
        %v5151 = vsel %vm2549, %v4584, %v5150
        %v5152 = vsel %vm2551, %v4597, %v5151
        %v5153 = vsel %vm2553, %v4610, %v5152
        %v5154 = vsel %vm2555, %v4623, %v5153
        %v5155 = vsel %vm2543, %v4649, %v4636
        %v5156 = vsel %vm2545, %v4662, %v5155
        %v5157 = vsel %vm2547, %v4675, %v5156
        %v5158 = vsel %vm2549, %v4688, %v5157
        %v5159 = vsel %vm2551, %v4701, %v5158
        %v5160 = vsel %vm2553, %v4714, %v5159
        %v5161 = vsel %vm2555, %v4727, %v5160
        %v5162 = vsel %vm2543, %v4753, %v4740
        %v5163 = vsel %vm2545, %v4766, %v5162
        %v5164 = vsel %vm2547, %v4779, %v5163
        %v5165 = vsel %vm2549, %v4792, %v5164
        %v5166 = vsel %vm2551, %v4805, %v5165
        %v5167 = vsel %vm2553, %v4818, %v5166
        %v5168 = vsel %vm2555, %v4831, %v5167
        %v5169 = vsel %vm2543, %v4857, %v4844
        %v5170 = vsel %vm2545, %v4870, %v5169
        %v5171 = vsel %vm2547, %v4883, %v5170
        %v5172 = vsel %vm2549, %v4896, %v5171
        %v5173 = vsel %vm2551, %v4909, %v5172
        %v5174 = vsel %vm2553, %v4922, %v5173
        %v5175 = vsel %vm2555, %v4935, %v5174
        %v5176 = vsel %vm742, %v5070, 0
        %v5178 = vsel %vm742, %v5077, 0
        %v5180 = vsel %vm742, %v5084, 0
        %v5182 = vsel %vm742, %v5091, 0
        %v5184 = vsel %vm742, %v5098, 0
        %v5186 = vsel %vm742, %v5105, 0
        %v5188 = vsel %vm742, %v5112, 0
        %v5190 = vsel %vm742, %v5119, 0
        %v5192 = vsel %vm742, %v5126, 0
        %v5194 = vsel %vm742, %v5133, 0
        %v5196 = vsel %vm742, %v5140, 0
        %v5198 = vsel %vm742, %v5147, 0
        %v5200 = vsel %vm742, %v5154, 0
        %v5202 = vsel %vm742, %v5161, 0
        %v5204 = vsel %vm742, %v5168, 0
        %v5206 = vsel %vm742, %v5175, 0
        %5208 = vmatpush.msra.mxu0 0.0
        %5209 = vmatpush.msra.mxu0 0.0
        %5210 = vmatpush.msra.mxu0 0.0
        %5211 = vmatpush.msra.mxu0 0.0
        %5212 = vmatpush.msra.mxu0 0.0
        %5213 = vmatpush.msra.mxu0 0.0
        %5214 = vmatpush.msra.mxu0 0.0
        %5215 = vmatpush.msra.mxu0 0.0
        %5216 = vmatpush.msra.mxu0 0.0
        %5217 = vmatpush.msra.mxu0 %v2414
        %5218 = vmatpush.msra.mxu0 %v2413
        %5219 = vmatpush.msra.mxu0 %v2412
        %5220 = vmatpush.msra.mxu0 %v2411
        %5221 = vmatpush.msra.mxu0 %v2410
        %5222 = vmatpush.msra.mxu0 %v2409
        %5223 = vmatpush.msra.mxu0 %v2408
        %5224 = vmatmul.f32.gmra.mxu0 %v5176
        %v5225 = vpop.f32.mrf.mxu0
        %v5226 = vadd.f32 0.0, %v5225
        %5227 = vmatmul.f32.gmra.mxu0 %v5178
        %v5228 = vpop.f32.mrf.mxu0
        %v5229 = vadd.f32 0.0, %v5228
        %5230 = vmatmul.f32.gmra.mxu0 %v5180
        %v5231 = vpop.f32.mrf.mxu0
        %v5232 = vadd.f32 0.0, %v5231
        %5233 = vmatmul.f32.gmra.mxu0 %v5182
        %v5234 = vpop.f32.mrf.mxu0
        %v5235 = vadd.f32 0.0, %v5234
        %5236 = vmatmul.f32.gmra.mxu0 %v5184
        %v5237 = vpop.f32.mrf.mxu0
        %v5238 = vadd.f32 0.0, %v5237
        %5239 = vmatmul.f32.gmra.mxu0 %v5186
        %v5240 = vpop.f32.mrf.mxu0
        %v5241 = vadd.f32 0.0, %v5240
        %5242 = vmatmul.f32.gmra.mxu0 %v5188
        %v5243 = vpop.f32.mrf.mxu0
        %v5244 = vadd.f32 0.0, %v5243
        %5245 = vmatmul.f32.gmra.mxu0 %v5190
        %v5246 = vpop.f32.mrf.mxu0
        %v5247 = vadd.f32 0.0, %v5246
        %5248 = vmatmul.f32.gmra.mxu0 %v5192
        %v5249 = vpop.f32.mrf.mxu0
        %v5250 = vadd.f32 0.0, %v5249
        %5251 = vmatmul.f32.gmra.mxu0 %v5194
        %v5252 = vpop.f32.mrf.mxu0
        %v5253 = vadd.f32 0.0, %v5252
        %5254 = vmatmul.f32.gmra.mxu0 %v5196
        %v5255 = vpop.f32.mrf.mxu0
        %v5256 = vadd.f32 0.0, %v5255
        %5257 = vmatmul.f32.gmra.mxu0 %v5198
        %v5258 = vpop.f32.mrf.mxu0
        %v5259 = vadd.f32 0.0, %v5258
        %5260 = vmatmul.f32.gmra.mxu0 %v5200
        %v5261 = vpop.f32.mrf.mxu0
        %v5262 = vadd.f32 0.0, %v5261
        %5263 = vmatmul.f32.gmra.mxu0 %v5202
        %v5264 = vpop.f32.mrf.mxu0
        %v5265 = vadd.f32 0.0, %v5264
        %5266 = vmatmul.f32.gmra.mxu0 %v5204
        %v5267 = vpop.f32.mrf.mxu0
        %v5268 = vadd.f32 0.0, %v5267
        %5269 = vmatmul.f32.gmra.mxu0 %v5206
        %v5270 = vpop.f32.mrf.mxu0
        %v5271 = vadd.f32 0.0, %v5270
        %5272 = vdwg.mxu0
        %5289 = vrot.lane.b32.xlu0 %v5226, 2
        %v5290 = vpop.permute.xlu0 %5289
        %5291 = vrot.lane.b32.xlu0 %v5229, 2
        %v5292 = vpop.permute.xlu0 %5291
        %5293 = vrot.lane.b32.xlu0 %v5232, 2
        %v5294 = vpop.permute.xlu0 %5293
        %5295 = vrot.lane.b32.xlu0 %v5235, 2
        %v5296 = vpop.permute.xlu0 %5295
        %5297 = vrot.lane.b32.xlu0 %v5238, 2
        %v5298 = vpop.permute.xlu0 %5297
        %5299 = vrot.lane.b32.xlu0 %v5241, 2
        %v5300 = vpop.permute.xlu0 %5299
        %5301 = vrot.lane.b32.xlu0 %v5244, 2
        %v5302 = vpop.permute.xlu0 %5301
        %5303 = vrot.lane.b32.xlu0 %v5247, 2
        %v5304 = vpop.permute.xlu0 %5303
        %5305 = vrot.lane.b32.xlu0 %v5250, 2
        %v5306 = vpop.permute.xlu0 %5305
        %5307 = vrot.lane.b32.xlu0 %v5253, 2
        %v5308 = vpop.permute.xlu0 %5307
        %5309 = vrot.lane.b32.xlu0 %v5256, 2
        %v5310 = vpop.permute.xlu0 %5309
        %5311 = vrot.lane.b32.xlu0 %v5259, 2
        %v5312 = vpop.permute.xlu0 %5311
        %5313 = vrot.lane.b32.xlu0 %v5262, 2
        %v5314 = vpop.permute.xlu0 %5313
        %5315 = vrot.lane.b32.xlu0 %v5265, 2
        %v5316 = vpop.permute.xlu0 %5315
        %5317 = vrot.lane.b32.xlu0 %v5268, 2
        %v5318 = vpop.permute.xlu0 %5317
        %5319 = vrot.lane.b32.xlu0 %v5271, 2
        %v5320 = vpop.permute.xlu0 %5319
        %vm5337 = vcmask 15360
        %v5338 = vsel %vm5337, %v2712, %v5290
        %v5339 = vsel %vm5337, %v2715, %v5292
        %v5340 = vsel %vm5337, %v2718, %v5294
        %v5341 = vsel %vm5337, %v2721, %v5296
        %v5342 = vsel %vm5337, %v2724, %v5298
        %v5343 = vsel %vm5337, %v2727, %v5300
        %v5344 = vsel %vm5337, %v2730, %v5302
        %v5345 = vsel %vm5337, %v2733, %v5304
        %v5346 = vsel %vm5337, %v2736, %v5306
        %v5347 = vsel %vm5337, %v2739, %v5308
        %v5348 = vsel %vm5337, %v2742, %v5310
        %v5349 = vsel %vm5337, %v2745, %v5312
        %v5350 = vsel %vm5337, %v2748, %v5314
        %v5351 = vsel %vm5337, %v2751, %v5316
        %v5352 = vsel %vm5337, %v2754, %v5318
        %v5353 = vsel %vm5337, %v2757, %v5320
        %5354 = vxpose.xlu0.b32.start [1/16] %v5338, 128
        %5355 = vxpose.xlu0.b32.cont [2/16] %v5339, 128
        %5356 = vxpose.xlu0.b32.cont [3/16] %v5340, 128
        %5357 = vxpose.xlu0.b32.cont [4/16] %v5341, 128
        %5358 = vxpose.xlu0.b32.cont [5/16] %v5342, 128
        %5359 = vxpose.xlu0.b32.cont [6/16] %v5343, 128
        %5360 = vxpose.xlu0.b32.cont [7/16] %v5344, 128
        %5361 = vxpose.xlu0.b32.cont [8/16] %v5345, 128
        %5362 = vxpose.xlu0.b32.cont [9/16] %v5346, 128
        %5363 = vxpose.xlu0.b32.cont [10/16] %v5347, 128
        %5364 = vxpose.xlu0.b32.cont [11/16] %v5348, 128
        %5365 = vxpose.xlu0.b32.cont [12/16] %v5349, 128
        %5366 = vxpose.xlu0.b32.cont [13/16] %v5350, 128
        %5367 = vxpose.xlu0.b32.cont [14/16] %v5351, 128
        %5368 = vxpose.xlu0.b32.cont [15/16] %v5352, 128
        %5369 = vxpose.xlu0.b32.end [16/16] %v5353, 128
        %v5370 = vpop.trf.xlu0
        %v5371 = vpop.trf.xlu0
        %v5372 = vpop.trf.xlu0
        %v5373 = vpop.trf.xlu0
        %v5374 = vpop.trf.xlu0
        %v5375 = vpop.trf.xlu0
        %v5376 = vpop.trf.xlu0
        %v5377 = vpop.trf.xlu0
        %v5378 = vpop.trf.xlu0
        %v5379 = vpop.trf.xlu0
        %v5380 = vpop.trf.xlu0
        %v5381 = vpop.trf.xlu0
        %v5382 = vpop.trf.xlu0
        %v5383 = vpop.trf.xlu0
        %v5384 = vpop.trf.xlu0
        %v5385 = vpop.trf.xlu0
        %v5386 = vld [vmem:[%s1] sm:$0xff]
        %v5387 = vld [vmem:[%s1 + $0x8] sm:$0xff]
        %v5388 = vld [vmem:[%s1 + $0x10] sm:$0xff]
        %v5389 = vld [vmem:[%s1 + $0x18] sm:$0xff]
        %v5390 = vld [vmem:[%s1 + $0x20] sm:$0xff]
        %v5391 = vld [vmem:[%s1 + $0x28] sm:$0xff]
        %v5392 = vld [vmem:[%s1 + $0x30] sm:$0xff]
        %v5393 = vld [vmem:[%s1 + $0x38] sm:$0xff]
        %v5394 = vld [vmem:[%s1 + $0x40] sm:$0xff]
        %v5395 = vld [vmem:[%s1 + $0x48] sm:$0xff]
        %v5396 = vld [vmem:[%s1 + $0x50] sm:$0xff]
        %v5397 = vld [vmem:[%s1 + $0x58] sm:$0xff]
        %v5398 = vld [vmem:[%s1 + $0x60] sm:$0xff]
        %v5399 = vld [vmem:[%s1 + $0x68] sm:$0xff]
        %v5400 = vld [vmem:[%s1 + $0x70] sm:$0xff]
        %v5401 = vld [vmem:[%s1 + $0x78] sm:$0xff]
        %v5402 = vld [vmem:[%s3] sm:$0x1]
        %v5404 = vperm.slane %v5402, 0
        %5406 = vmatpush.msra.mxu0 %v5401
        %5407 = vmatpush.msra.mxu0 %v5400
        %5408 = vmatpush.msra.mxu0 %v5399
        %5409 = vmatpush.msra.mxu0 %v5398
        %5410 = vmatpush.msra.mxu0 %v5397
        %5411 = vmatpush.msra.mxu0 %v5396
        %5412 = vmatpush.msra.mxu0 %v5395
        %5413 = vmatpush.msra.mxu0 %v5394
        %5414 = vmatpush.msra.mxu0 %v5393
        %5415 = vmatpush.msra.mxu0 %v5392
        %5416 = vmatpush.msra.mxu0 %v5391
        %5417 = vmatpush.msra.mxu0 %v5390
        %5418 = vmatpush.msra.mxu0 %v5389
        %5419 = vmatpush.msra.mxu0 %v5388
        %5420 = vmatpush.msra.mxu0 %v5387
        %5421 = vmatpush.msra.mxu0 %v5386
        %5422 = vmatmul.f32.gmra.mxu0 %v5370
        %v5423 = vpop.f32.mrf.mxu0
        %v5424 = vadd.f32 %v5404, %v5423
        %5425 = vdwg.mxu0
        %v5427 = vrot.slane %v5424, 2
        %5429 = vst [vmem:[%s217] sm:$0x3] %v5424
        %5430 = vst [vmem:[%s217 + $0x2] sm:$0x3] %v5427
        %s5431 = sand.u32 %s131, 1
        %s5432 = scalar_lea.sflag [#allocation3], %s5431
        %s5433 = sand.u32 %s131, 1
        %s5434 = smul.addr %s5433, 4
        %s5435 = scalar_lea.vmem [#allocation2], %s5434
        // Predicated region
        $region37: #{feature_pyramid_low.1} parent=35 // pred_check
          %p5436 = pneg %p141
        $region38: #{feature_pyramid_low.1} parent=35 // pred_check_branch
          %5438 = sbr.rel (%p5436) target = $region40
        $region39: #{feature_pyramid_low.1} parent=35 // pred_region
          %s5439 = smul.u32 2, %s23
          %5441 = vsyncadd %s5432, 0
          %s5442 = smul.addr %s22, 2
          %s5443 = sadd.s32 %s5439, %s5442
          %s5444 = smul.addr %s5443, 2
          %s5445 = scalar_lea.hbm %s4, %s5444
          %s5446 = sshll.u32 %s5435, 4
          %s5447 = int_to_ptr.vmem [resolvable:$true] %s5446
          %s5448 = sshll.u32 %s5445, 4
          %s5449 = int_to_ptr.hbm [resolvable:$true] %s5448
          %5454 = dma.vmem_to_hbm [thread:$0]  %s5447, 64, %s5449, %s5432, 32, 32, 2
        $region40: #{feature_pyramid_low.1} parent=35 // pred_fallthru
          _
      $region36: #{feature_pyramid_low.1} parent=5 // pred_fallthru
        _
      %p5455 = scmp.le.s32.totalorder 2, %s13
      // Predicated region
      $region41: #{feature_pyramid_low.1} parent=5 // pred_check
        %p5456 = pneg %p5455
      $region42: #{feature_pyramid_low.1} parent=5 // pred_check_branch
        %5458 = sbr.rel (%p5456) target = $region44
      $region43: #{feature_pyramid_low.1} parent=5 // pred_region
        %s5459 = ssub.s32 %s13, 2
        // Predicated region
        $region45: #{feature_pyramid_low.1} parent=43 // pred_check
          %p5460 = pneg %p147
        $region46: #{feature_pyramid_low.1} parent=43 // pred_check_branch
          %5462 = sbr.rel (%p5460) target = $region48
        $region47: #{feature_pyramid_low.1} parent=43 // pred_region
          %s5463 = sand.u32 %s132, 1
          %s5464 = scalar_lea.sflag [#allocation3], %s5463
          %s5465 = sand.u32 %s132, 1
          %s5466 = smul.addr %s5465, 4
          %s5467 = scalar_lea.vmem [#allocation2], %s5466
          %5469 = dma.done %s5464, 64
        $region48: #{feature_pyramid_low.1} parent=43 // pred_fallthru
          _
      $region44: #{feature_pyramid_low.1} parent=5 // pred_fallthru
        _
    $region6: #{feature_pyramid_low.1} parent=1 // loop_footer
      %s17 = sadd.s32 1, %s13
    $region7: #{feature_pyramid_low.1} parent=1 // loop_footer_branch
      %12 = sbr.rel target = $region3
    $region8: #{feature_pyramid_low.1} parent=1 // loop_exit
      _
    %5470 = vsyncpa [#allocation3], 1
    %s5471 = scalar_lea.sflag [#allocation3], 1
    %5472 = vsyncpa %s5471, 1

</llo_original>
